<compile_context>
chip_gen: v5e
topology: v5e:2x2
jax: 0.10.0
libtpu: 0.0.40
codegen_flags: <defaults>
</compile_context>

<pallas_src>
import functools

import jax
import jax.numpy as jnp
from jax.experimental import pallas as pl
from jax.experimental.pallas import tpu as pltpu


# ---------------------------------------------------------------------------
# Parameter setup glue (BN folding + fake quantization), mirrors ConvBN_Quant
# ---------------------------------------------------------------------------
def fake_quant(x, num_bits=8):
    scale = (x.max() - x.min()) / (2 ** num_bits - 1)
    scale = jnp.where(scale == 0, jnp.float32(1.0), scale)  # guard div-by-zero
    return jnp.round(x / scale) * scale


def fold_convbn_quant(w_oihw, b, bn_weight, bn_bias, running_mean, running_var,
                      eps=1e-5, num_bits=8):
    """Fold BN into conv weights/bias and apply fake quantization.

    w_oihw: [Cout, Cin, KH, KW] (PyTorch layout)
    Returns: (w_hwio [KH, KW, Cin, Cout], b [Cout]) ready for the kernel.
    """
    var_sqrt = jnp.sqrt(running_var + eps)
    w = w_oihw / var_sqrt[:, None, None, None] * bn_weight[:, None, None, None]
    b = (b - running_mean) / var_sqrt * bn_weight + bn_bias
    b = fake_quant(b, num_bits)
    w = fake_quant(w, num_bits)
    # OIHW -> HWIO
    w_hwio = jnp.transpose(w, (2, 3, 1, 0))
    return w_hwio.astype(jnp.float32), b.astype(jnp.float32)


# ---------------------------------------------------------------------------
# Fused Pallas kernel: conv3x3(valid)+bias+ReLU -> conv3x3(valid)+bias+ReLU
# One grid step processes NB lane-packed images; weights/biases are SMEM
# scalars (folded + fake-quantized).
# ---------------------------------------------------------------------------
def _double_conv_kernel(x_ref, w1_ref, b1_ref, w2_ref, b2_ref, o_ref,
                        *, C, CIN2, K, H, WP):
    OH1 = H - (K - 1)
    OW1 = WP - (K - 1)        # stage-1 packed width (e.g. 130)
    OH2 = OH1 - (K - 1)
    OW2 = OW1 - (K - 1)       # stage-2 packed width == NB*W (e.g. 128, lane-dense)

    x = x_ref[0]              # (H, WP); Cin of first conv is 1 (first=True)
    # TODO(synk): stage 1 hard-codes Cin=1; the non-first Double_Conv variants
    # would need a Cin loop here.

    # ---- stage 1: conv(1 -> C), bias, ReLU (full 128-lane taps) -----------
    acc1 = [jnp.zeros((OH1, OW1), jnp.float32) for _ in range(C)]
    for kh in range(K):
        for kw in range(K):
            patch = x[kh:kh + OH1, kw:kw + OW1]          # one slice per tap
            base = (kh * K + kw) * C                      # Cin == 1
            for co in range(C):
                acc1[co] = acc1[co] + w1_ref[base + co] * patch
    y = [jnp.maximum(acc1[co] + b1_ref[co], 0.0) for co in range(C)]

    # ---- stage 2: conv(C -> C), bias, ReLU ---------------------------------
    acc2 = [jnp.zeros((OH2, OW2), jnp.float32) for _ in range(C)]
    for ci in range(CIN2):
        yc = y[ci]
        for kh in range(K):
            for kw in range(K):
                patch = yc[kh:kh + OH2, kw:kw + OW2]
                base = ((kh * K + kw) * CIN2 + ci) * C
                for co in range(C):
                    acc2[co] = acc2[co] + w2_ref[base + co] * patch

    # Single lane-dense store: (C, OH2, NB*W) with a 128-multiple last dim.
    out = jnp.stack([jnp.maximum(acc2[co] + b2_ref[co], 0.0) for co in range(C)])
    o_ref[0] = out


def double_conv_forward(x_nchw, params1, params2):
    """x_nchw: [N, 1, H, W]; params*: (w_hwio, b) from fold_convbn_quant."""
    w1, b1 = params1                       # (K, K, 1, C), (C,)
    w2, b2 = params2                       # (K, K, C, C), (C,)
    N, cin, H, W = x_nchw.shape
    assert cin == 1 and w1.shape[2] == 1, "first=True variant expects 1 input channel"
    K = w1.shape[0]
    C = w1.shape[-1]
    CIN2 = w2.shape[2]
    OH = H - 2 * (K - 1)
    OW = W - 2 * (K - 1)

    # --- lane-pack NB images side-by-side along W (NB*W == 128 for W=16) ----
    NB = max(1, 128 // W)
    G = -(-N // NB)                        # ceil(N / NB) grid steps
    NP = G * NB
    pad_w = 2 * (K - 1)                    # right pad so every tap slice is full width
    WP = NB * W + pad_w

    xp = jnp.pad(x_nchw, ((0, NP - N), (0, 0), (0, 0), (0, 0)))
    xp = xp.reshape(G, NB, H, W).transpose(0, 2, 1, 3).reshape(G, H, NB * W)
    xp = jnp.pad(xp, ((0, 0), (0, 0), (0, pad_w)))                  # (G, H, WP)

    kernel = functools.partial(_double_conv_kernel,
                               C=C, CIN2=CIN2, K=K, H=H, WP=WP)

    out_packed = pl.pallas_call(
        kernel,
        out_shape=jax.ShapeDtypeStruct((G, C, OH, NB * W), jnp.float32),
        grid=(G,),
        in_specs=[
            pl.BlockSpec((1, H, WP), lambda g: (g, 0, 0)),           # packed x
            pl.BlockSpec(memory_space=pltpu.MemorySpace.SMEM),       # w1 flat
            pl.BlockSpec(memory_space=pltpu.MemorySpace.SMEM),       # b1
            pl.BlockSpec(memory_space=pltpu.MemorySpace.SMEM),       # w2 flat
            pl.BlockSpec(memory_space=pltpu.MemorySpace.SMEM),       # b2
        ],
        out_specs=pl.BlockSpec((1, C, OH, NB * W), lambda g: (g, 0, 0, 0)),
        compiler_params=pltpu.CompilerParams(
            dimension_semantics=("parallel",)),                     # v7x: 2 TCs share groups
    )(xp, w1.reshape(-1), b1, w2.reshape(-1), b2)

    # --- unpack: keep each image's OW valid columns from its W-wide slot ----
    out = out_packed.reshape(G, C, OH, NB, W)[..., :OW]
    out = out.transpose(0, 3, 1, 2, 4).reshape(NP, C, OH, OW)
    return out[:N]


# ---------------------------------------------------------------------------
# Pure-JAX reference (for a correctness check)
# ---------------------------------------------------------------------------
def _ref_conv_relu(x_nchw, w_hwio, b):
    y = jax.lax.conv_general_dilated(
        x_nchw, w_hwio, window_strides=(1, 1), padding="VALID",
        dimension_numbers=("NCHW", "HWIO", "NCHW"),
        precision=jax.lax.Precision.HIGHEST)
    return jnp.maximum(y + b[None, :, None, None], 0.0)


def _ref_double_conv(x_nchw, params1, params2):
    w1, b1 = params1
    w2, b2 = params2
    x = _ref_conv_relu(x_nchw, w1, b1)
    x = _ref_conv_relu(x, w2, b2)
    return x


# ---------------------------------------------------------------------------
# Deterministic parameter construction
# ---------------------------------------------------------------------------
def make_convbn_params(key, cin, cout, k=3, num_bits=8):
    ks = jax.random.split(key, 6)
    w = 0.1 * jax.random.normal(ks[0], (cout, cin, k, k), jnp.float32)   # conv.weight
    b = 0.1 * jax.random.normal(ks[1], (cout,), jnp.float32)             # conv.bias
    bn_w = jax.random.uniform(ks[2], (cout,), jnp.float32, 0.5, 1.5)     # bn.weight
    bn_b = 0.1 * jax.random.normal(ks[3], (cout,), jnp.float32)          # bn.bias
    mean = 0.1 * jax.random.normal(ks[4], (cout,), jnp.float32)          # running_mean
    var = jax.random.uniform(ks[5], (cout,), jnp.float32, 0.5, 1.5)      # running_var
    return fold_convbn_quant(w, b, bn_w, bn_b, mean, var, num_bits=num_bits)


if __name__ == "__main__":
    # Double_Conv(first=True, in_ch=4, sample='down'):
    #   ConvBN_Quant(1, 4, k=3, p=0) -> ReLU -> ConvBN_Quant(4, 4, k=3, p=0) -> ReLU
    in_ch = 4
    key = jax.random.PRNGKey(0)
    k_x, k_p1, k_p2 = jax.random.split(key, 3)

    # NCHW input, 1 input channel (first=True), small spatial size
    x = jax.random.normal(k_x, (2, 1, 16, 16), jnp.float32)

    params1 = make_convbn_params(k_p1, cin=1, cout=in_ch)       # 1 -> 4
    params2 = make_convbn_params(k_p2, cin=in_ch, cout=in_ch)   # 4 -> 4

    out = jax.block_until_ready(double_conv_forward(x, params1, params2))
    assert out.shape == (2, in_ch, 12, 12), out.shape

    ref = jax.block_until_ready(_ref_double_conv(x, params1, params2))
    assert jnp.allclose(out, ref, rtol=1e-4, atol=1e-4), "mismatch vs JAX reference"

    print("KERNEL_OK")
</pallas_src>

<mosaic_0001>
module attributes {stable_mosaic.version = 11 : i64} {
  func.func @_double_conv_kernel(%arg0: i32, %arg1: memref<1x16x132xf32, #tpu.memory_space<vmem>>, %arg2: memref<36xf32, #tpu.memory_space<smem>>, %arg3: memref<4xf32, #tpu.memory_space<smem>>, %arg4: memref<144xf32, #tpu.memory_space<smem>>, %arg5: memref<4xf32, #tpu.memory_space<smem>>, %arg6: memref<1x4x12x128xf32, #tpu.memory_space<vmem>>) attributes {dimension_semantics = [#tpu.dimension_semantics<parallel>], iteration_bounds = array<i64: 1>, scalar_prefetch = 0 : i64, scratch_operands = 0 : i64, tpu.core_type = #tpu.core_type<tc>, window_params = [{transform_indices = @transform_0, window_bounds = array<i64: 1, 16, 132>}, {transform_indices = @transform_1, window_bounds = array<i64: 36>}, {transform_indices = @transform_2, window_bounds = array<i64: 4>}, {transform_indices = @transform_3, window_bounds = array<i64: 144>}, {transform_indices = @transform_4, window_bounds = array<i64: 4>}, {transform_indices = @transform_5, window_bounds = array<i64: 1, 4, 12, 128>}]} {
    %c0 = arith.constant 0 : index
    %c0_0 = arith.constant 0 : index
    %c0_1 = arith.constant 0 : index
    %0 = vector.load %arg1[%c0, %c0_0, %c0_1] : memref<1x16x132xf32, #tpu.memory_space<vmem>>, vector<1x16x132xf32>
    %1 = vector.shape_cast %0 : vector<1x16x132xf32> to vector<16x132xf32>
    %cst = arith.constant 0.000000e+00 : f32
    %2 = vector.broadcast %cst : f32 to vector<14x130xf32>
    %cst_2 = arith.constant 0.000000e+00 : f32
    %3 = vector.broadcast %cst_2 : f32 to vector<14x130xf32>
    %cst_3 = arith.constant 0.000000e+00 : f32
    %4 = vector.broadcast %cst_3 : f32 to vector<14x130xf32>
    %cst_4 = arith.constant 0.000000e+00 : f32
    %5 = vector.broadcast %cst_4 : f32 to vector<14x130xf32>
    %6 = vector.extract_strided_slice %1 {offsets = [0, 0], sizes = [14, 130], strides = [1, 1]} : vector<16x132xf32> to vector<14x130xf32>
    %c0_5 = arith.constant 0 : index
    %7 = memref.load %arg2[%c0_5] : memref<36xf32, #tpu.memory_space<smem>>
    %8 = vector.broadcast %7 : f32 to vector<14x130xf32>
    %9 = arith.mulf %8, %6 : vector<14x130xf32>
    %10 = arith.addf %2, %9 : vector<14x130xf32>
    %c1 = arith.constant 1 : index
    %11 = memref.load %arg2[%c1] : memref<36xf32, #tpu.memory_space<smem>>
    %12 = vector.broadcast %11 : f32 to vector<14x130xf32>
    %13 = arith.mulf %12, %6 : vector<14x130xf32>
    %14 = arith.addf %3, %13 : vector<14x130xf32>
    %c2 = arith.constant 2 : index
    %15 = memref.load %arg2[%c2] : memref<36xf32, #tpu.memory_space<smem>>
    %16 = vector.broadcast %15 : f32 to vector<14x130xf32>
    %17 = arith.mulf %16, %6 : vector<14x130xf32>
    %18 = arith.addf %4, %17 : vector<14x130xf32>
    %c3 = arith.constant 3 : index
    %19 = memref.load %arg2[%c3] : memref<36xf32, #tpu.memory_space<smem>>
    %20 = vector.broadcast %19 : f32 to vector<14x130xf32>
    %21 = arith.mulf %20, %6 : vector<14x130xf32>
    %22 = arith.addf %5, %21 : vector<14x130xf32>
    %23 = vector.extract_strided_slice %1 {offsets = [0, 1], sizes = [14, 130], strides = [1, 1]} : vector<16x132xf32> to vector<14x130xf32>
    %c4 = arith.constant 4 : index
    %24 = memref.load %arg2[%c4] : memref<36xf32, #tpu.memory_space<smem>>
    %25 = vector.broadcast %24 : f32 to vector<14x130xf32>
    %26 = arith.mulf %25, %23 : vector<14x130xf32>
    %27 = arith.addf %10, %26 : vector<14x130xf32>
    %c5 = arith.constant 5 : index
    %28 = memref.load %arg2[%c5] : memref<36xf32, #tpu.memory_space<smem>>
    %29 = vector.broadcast %28 : f32 to vector<14x130xf32>
    %30 = arith.mulf %29, %23 : vector<14x130xf32>
    %31 = arith.addf %14, %30 : vector<14x130xf32>
    %c6 = arith.constant 6 : index
    %32 = memref.load %arg2[%c6] : memref<36xf32, #tpu.memory_space<smem>>
    %33 = vector.broadcast %32 : f32 to vector<14x130xf32>
    %34 = arith.mulf %33, %23 : vector<14x130xf32>
    %35 = arith.addf %18, %34 : vector<14x130xf32>
    %c7 = arith.constant 7 : index
    %36 = memref.load %arg2[%c7] : memref<36xf32, #tpu.memory_space<smem>>
    %37 = vector.broadcast %36 : f32 to vector<14x130xf32>
    %38 = arith.mulf %37, %23 : vector<14x130xf32>
    %39 = arith.addf %22, %38 : vector<14x130xf32>
    %40 = vector.extract_strided_slice %1 {offsets = [0, 2], sizes = [14, 130], strides = [1, 1]} : vector<16x132xf32> to vector<14x130xf32>
    %c8 = arith.constant 8 : index
    %41 = memref.load %arg2[%c8] : memref<36xf32, #tpu.memory_space<smem>>
    %42 = vector.broadcast %41 : f32 to vector<14x130xf32>
    %43 = arith.mulf %42, %40 : vector<14x130xf32>
    %44 = arith.addf %27, %43 : vector<14x130xf32>
    %c9 = arith.constant 9 : index
    %45 = memref.load %arg2[%c9] : memref<36xf32, #tpu.memory_space<smem>>
    %46 = vector.broadcast %45 : f32 to vector<14x130xf32>
    %47 = arith.mulf %46, %40 : vector<14x130xf32>
    %48 = arith.addf %31, %47 : vector<14x130xf32>
    %c10 = arith.constant 10 : index
    %49 = memref.load %arg2[%c10] : memref<36xf32, #tpu.memory_space<smem>>
    %50 = vector.broadcast %49 : f32 to vector<14x130xf32>
    %51 = arith.mulf %50, %40 : vector<14x130xf32>
    %52 = arith.addf %35, %51 : vector<14x130xf32>
    %c11 = arith.constant 11 : index
    %53 = memref.load %arg2[%c11] : memref<36xf32, #tpu.memory_space<smem>>
    %54 = vector.broadcast %53 : f32 to vector<14x130xf32>
    %55 = arith.mulf %54, %40 : vector<14x130xf32>
    %56 = arith.addf %39, %55 : vector<14x130xf32>
    %57 = vector.extract_strided_slice %1 {offsets = [1, 0], sizes = [14, 130], strides = [1, 1]} : vector<16x132xf32> to vector<14x130xf32>
    %c12 = arith.constant 12 : index
    %58 = memref.load %arg2[%c12] : memref<36xf32, #tpu.memory_space<smem>>
    %59 = vector.broadcast %58 : f32 to vector<14x130xf32>
    %60 = arith.mulf %59, %57 : vector<14x130xf32>
    %61 = arith.addf %44, %60 : vector<14x130xf32>
    %c13 = arith.constant 13 : index
    %62 = memref.load %arg2[%c13] : memref<36xf32, #tpu.memory_space<smem>>
    %63 = vector.broadcast %62 : f32 to vector<14x130xf32>
    %64 = arith.mulf %63, %57 : vector<14x130xf32>
    %65 = arith.addf %48, %64 : vector<14x130xf32>
    %c14 = arith.constant 14 : index
    %66 = memref.load %arg2[%c14] : memref<36xf32, #tpu.memory_space<smem>>
    %67 = vector.broadcast %66 : f32 to vector<14x130xf32>
    %68 = arith.mulf %67, %57 : vector<14x130xf32>
    %69 = arith.addf %52, %68 : vector<14x130xf32>
    %c15 = arith.constant 15 : index
    %70 = memref.load %arg2[%c15] : memref<36xf32, #tpu.memory_space<smem>>
    %71 = vector.broadcast %70 : f32 to vector<14x130xf32>
    %72 = arith.mulf %71, %57 : vector<14x130xf32>
    %73 = arith.addf %56, %72 : vector<14x130xf32>
    %74 = vector.extract_strided_slice %1 {offsets = [1, 1], sizes = [14, 130], strides = [1, 1]} : vector<16x132xf32> to vector<14x130xf32>
    %c16 = arith.constant 16 : index
    %75 = memref.load %arg2[%c16] : memref<36xf32, #tpu.memory_space<smem>>
    %76 = vector.broadcast %75 : f32 to vector<14x130xf32>
    %77 = arith.mulf %76, %74 : vector<14x130xf32>
    %78 = arith.addf %61, %77 : vector<14x130xf32>
    %c17 = arith.constant 17 : index
    %79 = memref.load %arg2[%c17] : memref<36xf32, #tpu.memory_space<smem>>
    %80 = vector.broadcast %79 : f32 to vector<14x130xf32>
    %81 = arith.mulf %80, %74 : vector<14x130xf32>
    %82 = arith.addf %65, %81 : vector<14x130xf32>
    %c18 = arith.constant 18 : index
    %83 = memref.load %arg2[%c18] : memref<36xf32, #tpu.memory_space<smem>>
    %84 = vector.broadcast %83 : f32 to vector<14x130xf32>
    %85 = arith.mulf %84, %74 : vector<14x130xf32>
    %86 = arith.addf %69, %85 : vector<14x130xf32>
    %c19 = arith.constant 19 : index
    %87 = memref.load %arg2[%c19] : memref<36xf32, #tpu.memory_space<smem>>
    %88 = vector.broadcast %87 : f32 to vector<14x130xf32>
    %89 = arith.mulf %88, %74 : vector<14x130xf32>
    %90 = arith.addf %73, %89 : vector<14x130xf32>
    %91 = vector.extract_strided_slice %1 {offsets = [1, 2], sizes = [14, 130], strides = [1, 1]} : vector<16x132xf32> to vector<14x130xf32>
    %c20 = arith.constant 20 : index
    %92 = memref.load %arg2[%c20] : memref<36xf32, #tpu.memory_space<smem>>
    %93 = vector.broadcast %92 : f32 to vector<14x130xf32>
    %94 = arith.mulf %93, %91 : vector<14x130xf32>
    %95 = arith.addf %78, %94 : vector<14x130xf32>
    %c21 = arith.constant 21 : index
    %96 = memref.load %arg2[%c21] : memref<36xf32, #tpu.memory_space<smem>>
    %97 = vector.broadcast %96 : f32 to vector<14x130xf32>
    %98 = arith.mulf %97, %91 : vector<14x130xf32>
    %99 = arith.addf %82, %98 : vector<14x130xf32>
    %c22 = arith.constant 22 : index
    %100 = memref.load %arg2[%c22] : memref<36xf32, #tpu.memory_space<smem>>
    %101 = vector.broadcast %100 : f32 to vector<14x130xf32>
    %102 = arith.mulf %101, %91 : vector<14x130xf32>
    %103 = arith.addf %86, %102 : vector<14x130xf32>
    %c23 = arith.constant 23 : index
    %104 = memref.load %arg2[%c23] : memref<36xf32, #tpu.memory_space<smem>>
    %105 = vector.broadcast %104 : f32 to vector<14x130xf32>
    %106 = arith.mulf %105, %91 : vector<14x130xf32>
    %107 = arith.addf %90, %106 : vector<14x130xf32>
    %108 = vector.extract_strided_slice %1 {offsets = [2, 0], sizes = [14, 130], strides = [1, 1]} : vector<16x132xf32> to vector<14x130xf32>
    %c24 = arith.constant 24 : index
    %109 = memref.load %arg2[%c24] : memref<36xf32, #tpu.memory_space<smem>>
    %110 = vector.broadcast %109 : f32 to vector<14x130xf32>
    %111 = arith.mulf %110, %108 : vector<14x130xf32>
    %112 = arith.addf %95, %111 : vector<14x130xf32>
    %c25 = arith.constant 25 : index
    %113 = memref.load %arg2[%c25] : memref<36xf32, #tpu.memory_space<smem>>
    %114 = vector.broadcast %113 : f32 to vector<14x130xf32>
    %115 = arith.mulf %114, %108 : vector<14x130xf32>
    %116 = arith.addf %99, %115 : vector<14x130xf32>
    %c26 = arith.constant 26 : index
    %117 = memref.load %arg2[%c26] : memref<36xf32, #tpu.memory_space<smem>>
    %118 = vector.broadcast %117 : f32 to vector<14x130xf32>
    %119 = arith.mulf %118, %108 : vector<14x130xf32>
    %120 = arith.addf %103, %119 : vector<14x130xf32>
    %c27 = arith.constant 27 : index
    %121 = memref.load %arg2[%c27] : memref<36xf32, #tpu.memory_space<smem>>
    %122 = vector.broadcast %121 : f32 to vector<14x130xf32>
    %123 = arith.mulf %122, %108 : vector<14x130xf32>
    %124 = arith.addf %107, %123 : vector<14x130xf32>
    %125 = vector.extract_strided_slice %1 {offsets = [2, 1], sizes = [14, 130], strides = [1, 1]} : vector<16x132xf32> to vector<14x130xf32>
    %c28 = arith.constant 28 : index
    %126 = memref.load %arg2[%c28] : memref<36xf32, #tpu.memory_space<smem>>
    %127 = vector.broadcast %126 : f32 to vector<14x130xf32>
    %128 = arith.mulf %127, %125 : vector<14x130xf32>
    %129 = arith.addf %112, %128 : vector<14x130xf32>
    %c29 = arith.constant 29 : index
    %130 = memref.load %arg2[%c29] : memref<36xf32, #tpu.memory_space<smem>>
    %131 = vector.broadcast %130 : f32 to vector<14x130xf32>
    %132 = arith.mulf %131, %125 : vector<14x130xf32>
    %133 = arith.addf %116, %132 : vector<14x130xf32>
    %c30 = arith.constant 30 : index
    %134 = memref.load %arg2[%c30] : memref<36xf32, #tpu.memory_space<smem>>
    %135 = vector.broadcast %134 : f32 to vector<14x130xf32>
    %136 = arith.mulf %135, %125 : vector<14x130xf32>
    %137 = arith.addf %120, %136 : vector<14x130xf32>
    %c31 = arith.constant 31 : index
    %138 = memref.load %arg2[%c31] : memref<36xf32, #tpu.memory_space<smem>>
    %139 = vector.broadcast %138 : f32 to vector<14x130xf32>
    %140 = arith.mulf %139, %125 : vector<14x130xf32>
    %141 = arith.addf %124, %140 : vector<14x130xf32>
    %142 = vector.extract_strided_slice %1 {offsets = [2, 2], sizes = [14, 130], strides = [1, 1]} : vector<16x132xf32> to vector<14x130xf32>
    %c32 = arith.constant 32 : index
    %143 = memref.load %arg2[%c32] : memref<36xf32, #tpu.memory_space<smem>>
    %144 = vector.broadcast %143 : f32 to vector<14x130xf32>
    %145 = arith.mulf %144, %142 : vector<14x130xf32>
    %146 = arith.addf %129, %145 : vector<14x130xf32>
    %c33 = arith.constant 33 : index
    %147 = memref.load %arg2[%c33] : memref<36xf32, #tpu.memory_space<smem>>
    %148 = vector.broadcast %147 : f32 to vector<14x130xf32>
    %149 = arith.mulf %148, %142 : vector<14x130xf32>
    %150 = arith.addf %133, %149 : vector<14x130xf32>
    %c34 = arith.constant 34 : index
    %151 = memref.load %arg2[%c34] : memref<36xf32, #tpu.memory_space<smem>>
    %152 = vector.broadcast %151 : f32 to vector<14x130xf32>
    %153 = arith.mulf %152, %142 : vector<14x130xf32>
    %154 = arith.addf %137, %153 : vector<14x130xf32>
    %c35 = arith.constant 35 : index
    %155 = memref.load %arg2[%c35] : memref<36xf32, #tpu.memory_space<smem>>
    %156 = vector.broadcast %155 : f32 to vector<14x130xf32>
    %157 = arith.mulf %156, %142 : vector<14x130xf32>
    %158 = arith.addf %141, %157 : vector<14x130xf32>
    %c0_6 = arith.constant 0 : index
    %159 = memref.load %arg3[%c0_6] : memref<4xf32, #tpu.memory_space<smem>>
    %160 = vector.broadcast %159 : f32 to vector<14x130xf32>
    %161 = arith.addf %146, %160 : vector<14x130xf32>
    %cst_7 = arith.constant 0.000000e+00 : f32
    %162 = vector.broadcast %cst_7 : f32 to vector<14x130xf32>
    %163 = arith.maximumf %161, %162 : vector<14x130xf32>
    %c1_8 = arith.constant 1 : index
    %164 = memref.load %arg3[%c1_8] : memref<4xf32, #tpu.memory_space<smem>>
    %165 = vector.broadcast %164 : f32 to vector<14x130xf32>
    %166 = arith.addf %150, %165 : vector<14x130xf32>
    %cst_9 = arith.constant 0.000000e+00 : f32
    %167 = vector.broadcast %cst_9 : f32 to vector<14x130xf32>
    %168 = arith.maximumf %166, %167 : vector<14x130xf32>
    %c2_10 = arith.constant 2 : index
    %169 = memref.load %arg3[%c2_10] : memref<4xf32, #tpu.memory_space<smem>>
    %170 = vector.broadcast %169 : f32 to vector<14x130xf32>
    %171 = arith.addf %154, %170 : vector<14x130xf32>
    %cst_11 = arith.constant 0.000000e+00 : f32
    %172 = vector.broadcast %cst_11 : f32 to vector<14x130xf32>
    %173 = arith.maximumf %171, %172 : vector<14x130xf32>
    %c3_12 = arith.constant 3 : index
    %174 = memref.load %arg3[%c3_12] : memref<4xf32, #tpu.memory_space<smem>>
    %175 = vector.broadcast %174 : f32 to vector<14x130xf32>
    %176 = arith.addf %158, %175 : vector<14x130xf32>
    %cst_13 = arith.constant 0.000000e+00 : f32
    %177 = vector.broadcast %cst_13 : f32 to vector<14x130xf32>
    %178 = arith.maximumf %176, %177 : vector<14x130xf32>
    %cst_14 = arith.constant 0.000000e+00 : f32
    %179 = vector.broadcast %cst_14 : f32 to vector<12x128xf32>
    %cst_15 = arith.constant 0.000000e+00 : f32
    %180 = vector.broadcast %cst_15 : f32 to vector<12x128xf32>
    %cst_16 = arith.constant 0.000000e+00 : f32
    %181 = vector.broadcast %cst_16 : f32 to vector<12x128xf32>
    %cst_17 = arith.constant 0.000000e+00 : f32
    %182 = vector.broadcast %cst_17 : f32 to vector<12x128xf32>
    %183 = vector.extract_strided_slice %163 {offsets = [0, 0], sizes = [12, 128], strides = [1, 1]} : vector<14x130xf32> to vector<12x128xf32>
    %c0_18 = arith.constant 0 : index
    %184 = memref.load %arg4[%c0_18] : memref<144xf32, #tpu.memory_space<smem>>
    %185 = vector.broadcast %184 : f32 to vector<12x128xf32>
    %186 = arith.mulf %185, %183 : vector<12x128xf32>
    %187 = arith.addf %179, %186 : vector<12x128xf32>
    %c1_19 = arith.constant 1 : index
    %188 = memref.load %arg4[%c1_19] : memref<144xf32, #tpu.memory_space<smem>>
    %189 = vector.broadcast %188 : f32 to vector<12x128xf32>
    %190 = arith.mulf %189, %183 : vector<12x128xf32>
    %191 = arith.addf %180, %190 : vector<12x128xf32>
    %c2_20 = arith.constant 2 : index
    %192 = memref.load %arg4[%c2_20] : memref<144xf32, #tpu.memory_space<smem>>
    %193 = vector.broadcast %192 : f32 to vector<12x128xf32>
    %194 = arith.mulf %193, %183 : vector<12x128xf32>
    %195 = arith.addf %181, %194 : vector<12x128xf32>
    %c3_21 = arith.constant 3 : index
    %196 = memref.load %arg4[%c3_21] : memref<144xf32, #tpu.memory_space<smem>>
    %197 = vector.broadcast %196 : f32 to vector<12x128xf32>
    %198 = arith.mulf %197, %183 : vector<12x128xf32>
    %199 = arith.addf %182, %198 : vector<12x128xf32>
    %200 = vector.extract_strided_slice %163 {offsets = [0, 1], sizes = [12, 128], strides = [1, 1]} : vector<14x130xf32> to vector<12x128xf32>
    %c16_22 = arith.constant 16 : index
    %201 = memref.load %arg4[%c16_22] : memref<144xf32, #tpu.memory_space<smem>>
    %202 = vector.broadcast %201 : f32 to vector<12x128xf32>
    %203 = arith.mulf %202, %200 : vector<12x128xf32>
    %204 = arith.addf %187, %203 : vector<12x128xf32>
    %c17_23 = arith.constant 17 : index
    %205 = memref.load %arg4[%c17_23] : memref<144xf32, #tpu.memory_space<smem>>
    %206 = vector.broadcast %205 : f32 to vector<12x128xf32>
    %207 = arith.mulf %206, %200 : vector<12x128xf32>
    %208 = arith.addf %191, %207 : vector<12x128xf32>
    %c18_24 = arith.constant 18 : index
    %209 = memref.load %arg4[%c18_24] : memref<144xf32, #tpu.memory_space<smem>>
    %210 = vector.broadcast %209 : f32 to vector<12x128xf32>
    %211 = arith.mulf %210, %200 : vector<12x128xf32>
    %212 = arith.addf %195, %211 : vector<12x128xf32>
    %c19_25 = arith.constant 19 : index
    %213 = memref.load %arg4[%c19_25] : memref<144xf32, #tpu.memory_space<smem>>
    %214 = vector.broadcast %213 : f32 to vector<12x128xf32>
    %215 = arith.mulf %214, %200 : vector<12x128xf32>
    %216 = arith.addf %199, %215 : vector<12x128xf32>
    %217 = vector.extract_strided_slice %163 {offsets = [0, 2], sizes = [12, 128], strides = [1, 1]} : vector<14x130xf32> to vector<12x128xf32>
    %c32_26 = arith.constant 32 : index
    %218 = memref.load %arg4[%c32_26] : memref<144xf32, #tpu.memory_space<smem>>
    %219 = vector.broadcast %218 : f32 to vector<12x128xf32>
    %220 = arith.mulf %219, %217 : vector<12x128xf32>
    %221 = arith.addf %204, %220 : vector<12x128xf32>
    %c33_27 = arith.constant 33 : index
    %222 = memref.load %arg4[%c33_27] : memref<144xf32, #tpu.memory_space<smem>>
    %223 = vector.broadcast %222 : f32 to vector<12x128xf32>
    %224 = arith.mulf %223, %217 : vector<12x128xf32>
    %225 = arith.addf %208, %224 : vector<12x128xf32>
    %c34_28 = arith.constant 34 : index
    %226 = memref.load %arg4[%c34_28] : memref<144xf32, #tpu.memory_space<smem>>
    %227 = vector.broadcast %226 : f32 to vector<12x128xf32>
    %228 = arith.mulf %227, %217 : vector<12x128xf32>
    %229 = arith.addf %212, %228 : vector<12x128xf32>
    %c35_29 = arith.constant 35 : index
    %230 = memref.load %arg4[%c35_29] : memref<144xf32, #tpu.memory_space<smem>>
    %231 = vector.broadcast %230 : f32 to vector<12x128xf32>
    %232 = arith.mulf %231, %217 : vector<12x128xf32>
    %233 = arith.addf %216, %232 : vector<12x128xf32>
    %234 = vector.extract_strided_slice %163 {offsets = [1, 0], sizes = [12, 128], strides = [1, 1]} : vector<14x130xf32> to vector<12x128xf32>
    %c48 = arith.constant 48 : index
    %235 = memref.load %arg4[%c48] : memref<144xf32, #tpu.memory_space<smem>>
    %236 = vector.broadcast %235 : f32 to vector<12x128xf32>
    %237 = arith.mulf %236, %234 : vector<12x128xf32>
    %238 = arith.addf %221, %237 : vector<12x128xf32>
    %c49 = arith.constant 49 : index
    %239 = memref.load %arg4[%c49] : memref<144xf32, #tpu.memory_space<smem>>
    %240 = vector.broadcast %239 : f32 to vector<12x128xf32>
    %241 = arith.mulf %240, %234 : vector<12x128xf32>
    %242 = arith.addf %225, %241 : vector<12x128xf32>
    %c50 = arith.constant 50 : index
    %243 = memref.load %arg4[%c50] : memref<144xf32, #tpu.memory_space<smem>>
    %244 = vector.broadcast %243 : f32 to vector<12x128xf32>
    %245 = arith.mulf %244, %234 : vector<12x128xf32>
    %246 = arith.addf %229, %245 : vector<12x128xf32>
    %c51 = arith.constant 51 : index
    %247 = memref.load %arg4[%c51] : memref<144xf32, #tpu.memory_space<smem>>
    %248 = vector.broadcast %247 : f32 to vector<12x128xf32>
    %249 = arith.mulf %248, %234 : vector<12x128xf32>
    %250 = arith.addf %233, %249 : vector<12x128xf32>
    %251 = vector.extract_strided_slice %163 {offsets = [1, 1], sizes = [12, 128], strides = [1, 1]} : vector<14x130xf32> to vector<12x128xf32>
    %c64 = arith.constant 64 : index
    %252 = memref.load %arg4[%c64] : memref<144xf32, #tpu.memory_space<smem>>
    %253 = vector.broadcast %252 : f32 to vector<12x128xf32>
    %254 = arith.mulf %253, %251 : vector<12x128xf32>
    %255 = arith.addf %238, %254 : vector<12x128xf32>
    %c65 = arith.constant 65 : index
    %256 = memref.load %arg4[%c65] : memref<144xf32, #tpu.memory_space<smem>>
    %257 = vector.broadcast %256 : f32 to vector<12x128xf32>
    %258 = arith.mulf %257, %251 : vector<12x128xf32>
    %259 = arith.addf %242, %258 : vector<12x128xf32>
    %c66 = arith.constant 66 : index
    %260 = memref.load %arg4[%c66] : memref<144xf32, #tpu.memory_space<smem>>
    %261 = vector.broadcast %260 : f32 to vector<12x128xf32>
    %262 = arith.mulf %261, %251 : vector<12x128xf32>
    %263 = arith.addf %246, %262 : vector<12x128xf32>
    %c67 = arith.constant 67 : index
    %264 = memref.load %arg4[%c67] : memref<144xf32, #tpu.memory_space<smem>>
    %265 = vector.broadcast %264 : f32 to vector<12x128xf32>
    %266 = arith.mulf %265, %251 : vector<12x128xf32>
    %267 = arith.addf %250, %266 : vector<12x128xf32>
    %268 = vector.extract_strided_slice %163 {offsets = [1, 2], sizes = [12, 128], strides = [1, 1]} : vector<14x130xf32> to vector<12x128xf32>
    %c80 = arith.constant 80 : index
    %269 = memref.load %arg4[%c80] : memref<144xf32, #tpu.memory_space<smem>>
    %270 = vector.broadcast %269 : f32 to vector<12x128xf32>
    %271 = arith.mulf %270, %268 : vector<12x128xf32>
    %272 = arith.addf %255, %271 : vector<12x128xf32>
    %c81 = arith.constant 81 : index
    %273 = memref.load %arg4[%c81] : memref<144xf32, #tpu.memory_space<smem>>
    %274 = vector.broadcast %273 : f32 to vector<12x128xf32>
    %275 = arith.mulf %274, %268 : vector<12x128xf32>
    %276 = arith.addf %259, %275 : vector<12x128xf32>
    %c82 = arith.constant 82 : index
    %277 = memref.load %arg4[%c82] : memref<144xf32, #tpu.memory_space<smem>>
    %278 = vector.broadcast %277 : f32 to vector<12x128xf32>
    %279 = arith.mulf %278, %268 : vector<12x128xf32>
    %280 = arith.addf %263, %279 : vector<12x128xf32>
    %c83 = arith.constant 83 : index
    %281 = memref.load %arg4[%c83] : memref<144xf32, #tpu.memory_space<smem>>
    %282 = vector.broadcast %281 : f32 to vector<12x128xf32>
    %283 = arith.mulf %282, %268 : vector<12x128xf32>
    %284 = arith.addf %267, %283 : vector<12x128xf32>
    %285 = vector.extract_strided_slice %163 {offsets = [2, 0], sizes = [12, 128], strides = [1, 1]} : vector<14x130xf32> to vector<12x128xf32>
    %c96 = arith.constant 96 : index
    %286 = memref.load %arg4[%c96] : memref<144xf32, #tpu.memory_space<smem>>
    %287 = vector.broadcast %286 : f32 to vector<12x128xf32>
    %288 = arith.mulf %287, %285 : vector<12x128xf32>
    %289 = arith.addf %272, %288 : vector<12x128xf32>
    %c97 = arith.constant 97 : index
    %290 = memref.load %arg4[%c97] : memref<144xf32, #tpu.memory_space<smem>>
    %291 = vector.broadcast %290 : f32 to vector<12x128xf32>
    %292 = arith.mulf %291, %285 : vector<12x128xf32>
    %293 = arith.addf %276, %292 : vector<12x128xf32>
    %c98 = arith.constant 98 : index
    %294 = memref.load %arg4[%c98] : memref<144xf32, #tpu.memory_space<smem>>
    %295 = vector.broadcast %294 : f32 to vector<12x128xf32>
    %296 = arith.mulf %295, %285 : vector<12x128xf32>
    %297 = arith.addf %280, %296 : vector<12x128xf32>
    %c99 = arith.constant 99 : index
    %298 = memref.load %arg4[%c99] : memref<144xf32, #tpu.memory_space<smem>>
    %299 = vector.broadcast %298 : f32 to vector<12x128xf32>
    %300 = arith.mulf %299, %285 : vector<12x128xf32>
    %301 = arith.addf %284, %300 : vector<12x128xf32>
    %302 = vector.extract_strided_slice %163 {offsets = [2, 1], sizes = [12, 128], strides = [1, 1]} : vector<14x130xf32> to vector<12x128xf32>
    %c112 = arith.constant 112 : index
    %303 = memref.load %arg4[%c112] : memref<144xf32, #tpu.memory_space<smem>>
    %304 = vector.broadcast %303 : f32 to vector<12x128xf32>
    %305 = arith.mulf %304, %302 : vector<12x128xf32>
    %306 = arith.addf %289, %305 : vector<12x128xf32>
    %c113 = arith.constant 113 : index
    %307 = memref.load %arg4[%c113] : memref<144xf32, #tpu.memory_space<smem>>
    %308 = vector.broadcast %307 : f32 to vector<12x128xf32>
    %309 = arith.mulf %308, %302 : vector<12x128xf32>
    %310 = arith.addf %293, %309 : vector<12x128xf32>
    %c114 = arith.constant 114 : index
    %311 = memref.load %arg4[%c114] : memref<144xf32, #tpu.memory_space<smem>>
    %312 = vector.broadcast %311 : f32 to vector<12x128xf32>
    %313 = arith.mulf %312, %302 : vector<12x128xf32>
    %314 = arith.addf %297, %313 : vector<12x128xf32>
    %c115 = arith.constant 115 : index
    %315 = memref.load %arg4[%c115] : memref<144xf32, #tpu.memory_space<smem>>
    %316 = vector.broadcast %315 : f32 to vector<12x128xf32>
    %317 = arith.mulf %316, %302 : vector<12x128xf32>
    %318 = arith.addf %301, %317 : vector<12x128xf32>
    %319 = vector.extract_strided_slice %163 {offsets = [2, 2], sizes = [12, 128], strides = [1, 1]} : vector<14x130xf32> to vector<12x128xf32>
    %c128 = arith.constant 128 : index
    %320 = memref.load %arg4[%c128] : memref<144xf32, #tpu.memory_space<smem>>
    %321 = vector.broadcast %320 : f32 to vector<12x128xf32>
    %322 = arith.mulf %321, %319 : vector<12x128xf32>
    %323 = arith.addf %306, %322 : vector<12x128xf32>
    %c129 = arith.constant 129 : index
    %324 = memref.load %arg4[%c129] : memref<144xf32, #tpu.memory_space<smem>>
    %325 = vector.broadcast %324 : f32 to vector<12x128xf32>
    %326 = arith.mulf %325, %319 : vector<12x128xf32>
    %327 = arith.addf %310, %326 : vector<12x128xf32>
    %c130 = arith.constant 130 : index
    %328 = memref.load %arg4[%c130] : memref<144xf32, #tpu.memory_space<smem>>
    %329 = vector.broadcast %328 : f32 to vector<12x128xf32>
    %330 = arith.mulf %329, %319 : vector<12x128xf32>
    %331 = arith.addf %314, %330 : vector<12x128xf32>
    %c131 = arith.constant 131 : index
    %332 = memref.load %arg4[%c131] : memref<144xf32, #tpu.memory_space<smem>>
    %333 = vector.broadcast %332 : f32 to vector<12x128xf32>
    %334 = arith.mulf %333, %319 : vector<12x128xf32>
    %335 = arith.addf %318, %334 : vector<12x128xf32>
    %336 = vector.extract_strided_slice %168 {offsets = [0, 0], sizes = [12, 128], strides = [1, 1]} : vector<14x130xf32> to vector<12x128xf32>
    %c4_30 = arith.constant 4 : index
    %337 = memref.load %arg4[%c4_30] : memref<144xf32, #tpu.memory_space<smem>>
    %338 = vector.broadcast %337 : f32 to vector<12x128xf32>
    %339 = arith.mulf %338, %336 : vector<12x128xf32>
    %340 = arith.addf %323, %339 : vector<12x128xf32>
    %c5_31 = arith.constant 5 : index
    %341 = memref.load %arg4[%c5_31] : memref<144xf32, #tpu.memory_space<smem>>
    %342 = vector.broadcast %341 : f32 to vector<12x128xf32>
    %343 = arith.mulf %342, %336 : vector<12x128xf32>
    %344 = arith.addf %327, %343 : vector<12x128xf32>
    %c6_32 = arith.constant 6 : index
    %345 = memref.load %arg4[%c6_32] : memref<144xf32, #tpu.memory_space<smem>>
    %346 = vector.broadcast %345 : f32 to vector<12x128xf32>
    %347 = arith.mulf %346, %336 : vector<12x128xf32>
    %348 = arith.addf %331, %347 : vector<12x128xf32>
    %c7_33 = arith.constant 7 : index
    %349 = memref.load %arg4[%c7_33] : memref<144xf32, #tpu.memory_space<smem>>
    %350 = vector.broadcast %349 : f32 to vector<12x128xf32>
    %351 = arith.mulf %350, %336 : vector<12x128xf32>
    %352 = arith.addf %335, %351 : vector<12x128xf32>
    %353 = vector.extract_strided_slice %168 {offsets = [0, 1], sizes = [12, 128], strides = [1, 1]} : vector<14x130xf32> to vector<12x128xf32>
    %c20_34 = arith.constant 20 : index
    %354 = memref.load %arg4[%c20_34] : memref<144xf32, #tpu.memory_space<smem>>
    %355 = vector.broadcast %354 : f32 to vector<12x128xf32>
    %356 = arith.mulf %355, %353 : vector<12x128xf32>
    %357 = arith.addf %340, %356 : vector<12x128xf32>
    %c21_35 = arith.constant 21 : index
    %358 = memref.load %arg4[%c21_35] : memref<144xf32, #tpu.memory_space<smem>>
    %359 = vector.broadcast %358 : f32 to vector<12x128xf32>
    %360 = arith.mulf %359, %353 : vector<12x128xf32>
    %361 = arith.addf %344, %360 : vector<12x128xf32>
    %c22_36 = arith.constant 22 : index
    %362 = memref.load %arg4[%c22_36] : memref<144xf32, #tpu.memory_space<smem>>
    %363 = vector.broadcast %362 : f32 to vector<12x128xf32>
    %364 = arith.mulf %363, %353 : vector<12x128xf32>
    %365 = arith.addf %348, %364 : vector<12x128xf32>
    %c23_37 = arith.constant 23 : index
    %366 = memref.load %arg4[%c23_37] : memref<144xf32, #tpu.memory_space<smem>>
    %367 = vector.broadcast %366 : f32 to vector<12x128xf32>
    %368 = arith.mulf %367, %353 : vector<12x128xf32>
    %369 = arith.addf %352, %368 : vector<12x128xf32>
    %370 = vector.extract_strided_slice %168 {offsets = [0, 2], sizes = [12, 128], strides = [1, 1]} : vector<14x130xf32> to vector<12x128xf32>
    %c36 = arith.constant 36 : index
    %371 = memref.load %arg4[%c36] : memref<144xf32, #tpu.memory_space<smem>>
    %372 = vector.broadcast %371 : f32 to vector<12x128xf32>
    %373 = arith.mulf %372, %370 : vector<12x128xf32>
    %374 = arith.addf %357, %373 : vector<12x128xf32>
    %c37 = arith.constant 37 : index
    %375 = memref.load %arg4[%c37] : memref<144xf32, #tpu.memory_space<smem>>
    %376 = vector.broadcast %375 : f32 to vector<12x128xf32>
    %377 = arith.mulf %376, %370 : vector<12x128xf32>
    %378 = arith.addf %361, %377 : vector<12x128xf32>
    %c38 = arith.constant 38 : index
    %379 = memref.load %arg4[%c38] : memref<144xf32, #tpu.memory_space<smem>>
    %380 = vector.broadcast %379 : f32 to vector<12x128xf32>
    %381 = arith.mulf %380, %370 : vector<12x128xf32>
    %382 = arith.addf %365, %381 : vector<12x128xf32>
    %c39 = arith.constant 39 : index
    %383 = memref.load %arg4[%c39] : memref<144xf32, #tpu.memory_space<smem>>
    %384 = vector.broadcast %383 : f32 to vector<12x128xf32>
    %385 = arith.mulf %384, %370 : vector<12x128xf32>
    %386 = arith.addf %369, %385 : vector<12x128xf32>
    %387 = vector.extract_strided_slice %168 {offsets = [1, 0], sizes = [12, 128], strides = [1, 1]} : vector<14x130xf32> to vector<12x128xf32>
    %c52 = arith.constant 52 : index
    %388 = memref.load %arg4[%c52] : memref<144xf32, #tpu.memory_space<smem>>
    %389 = vector.broadcast %388 : f32 to vector<12x128xf32>
    %390 = arith.mulf %389, %387 : vector<12x128xf32>
    %391 = arith.addf %374, %390 : vector<12x128xf32>
    %c53 = arith.constant 53 : index
    %392 = memref.load %arg4[%c53] : memref<144xf32, #tpu.memory_space<smem>>
    %393 = vector.broadcast %392 : f32 to vector<12x128xf32>
    %394 = arith.mulf %393, %387 : vector<12x128xf32>
    %395 = arith.addf %378, %394 : vector<12x128xf32>
    %c54 = arith.constant 54 : index
    %396 = memref.load %arg4[%c54] : memref<144xf32, #tpu.memory_space<smem>>
    %397 = vector.broadcast %396 : f32 to vector<12x128xf32>
    %398 = arith.mulf %397, %387 : vector<12x128xf32>
    %399 = arith.addf %382, %398 : vector<12x128xf32>
    %c55 = arith.constant 55 : index
    %400 = memref.load %arg4[%c55] : memref<144xf32, #tpu.memory_space<smem>>
    %401 = vector.broadcast %400 : f32 to vector<12x128xf32>
    %402 = arith.mulf %401, %387 : vector<12x128xf32>
    %403 = arith.addf %386, %402 : vector<12x128xf32>
    %404 = vector.extract_strided_slice %168 {offsets = [1, 1], sizes = [12, 128], strides = [1, 1]} : vector<14x130xf32> to vector<12x128xf32>
    %c68 = arith.constant 68 : index
    %405 = memref.load %arg4[%c68] : memref<144xf32, #tpu.memory_space<smem>>
    %406 = vector.broadcast %405 : f32 to vector<12x128xf32>
    %407 = arith.mulf %406, %404 : vector<12x128xf32>
    %408 = arith.addf %391, %407 : vector<12x128xf32>
    %c69 = arith.constant 69 : index
    %409 = memref.load %arg4[%c69] : memref<144xf32, #tpu.memory_space<smem>>
    %410 = vector.broadcast %409 : f32 to vector<12x128xf32>
    %411 = arith.mulf %410, %404 : vector<12x128xf32>
    %412 = arith.addf %395, %411 : vector<12x128xf32>
    %c70 = arith.constant 70 : index
    %413 = memref.load %arg4[%c70] : memref<144xf32, #tpu.memory_space<smem>>
    %414 = vector.broadcast %413 : f32 to vector<12x128xf32>
    %415 = arith.mulf %414, %404 : vector<12x128xf32>
    %416 = arith.addf %399, %415 : vector<12x128xf32>
    %c71 = arith.constant 71 : index
    %417 = memref.load %arg4[%c71] : memref<144xf32, #tpu.memory_space<smem>>
    %418 = vector.broadcast %417 : f32 to vector<12x128xf32>
    %419 = arith.mulf %418, %404 : vector<12x128xf32>
    %420 = arith.addf %403, %419 : vector<12x128xf32>
    %421 = vector.extract_strided_slice %168 {offsets = [1, 2], sizes = [12, 128], strides = [1, 1]} : vector<14x130xf32> to vector<12x128xf32>
    %c84 = arith.constant 84 : index
    %422 = memref.load %arg4[%c84] : memref<144xf32, #tpu.memory_space<smem>>
    %423 = vector.broadcast %422 : f32 to vector<12x128xf32>
    %424 = arith.mulf %423, %421 : vector<12x128xf32>
    %425 = arith.addf %408, %424 : vector<12x128xf32>
    %c85 = arith.constant 85 : index
    %426 = memref.load %arg4[%c85] : memref<144xf32, #tpu.memory_space<smem>>
    %427 = vector.broadcast %426 : f32 to vector<12x128xf32>
    %428 = arith.mulf %427, %421 : vector<12x128xf32>
    %429 = arith.addf %412, %428 : vector<12x128xf32>
    %c86 = arith.constant 86 : index
    %430 = memref.load %arg4[%c86] : memref<144xf32, #tpu.memory_space<smem>>
    %431 = vector.broadcast %430 : f32 to vector<12x128xf32>
    %432 = arith.mulf %431, %421 : vector<12x128xf32>
    %433 = arith.addf %416, %432 : vector<12x128xf32>
    %c87 = arith.constant 87 : index
    %434 = memref.load %arg4[%c87] : memref<144xf32, #tpu.memory_space<smem>>
    %435 = vector.broadcast %434 : f32 to vector<12x128xf32>
    %436 = arith.mulf %435, %421 : vector<12x128xf32>
    %437 = arith.addf %420, %436 : vector<12x128xf32>
    %438 = vector.extract_strided_slice %168 {offsets = [2, 0], sizes = [12, 128], strides = [1, 1]} : vector<14x130xf32> to vector<12x128xf32>
    %c100 = arith.constant 100 : index
    %439 = memref.load %arg4[%c100] : memref<144xf32, #tpu.memory_space<smem>>
    %440 = vector.broadcast %439 : f32 to vector<12x128xf32>
    %441 = arith.mulf %440, %438 : vector<12x128xf32>
    %442 = arith.addf %425, %441 : vector<12x128xf32>
    %c101 = arith.constant 101 : index
    %443 = memref.load %arg4[%c101] : memref<144xf32, #tpu.memory_space<smem>>
    %444 = vector.broadcast %443 : f32 to vector<12x128xf32>
    %445 = arith.mulf %444, %438 : vector<12x128xf32>
    %446 = arith.addf %429, %445 : vector<12x128xf32>
    %c102 = arith.constant 102 : index
    %447 = memref.load %arg4[%c102] : memref<144xf32, #tpu.memory_space<smem>>
    %448 = vector.broadcast %447 : f32 to vector<12x128xf32>
    %449 = arith.mulf %448, %438 : vector<12x128xf32>
    %450 = arith.addf %433, %449 : vector<12x128xf32>
    %c103 = arith.constant 103 : index
    %451 = memref.load %arg4[%c103] : memref<144xf32, #tpu.memory_space<smem>>
    %452 = vector.broadcast %451 : f32 to vector<12x128xf32>
    %453 = arith.mulf %452, %438 : vector<12x128xf32>
    %454 = arith.addf %437, %453 : vector<12x128xf32>
    %455 = vector.extract_strided_slice %168 {offsets = [2, 1], sizes = [12, 128], strides = [1, 1]} : vector<14x130xf32> to vector<12x128xf32>
    %c116 = arith.constant 116 : index
    %456 = memref.load %arg4[%c116] : memref<144xf32, #tpu.memory_space<smem>>
    %457 = vector.broadcast %456 : f32 to vector<12x128xf32>
    %458 = arith.mulf %457, %455 : vector<12x128xf32>
    %459 = arith.addf %442, %458 : vector<12x128xf32>
    %c117 = arith.constant 117 : index
    %460 = memref.load %arg4[%c117] : memref<144xf32, #tpu.memory_space<smem>>
    %461 = vector.broadcast %460 : f32 to vector<12x128xf32>
    %462 = arith.mulf %461, %455 : vector<12x128xf32>
    %463 = arith.addf %446, %462 : vector<12x128xf32>
    %c118 = arith.constant 118 : index
    %464 = memref.load %arg4[%c118] : memref<144xf32, #tpu.memory_space<smem>>
    %465 = vector.broadcast %464 : f32 to vector<12x128xf32>
    %466 = arith.mulf %465, %455 : vector<12x128xf32>
    %467 = arith.addf %450, %466 : vector<12x128xf32>
    %c119 = arith.constant 119 : index
    %468 = memref.load %arg4[%c119] : memref<144xf32, #tpu.memory_space<smem>>
    %469 = vector.broadcast %468 : f32 to vector<12x128xf32>
    %470 = arith.mulf %469, %455 : vector<12x128xf32>
    %471 = arith.addf %454, %470 : vector<12x128xf32>
    %472 = vector.extract_strided_slice %168 {offsets = [2, 2], sizes = [12, 128], strides = [1, 1]} : vector<14x130xf32> to vector<12x128xf32>
    %c132 = arith.constant 132 : index
    %473 = memref.load %arg4[%c132] : memref<144xf32, #tpu.memory_space<smem>>
    %474 = vector.broadcast %473 : f32 to vector<12x128xf32>
    %475 = arith.mulf %474, %472 : vector<12x128xf32>
    %476 = arith.addf %459, %475 : vector<12x128xf32>
    %c133 = arith.constant 133 : index
    %477 = memref.load %arg4[%c133] : memref<144xf32, #tpu.memory_space<smem>>
    %478 = vector.broadcast %477 : f32 to vector<12x128xf32>
    %479 = arith.mulf %478, %472 : vector<12x128xf32>
    %480 = arith.addf %463, %479 : vector<12x128xf32>
    %c134 = arith.constant 134 : index
    %481 = memref.load %arg4[%c134] : memref<144xf32, #tpu.memory_space<smem>>
    %482 = vector.broadcast %481 : f32 to vector<12x128xf32>
    %483 = arith.mulf %482, %472 : vector<12x128xf32>
    %484 = arith.addf %467, %483 : vector<12x128xf32>
    %c135 = arith.constant 135 : index
    %485 = memref.load %arg4[%c135] : memref<144xf32, #tpu.memory_space<smem>>
    %486 = vector.broadcast %485 : f32 to vector<12x128xf32>
    %487 = arith.mulf %486, %472 : vector<12x128xf32>
    %488 = arith.addf %471, %487 : vector<12x128xf32>
    %489 = vector.extract_strided_slice %173 {offsets = [0, 0], sizes = [12, 128], strides = [1, 1]} : vector<14x130xf32> to vector<12x128xf32>
    %c8_38 = arith.constant 8 : index
    %490 = memref.load %arg4[%c8_38] : memref<144xf32, #tpu.memory_space<smem>>
    %491 = vector.broadcast %490 : f32 to vector<12x128xf32>
    %492 = arith.mulf %491, %489 : vector<12x128xf32>
    %493 = arith.addf %476, %492 : vector<12x128xf32>
    %c9_39 = arith.constant 9 : index
    %494 = memref.load %arg4[%c9_39] : memref<144xf32, #tpu.memory_space<smem>>
    %495 = vector.broadcast %494 : f32 to vector<12x128xf32>
    %496 = arith.mulf %495, %489 : vector<12x128xf32>
    %497 = arith.addf %480, %496 : vector<12x128xf32>
    %c10_40 = arith.constant 10 : index
    %498 = memref.load %arg4[%c10_40] : memref<144xf32, #tpu.memory_space<smem>>
    %499 = vector.broadcast %498 : f32 to vector<12x128xf32>
    %500 = arith.mulf %499, %489 : vector<12x128xf32>
    %501 = arith.addf %484, %500 : vector<12x128xf32>
    %c11_41 = arith.constant 11 : index
    %502 = memref.load %arg4[%c11_41] : memref<144xf32, #tpu.memory_space<smem>>
    %503 = vector.broadcast %502 : f32 to vector<12x128xf32>
    %504 = arith.mulf %503, %489 : vector<12x128xf32>
    %505 = arith.addf %488, %504 : vector<12x128xf32>
    %506 = vector.extract_strided_slice %173 {offsets = [0, 1], sizes = [12, 128], strides = [1, 1]} : vector<14x130xf32> to vector<12x128xf32>
    %c24_42 = arith.constant 24 : index
    %507 = memref.load %arg4[%c24_42] : memref<144xf32, #tpu.memory_space<smem>>
    %508 = vector.broadcast %507 : f32 to vector<12x128xf32>
    %509 = arith.mulf %508, %506 : vector<12x128xf32>
    %510 = arith.addf %493, %509 : vector<12x128xf32>
    %c25_43 = arith.constant 25 : index
    %511 = memref.load %arg4[%c25_43] : memref<144xf32, #tpu.memory_space<smem>>
    %512 = vector.broadcast %511 : f32 to vector<12x128xf32>
    %513 = arith.mulf %512, %506 : vector<12x128xf32>
    %514 = arith.addf %497, %513 : vector<12x128xf32>
    %c26_44 = arith.constant 26 : index
    %515 = memref.load %arg4[%c26_44] : memref<144xf32, #tpu.memory_space<smem>>
    %516 = vector.broadcast %515 : f32 to vector<12x128xf32>
    %517 = arith.mulf %516, %506 : vector<12x128xf32>
    %518 = arith.addf %501, %517 : vector<12x128xf32>
    %c27_45 = arith.constant 27 : index
    %519 = memref.load %arg4[%c27_45] : memref<144xf32, #tpu.memory_space<smem>>
    %520 = vector.broadcast %519 : f32 to vector<12x128xf32>
    %521 = arith.mulf %520, %506 : vector<12x128xf32>
    %522 = arith.addf %505, %521 : vector<12x128xf32>
    %523 = vector.extract_strided_slice %173 {offsets = [0, 2], sizes = [12, 128], strides = [1, 1]} : vector<14x130xf32> to vector<12x128xf32>
    %c40 = arith.constant 40 : index
    %524 = memref.load %arg4[%c40] : memref<144xf32, #tpu.memory_space<smem>>
    %525 = vector.broadcast %524 : f32 to vector<12x128xf32>
    %526 = arith.mulf %525, %523 : vector<12x128xf32>
    %527 = arith.addf %510, %526 : vector<12x128xf32>
    %c41 = arith.constant 41 : index
    %528 = memref.load %arg4[%c41] : memref<144xf32, #tpu.memory_space<smem>>
    %529 = vector.broadcast %528 : f32 to vector<12x128xf32>
    %530 = arith.mulf %529, %523 : vector<12x128xf32>
    %531 = arith.addf %514, %530 : vector<12x128xf32>
    %c42 = arith.constant 42 : index
    %532 = memref.load %arg4[%c42] : memref<144xf32, #tpu.memory_space<smem>>
    %533 = vector.broadcast %532 : f32 to vector<12x128xf32>
    %534 = arith.mulf %533, %523 : vector<12x128xf32>
    %535 = arith.addf %518, %534 : vector<12x128xf32>
    %c43 = arith.constant 43 : index
    %536 = memref.load %arg4[%c43] : memref<144xf32, #tpu.memory_space<smem>>
    %537 = vector.broadcast %536 : f32 to vector<12x128xf32>
    %538 = arith.mulf %537, %523 : vector<12x128xf32>
    %539 = arith.addf %522, %538 : vector<12x128xf32>
    %540 = vector.extract_strided_slice %173 {offsets = [1, 0], sizes = [12, 128], strides = [1, 1]} : vector<14x130xf32> to vector<12x128xf32>
    %c56 = arith.constant 56 : index
    %541 = memref.load %arg4[%c56] : memref<144xf32, #tpu.memory_space<smem>>
    %542 = vector.broadcast %541 : f32 to vector<12x128xf32>
    %543 = arith.mulf %542, %540 : vector<12x128xf32>
    %544 = arith.addf %527, %543 : vector<12x128xf32>
    %c57 = arith.constant 57 : index
    %545 = memref.load %arg4[%c57] : memref<144xf32, #tpu.memory_space<smem>>
    %546 = vector.broadcast %545 : f32 to vector<12x128xf32>
    %547 = arith.mulf %546, %540 : vector<12x128xf32>
    %548 = arith.addf %531, %547 : vector<12x128xf32>
    %c58 = arith.constant 58 : index
    %549 = memref.load %arg4[%c58] : memref<144xf32, #tpu.memory_space<smem>>
    %550 = vector.broadcast %549 : f32 to vector<12x128xf32>
    %551 = arith.mulf %550, %540 : vector<12x128xf32>
    %552 = arith.addf %535, %551 : vector<12x128xf32>
    %c59 = arith.constant 59 : index
    %553 = memref.load %arg4[%c59] : memref<144xf32, #tpu.memory_space<smem>>
    %554 = vector.broadcast %553 : f32 to vector<12x128xf32>
    %555 = arith.mulf %554, %540 : vector<12x128xf32>
    %556 = arith.addf %539, %555 : vector<12x128xf32>
    %557 = vector.extract_strided_slice %173 {offsets = [1, 1], sizes = [12, 128], strides = [1, 1]} : vector<14x130xf32> to vector<12x128xf32>
    %c72 = arith.constant 72 : index
    %558 = memref.load %arg4[%c72] : memref<144xf32, #tpu.memory_space<smem>>
    %559 = vector.broadcast %558 : f32 to vector<12x128xf32>
    %560 = arith.mulf %559, %557 : vector<12x128xf32>
    %561 = arith.addf %544, %560 : vector<12x128xf32>
    %c73 = arith.constant 73 : index
    %562 = memref.load %arg4[%c73] : memref<144xf32, #tpu.memory_space<smem>>
    %563 = vector.broadcast %562 : f32 to vector<12x128xf32>
    %564 = arith.mulf %563, %557 : vector<12x128xf32>
    %565 = arith.addf %548, %564 : vector<12x128xf32>
    %c74 = arith.constant 74 : index
    %566 = memref.load %arg4[%c74] : memref<144xf32, #tpu.memory_space<smem>>
    %567 = vector.broadcast %566 : f32 to vector<12x128xf32>
    %568 = arith.mulf %567, %557 : vector<12x128xf32>
    %569 = arith.addf %552, %568 : vector<12x128xf32>
    %c75 = arith.constant 75 : index
    %570 = memref.load %arg4[%c75] : memref<144xf32, #tpu.memory_space<smem>>
    %571 = vector.broadcast %570 : f32 to vector<12x128xf32>
    %572 = arith.mulf %571, %557 : vector<12x128xf32>
    %573 = arith.addf %556, %572 : vector<12x128xf32>
    %574 = vector.extract_strided_slice %173 {offsets = [1, 2], sizes = [12, 128], strides = [1, 1]} : vector<14x130xf32> to vector<12x128xf32>
    %c88 = arith.constant 88 : index
    %575 = memref.load %arg4[%c88] : memref<144xf32, #tpu.memory_space<smem>>
    %576 = vector.broadcast %575 : f32 to vector<12x128xf32>
    %577 = arith.mulf %576, %574 : vector<12x128xf32>
    %578 = arith.addf %561, %577 : vector<12x128xf32>
    %c89 = arith.constant 89 : index
    %579 = memref.load %arg4[%c89] : memref<144xf32, #tpu.memory_space<smem>>
    %580 = vector.broadcast %579 : f32 to vector<12x128xf32>
    %581 = arith.mulf %580, %574 : vector<12x128xf32>
    %582 = arith.addf %565, %581 : vector<12x128xf32>
    %c90 = arith.constant 90 : index
    %583 = memref.load %arg4[%c90] : memref<144xf32, #tpu.memory_space<smem>>
    %584 = vector.broadcast %583 : f32 to vector<12x128xf32>
    %585 = arith.mulf %584, %574 : vector<12x128xf32>
    %586 = arith.addf %569, %585 : vector<12x128xf32>
    %c91 = arith.constant 91 : index
    %587 = memref.load %arg4[%c91] : memref<144xf32, #tpu.memory_space<smem>>
    %588 = vector.broadcast %587 : f32 to vector<12x128xf32>
    %589 = arith.mulf %588, %574 : vector<12x128xf32>
    %590 = arith.addf %573, %589 : vector<12x128xf32>
    %591 = vector.extract_strided_slice %173 {offsets = [2, 0], sizes = [12, 128], strides = [1, 1]} : vector<14x130xf32> to vector<12x128xf32>
    %c104 = arith.constant 104 : index
    %592 = memref.load %arg4[%c104] : memref<144xf32, #tpu.memory_space<smem>>
    %593 = vector.broadcast %592 : f32 to vector<12x128xf32>
    %594 = arith.mulf %593, %591 : vector<12x128xf32>
    %595 = arith.addf %578, %594 : vector<12x128xf32>
    %c105 = arith.constant 105 : index
    %596 = memref.load %arg4[%c105] : memref<144xf32, #tpu.memory_space<smem>>
    %597 = vector.broadcast %596 : f32 to vector<12x128xf32>
    %598 = arith.mulf %597, %591 : vector<12x128xf32>
    %599 = arith.addf %582, %598 : vector<12x128xf32>
    %c106 = arith.constant 106 : index
    %600 = memref.load %arg4[%c106] : memref<144xf32, #tpu.memory_space<smem>>
    %601 = vector.broadcast %600 : f32 to vector<12x128xf32>
    %602 = arith.mulf %601, %591 : vector<12x128xf32>
    %603 = arith.addf %586, %602 : vector<12x128xf32>
    %c107 = arith.constant 107 : index
    %604 = memref.load %arg4[%c107] : memref<144xf32, #tpu.memory_space<smem>>
    %605 = vector.broadcast %604 : f32 to vector<12x128xf32>
    %606 = arith.mulf %605, %591 : vector<12x128xf32>
    %607 = arith.addf %590, %606 : vector<12x128xf32>
    %608 = vector.extract_strided_slice %173 {offsets = [2, 1], sizes = [12, 128], strides = [1, 1]} : vector<14x130xf32> to vector<12x128xf32>
    %c120 = arith.constant 120 : index
    %609 = memref.load %arg4[%c120] : memref<144xf32, #tpu.memory_space<smem>>
    %610 = vector.broadcast %609 : f32 to vector<12x128xf32>
    %611 = arith.mulf %610, %608 : vector<12x128xf32>
    %612 = arith.addf %595, %611 : vector<12x128xf32>
    %c121 = arith.constant 121 : index
    %613 = memref.load %arg4[%c121] : memref<144xf32, #tpu.memory_space<smem>>
    %614 = vector.broadcast %613 : f32 to vector<12x128xf32>
    %615 = arith.mulf %614, %608 : vector<12x128xf32>
    %616 = arith.addf %599, %615 : vector<12x128xf32>
    %c122 = arith.constant 122 : index
    %617 = memref.load %arg4[%c122] : memref<144xf32, #tpu.memory_space<smem>>
    %618 = vector.broadcast %617 : f32 to vector<12x128xf32>
    %619 = arith.mulf %618, %608 : vector<12x128xf32>
    %620 = arith.addf %603, %619 : vector<12x128xf32>
    %c123 = arith.constant 123 : index
    %621 = memref.load %arg4[%c123] : memref<144xf32, #tpu.memory_space<smem>>
    %622 = vector.broadcast %621 : f32 to vector<12x128xf32>
    %623 = arith.mulf %622, %608 : vector<12x128xf32>
    %624 = arith.addf %607, %623 : vector<12x128xf32>
    %625 = vector.extract_strided_slice %173 {offsets = [2, 2], sizes = [12, 128], strides = [1, 1]} : vector<14x130xf32> to vector<12x128xf32>
    %c136 = arith.constant 136 : index
    %626 = memref.load %arg4[%c136] : memref<144xf32, #tpu.memory_space<smem>>
    %627 = vector.broadcast %626 : f32 to vector<12x128xf32>
    %628 = arith.mulf %627, %625 : vector<12x128xf32>
    %629 = arith.addf %612, %628 : vector<12x128xf32>
    %c137 = arith.constant 137 : index
    %630 = memref.load %arg4[%c137] : memref<144xf32, #tpu.memory_space<smem>>
    %631 = vector.broadcast %630 : f32 to vector<12x128xf32>
    %632 = arith.mulf %631, %625 : vector<12x128xf32>
    %633 = arith.addf %616, %632 : vector<12x128xf32>
    %c138 = arith.constant 138 : index
    %634 = memref.load %arg4[%c138] : memref<144xf32, #tpu.memory_space<smem>>
    %635 = vector.broadcast %634 : f32 to vector<12x128xf32>
    %636 = arith.mulf %635, %625 : vector<12x128xf32>
    %637 = arith.addf %620, %636 : vector<12x128xf32>
    %c139 = arith.constant 139 : index
    %638 = memref.load %arg4[%c139] : memref<144xf32, #tpu.memory_space<smem>>
    %639 = vector.broadcast %638 : f32 to vector<12x128xf32>
    %640 = arith.mulf %639, %625 : vector<12x128xf32>
    %641 = arith.addf %624, %640 : vector<12x128xf32>
    %642 = vector.extract_strided_slice %178 {offsets = [0, 0], sizes = [12, 128], strides = [1, 1]} : vector<14x130xf32> to vector<12x128xf32>
    %c12_46 = arith.constant 12 : index
    %643 = memref.load %arg4[%c12_46] : memref<144xf32, #tpu.memory_space<smem>>
    %644 = vector.broadcast %643 : f32 to vector<12x128xf32>
    %645 = arith.mulf %644, %642 : vector<12x128xf32>
    %646 = arith.addf %629, %645 : vector<12x128xf32>
    %c13_47 = arith.constant 13 : index
    %647 = memref.load %arg4[%c13_47] : memref<144xf32, #tpu.memory_space<smem>>
    %648 = vector.broadcast %647 : f32 to vector<12x128xf32>
    %649 = arith.mulf %648, %642 : vector<12x128xf32>
    %650 = arith.addf %633, %649 : vector<12x128xf32>
    %c14_48 = arith.constant 14 : index
    %651 = memref.load %arg4[%c14_48] : memref<144xf32, #tpu.memory_space<smem>>
    %652 = vector.broadcast %651 : f32 to vector<12x128xf32>
    %653 = arith.mulf %652, %642 : vector<12x128xf32>
    %654 = arith.addf %637, %653 : vector<12x128xf32>
    %c15_49 = arith.constant 15 : index
    %655 = memref.load %arg4[%c15_49] : memref<144xf32, #tpu.memory_space<smem>>
    %656 = vector.broadcast %655 : f32 to vector<12x128xf32>
    %657 = arith.mulf %656, %642 : vector<12x128xf32>
    %658 = arith.addf %641, %657 : vector<12x128xf32>
    %659 = vector.extract_strided_slice %178 {offsets = [0, 1], sizes = [12, 128], strides = [1, 1]} : vector<14x130xf32> to vector<12x128xf32>
    %c28_50 = arith.constant 28 : index
    %660 = memref.load %arg4[%c28_50] : memref<144xf32, #tpu.memory_space<smem>>
    %661 = vector.broadcast %660 : f32 to vector<12x128xf32>
    %662 = arith.mulf %661, %659 : vector<12x128xf32>
    %663 = arith.addf %646, %662 : vector<12x128xf32>
    %c29_51 = arith.constant 29 : index
    %664 = memref.load %arg4[%c29_51] : memref<144xf32, #tpu.memory_space<smem>>
    %665 = vector.broadcast %664 : f32 to vector<12x128xf32>
    %666 = arith.mulf %665, %659 : vector<12x128xf32>
    %667 = arith.addf %650, %666 : vector<12x128xf32>
    %c30_52 = arith.constant 30 : index
    %668 = memref.load %arg4[%c30_52] : memref<144xf32, #tpu.memory_space<smem>>
    %669 = vector.broadcast %668 : f32 to vector<12x128xf32>
    %670 = arith.mulf %669, %659 : vector<12x128xf32>
    %671 = arith.addf %654, %670 : vector<12x128xf32>
    %c31_53 = arith.constant 31 : index
    %672 = memref.load %arg4[%c31_53] : memref<144xf32, #tpu.memory_space<smem>>
    %673 = vector.broadcast %672 : f32 to vector<12x128xf32>
    %674 = arith.mulf %673, %659 : vector<12x128xf32>
    %675 = arith.addf %658, %674 : vector<12x128xf32>
    %676 = vector.extract_strided_slice %178 {offsets = [0, 2], sizes = [12, 128], strides = [1, 1]} : vector<14x130xf32> to vector<12x128xf32>
    %c44 = arith.constant 44 : index
    %677 = memref.load %arg4[%c44] : memref<144xf32, #tpu.memory_space<smem>>
    %678 = vector.broadcast %677 : f32 to vector<12x128xf32>
    %679 = arith.mulf %678, %676 : vector<12x128xf32>
    %680 = arith.addf %663, %679 : vector<12x128xf32>
    %c45 = arith.constant 45 : index
    %681 = memref.load %arg4[%c45] : memref<144xf32, #tpu.memory_space<smem>>
    %682 = vector.broadcast %681 : f32 to vector<12x128xf32>
    %683 = arith.mulf %682, %676 : vector<12x128xf32>
    %684 = arith.addf %667, %683 : vector<12x128xf32>
    %c46 = arith.constant 46 : index
    %685 = memref.load %arg4[%c46] : memref<144xf32, #tpu.memory_space<smem>>
    %686 = vector.broadcast %685 : f32 to vector<12x128xf32>
    %687 = arith.mulf %686, %676 : vector<12x128xf32>
    %688 = arith.addf %671, %687 : vector<12x128xf32>
    %c47 = arith.constant 47 : index
    %689 = memref.load %arg4[%c47] : memref<144xf32, #tpu.memory_space<smem>>
    %690 = vector.broadcast %689 : f32 to vector<12x128xf32>
    %691 = arith.mulf %690, %676 : vector<12x128xf32>
    %692 = arith.addf %675, %691 : vector<12x128xf32>
    %693 = vector.extract_strided_slice %178 {offsets = [1, 0], sizes = [12, 128], strides = [1, 1]} : vector<14x130xf32> to vector<12x128xf32>
    %c60 = arith.constant 60 : index
    %694 = memref.load %arg4[%c60] : memref<144xf32, #tpu.memory_space<smem>>
    %695 = vector.broadcast %694 : f32 to vector<12x128xf32>
    %696 = arith.mulf %695, %693 : vector<12x128xf32>
    %697 = arith.addf %680, %696 : vector<12x128xf32>
    %c61 = arith.constant 61 : index
    %698 = memref.load %arg4[%c61] : memref<144xf32, #tpu.memory_space<smem>>
    %699 = vector.broadcast %698 : f32 to vector<12x128xf32>
    %700 = arith.mulf %699, %693 : vector<12x128xf32>
    %701 = arith.addf %684, %700 : vector<12x128xf32>
    %c62 = arith.constant 62 : index
    %702 = memref.load %arg4[%c62] : memref<144xf32, #tpu.memory_space<smem>>
    %703 = vector.broadcast %702 : f32 to vector<12x128xf32>
    %704 = arith.mulf %703, %693 : vector<12x128xf32>
    %705 = arith.addf %688, %704 : vector<12x128xf32>
    %c63 = arith.constant 63 : index
    %706 = memref.load %arg4[%c63] : memref<144xf32, #tpu.memory_space<smem>>
    %707 = vector.broadcast %706 : f32 to vector<12x128xf32>
    %708 = arith.mulf %707, %693 : vector<12x128xf32>
    %709 = arith.addf %692, %708 : vector<12x128xf32>
    %710 = vector.extract_strided_slice %178 {offsets = [1, 1], sizes = [12, 128], strides = [1, 1]} : vector<14x130xf32> to vector<12x128xf32>
    %c76 = arith.constant 76 : index
    %711 = memref.load %arg4[%c76] : memref<144xf32, #tpu.memory_space<smem>>
    %712 = vector.broadcast %711 : f32 to vector<12x128xf32>
    %713 = arith.mulf %712, %710 : vector<12x128xf32>
    %714 = arith.addf %697, %713 : vector<12x128xf32>
    %c77 = arith.constant 77 : index
    %715 = memref.load %arg4[%c77] : memref<144xf32, #tpu.memory_space<smem>>
    %716 = vector.broadcast %715 : f32 to vector<12x128xf32>
    %717 = arith.mulf %716, %710 : vector<12x128xf32>
    %718 = arith.addf %701, %717 : vector<12x128xf32>
    %c78 = arith.constant 78 : index
    %719 = memref.load %arg4[%c78] : memref<144xf32, #tpu.memory_space<smem>>
    %720 = vector.broadcast %719 : f32 to vector<12x128xf32>
    %721 = arith.mulf %720, %710 : vector<12x128xf32>
    %722 = arith.addf %705, %721 : vector<12x128xf32>
    %c79 = arith.constant 79 : index
    %723 = memref.load %arg4[%c79] : memref<144xf32, #tpu.memory_space<smem>>
    %724 = vector.broadcast %723 : f32 to vector<12x128xf32>
    %725 = arith.mulf %724, %710 : vector<12x128xf32>
    %726 = arith.addf %709, %725 : vector<12x128xf32>
    %727 = vector.extract_strided_slice %178 {offsets = [1, 2], sizes = [12, 128], strides = [1, 1]} : vector<14x130xf32> to vector<12x128xf32>
    %c92 = arith.constant 92 : index
    %728 = memref.load %arg4[%c92] : memref<144xf32, #tpu.memory_space<smem>>
    %729 = vector.broadcast %728 : f32 to vector<12x128xf32>
    %730 = arith.mulf %729, %727 : vector<12x128xf32>
    %731 = arith.addf %714, %730 : vector<12x128xf32>
    %c93 = arith.constant 93 : index
    %732 = memref.load %arg4[%c93] : memref<144xf32, #tpu.memory_space<smem>>
    %733 = vector.broadcast %732 : f32 to vector<12x128xf32>
    %734 = arith.mulf %733, %727 : vector<12x128xf32>
    %735 = arith.addf %718, %734 : vector<12x128xf32>
    %c94 = arith.constant 94 : index
    %736 = memref.load %arg4[%c94] : memref<144xf32, #tpu.memory_space<smem>>
    %737 = vector.broadcast %736 : f32 to vector<12x128xf32>
    %738 = arith.mulf %737, %727 : vector<12x128xf32>
    %739 = arith.addf %722, %738 : vector<12x128xf32>
    %c95 = arith.constant 95 : index
    %740 = memref.load %arg4[%c95] : memref<144xf32, #tpu.memory_space<smem>>
    %741 = vector.broadcast %740 : f32 to vector<12x128xf32>
    %742 = arith.mulf %741, %727 : vector<12x128xf32>
    %743 = arith.addf %726, %742 : vector<12x128xf32>
    %744 = vector.extract_strided_slice %178 {offsets = [2, 0], sizes = [12, 128], strides = [1, 1]} : vector<14x130xf32> to vector<12x128xf32>
    %c108 = arith.constant 108 : index
    %745 = memref.load %arg4[%c108] : memref<144xf32, #tpu.memory_space<smem>>
    %746 = vector.broadcast %745 : f32 to vector<12x128xf32>
    %747 = arith.mulf %746, %744 : vector<12x128xf32>
    %748 = arith.addf %731, %747 : vector<12x128xf32>
    %c109 = arith.constant 109 : index
    %749 = memref.load %arg4[%c109] : memref<144xf32, #tpu.memory_space<smem>>
    %750 = vector.broadcast %749 : f32 to vector<12x128xf32>
    %751 = arith.mulf %750, %744 : vector<12x128xf32>
    %752 = arith.addf %735, %751 : vector<12x128xf32>
    %c110 = arith.constant 110 : index
    %753 = memref.load %arg4[%c110] : memref<144xf32, #tpu.memory_space<smem>>
    %754 = vector.broadcast %753 : f32 to vector<12x128xf32>
    %755 = arith.mulf %754, %744 : vector<12x128xf32>
    %756 = arith.addf %739, %755 : vector<12x128xf32>
    %c111 = arith.constant 111 : index
    %757 = memref.load %arg4[%c111] : memref<144xf32, #tpu.memory_space<smem>>
    %758 = vector.broadcast %757 : f32 to vector<12x128xf32>
    %759 = arith.mulf %758, %744 : vector<12x128xf32>
    %760 = arith.addf %743, %759 : vector<12x128xf32>
    %761 = vector.extract_strided_slice %178 {offsets = [2, 1], sizes = [12, 128], strides = [1, 1]} : vector<14x130xf32> to vector<12x128xf32>
    %c124 = arith.constant 124 : index
    %762 = memref.load %arg4[%c124] : memref<144xf32, #tpu.memory_space<smem>>
    %763 = vector.broadcast %762 : f32 to vector<12x128xf32>
    %764 = arith.mulf %763, %761 : vector<12x128xf32>
    %765 = arith.addf %748, %764 : vector<12x128xf32>
    %c125 = arith.constant 125 : index
    %766 = memref.load %arg4[%c125] : memref<144xf32, #tpu.memory_space<smem>>
    %767 = vector.broadcast %766 : f32 to vector<12x128xf32>
    %768 = arith.mulf %767, %761 : vector<12x128xf32>
    %769 = arith.addf %752, %768 : vector<12x128xf32>
    %c126 = arith.constant 126 : index
    %770 = memref.load %arg4[%c126] : memref<144xf32, #tpu.memory_space<smem>>
    %771 = vector.broadcast %770 : f32 to vector<12x128xf32>
    %772 = arith.mulf %771, %761 : vector<12x128xf32>
    %773 = arith.addf %756, %772 : vector<12x128xf32>
    %c127 = arith.constant 127 : index
    %774 = memref.load %arg4[%c127] : memref<144xf32, #tpu.memory_space<smem>>
    %775 = vector.broadcast %774 : f32 to vector<12x128xf32>
    %776 = arith.mulf %775, %761 : vector<12x128xf32>
    %777 = arith.addf %760, %776 : vector<12x128xf32>
    %778 = vector.extract_strided_slice %178 {offsets = [2, 2], sizes = [12, 128], strides = [1, 1]} : vector<14x130xf32> to vector<12x128xf32>
    %c140 = arith.constant 140 : index
    %779 = memref.load %arg4[%c140] : memref<144xf32, #tpu.memory_space<smem>>
    %780 = vector.broadcast %779 : f32 to vector<12x128xf32>
    %781 = arith.mulf %780, %778 : vector<12x128xf32>
    %782 = arith.addf %765, %781 : vector<12x128xf32>
    %c141 = arith.constant 141 : index
    %783 = memref.load %arg4[%c141] : memref<144xf32, #tpu.memory_space<smem>>
    %784 = vector.broadcast %783 : f32 to vector<12x128xf32>
    %785 = arith.mulf %784, %778 : vector<12x128xf32>
    %786 = arith.addf %769, %785 : vector<12x128xf32>
    %c142 = arith.constant 142 : index
    %787 = memref.load %arg4[%c142] : memref<144xf32, #tpu.memory_space<smem>>
    %788 = vector.broadcast %787 : f32 to vector<12x128xf32>
    %789 = arith.mulf %788, %778 : vector<12x128xf32>
    %790 = arith.addf %773, %789 : vector<12x128xf32>
    %c143 = arith.constant 143 : index
    %791 = memref.load %arg4[%c143] : memref<144xf32, #tpu.memory_space<smem>>
    %792 = vector.broadcast %791 : f32 to vector<12x128xf32>
    %793 = arith.mulf %792, %778 : vector<12x128xf32>
    %794 = arith.addf %777, %793 : vector<12x128xf32>
    %c0_54 = arith.constant 0 : index
    %795 = memref.load %arg5[%c0_54] : memref<4xf32, #tpu.memory_space<smem>>
    %796 = vector.broadcast %795 : f32 to vector<12x128xf32>
    %797 = arith.addf %782, %796 : vector<12x128xf32>
    %cst_55 = arith.constant 0.000000e+00 : f32
    %798 = vector.broadcast %cst_55 : f32 to vector<12x128xf32>
    %799 = arith.maximumf %797, %798 : vector<12x128xf32>
    %c1_56 = arith.constant 1 : index
    %800 = memref.load %arg5[%c1_56] : memref<4xf32, #tpu.memory_space<smem>>
    %801 = vector.broadcast %800 : f32 to vector<12x128xf32>
    %802 = arith.addf %786, %801 : vector<12x128xf32>
    %cst_57 = arith.constant 0.000000e+00 : f32
    %803 = vector.broadcast %cst_57 : f32 to vector<12x128xf32>
    %804 = arith.maximumf %802, %803 : vector<12x128xf32>
    %c2_58 = arith.constant 2 : index
    %805 = memref.load %arg5[%c2_58] : memref<4xf32, #tpu.memory_space<smem>>
    %806 = vector.broadcast %805 : f32 to vector<12x128xf32>
    %807 = arith.addf %790, %806 : vector<12x128xf32>
    %cst_59 = arith.constant 0.000000e+00 : f32
    %808 = vector.broadcast %cst_59 : f32 to vector<12x128xf32>
    %809 = arith.maximumf %807, %808 : vector<12x128xf32>
    %c3_60 = arith.constant 3 : index
    %810 = memref.load %arg5[%c3_60] : memref<4xf32, #tpu.memory_space<smem>>
    %811 = vector.broadcast %810 : f32 to vector<12x128xf32>
    %812 = arith.addf %794, %811 : vector<12x128xf32>
    %cst_61 = arith.constant 0.000000e+00 : f32
    %813 = vector.broadcast %cst_61 : f32 to vector<12x128xf32>
    %814 = arith.maximumf %812, %813 : vector<12x128xf32>
    %815 = vector.shape_cast %799 : vector<12x128xf32> to vector<1x12x128xf32>
    %816 = vector.shape_cast %804 : vector<12x128xf32> to vector<1x12x128xf32>
    %817 = vector.shape_cast %809 : vector<12x128xf32> to vector<1x12x128xf32>
    %818 = vector.shape_cast %814 : vector<12x128xf32> to vector<1x12x128xf32>
    %819 = tpu.concatenate %815, %816, %817, %818 in 0 : vector<1x12x128xf32>, vector<1x12x128xf32>, vector<1x12x128xf32>, vector<1x12x128xf32> -> vector<4x12x128xf32>
    %c0_62 = arith.constant 0 : index
    %c0_63 = arith.constant 0 : index
    %c0_64 = arith.constant 0 : index
    %c0_65 = arith.constant 0 : index
    %820 = vector.load %arg6[%c0_62, %c0_63, %c0_64, %c0_65] : memref<1x4x12x128xf32, #tpu.memory_space<vmem>>, vector<1x4x12x128xf32>
    %821 = vector.shape_cast %820 : vector<1x4x12x128xf32> to vector<4x12x128xf32>
    %822 = vector.shape_cast %819 : vector<4x12x128xf32> to vector<1x4x12x128xf32>
    tpu.vector_store %arg6[%c0_62, %c0_63, %c0_64, %c0_65], %822 {strides = array<i32>} : memref<1x4x12x128xf32, #tpu.memory_space<vmem>>, vector<1x4x12x128xf32>,
    return
  }
  func.func @transform_0(%arg0: i32) -> (i32, i32, i32) {
    %c0_i32 = arith.constant 0 : i32
    %c0_i32_0 = arith.constant 0 : i32
    %c0_i32_1 = arith.constant 0 : i32
    return %arg0, %c0_i32, %c0_i32_0 : i32, i32, i32
  }
  func.func @transform_1(%arg0: i32) -> i32 {
    %c0_i32 = arith.constant 0 : i32
    %c0_i32_0 = arith.constant 0 : i32
    return %c0_i32 : i32
  }
  func.func @transform_2(%arg0: i32) -> i32 {
    %c0_i32 = arith.constant 0 : i32
    %c0_i32_0 = arith.constant 0 : i32
    return %c0_i32 : i32
  }
  func.func @transform_3(%arg0: i32) -> i32 {
    %c0_i32 = arith.constant 0 : i32
    %c0_i32_0 = arith.constant 0 : i32
    return %c0_i32 : i32
  }
  func.func @transform_4(%arg0: i32) -> i32 {
    %c0_i32 = arith.constant 0 : i32
    %c0_i32_0 = arith.constant 0 : i32
    return %c0_i32 : i32
  }
  func.func @transform_5(%arg0: i32) -> (i32, i32, i32, i32) {
    %c0_i32 = arith.constant 0 : i32
    %c0_i32_0 = arith.constant 0 : i32
    %c0_i32_1 = arith.constant 0 : i32
    %c0_i32_2 = arith.constant 0 : i32
    return %arg0, %c0_i32, %c0_i32_0, %c0_i32_1 : i32, i32, i32, i32
  }
}

</mosaic_0001>

<llo_original>
// kernel: tpu_custom_call.1
$region0: #{tpu_custom_call.1}
  #allocation0 [shape = 'u32[]', space=smem, size = 0x4, offset = 0x4, fixed_abs, tag = 'smem constant byte address 0x4 - core index']
  #allocation1 [shape = 'u32[72,128]{1,0:T(1,128)}', space=vmem, size = 0x9000, scoped, tag = 'internal scratch']
  %s0 = inlined_call_operand.hbm [shape: f32[1,16,132], index: 0, kind: input, shape index: {}]
  %s1 = inlined_call_operand.hbm [shape: f32[36], index: 1, kind: input, shape index: {}]
  %s2 = inlined_call_operand.hbm [shape: f32[4], index: 2, kind: input, shape index: {}]
  %s3 = inlined_call_operand.vmem [shape: f32[144], index: 3, kind: input, shape index: {}]
  %s4 = inlined_call_operand.vmem [shape: f32[4], index: 4, kind: input, shape index: {}]
  %s5 = inlined_call_operand.vmem [shape: f32[1,4,12,128], index: 5, kind: output, shape index: {}]
  %s6 = sld [smem:[#allocation0]]
  $region50: #{tpu_custom_call.1} parent=0
    _
  %s8 = ssub.s32 1, %s6
  %s9 = scalar_select 0, %s8, %s6
  $region1: #{tpu_custom_call.1} parent=0
    #allocation2 [shape = 'u8[16384]{0}', space=vmem, size = 0x4000, scoped, tag = 'input window, operand 0, single buffered']
    #allocation3 [shape = 's32[1]{0}', space=sflag, size = 0x4, scoped, tag = 'scoped memory for tpu_custom_call.1']
    #allocation4 [shape = 's32[1]{0}', space=sflag, size = 0x4, scoped, tag = 'scoped memory for tpu_custom_call.1']
    #allocation5 [shape = 's32[1]{0}', space=sflag, size = 0x4, scoped, tag = 'scoped memory for tpu_custom_call.1']
    #allocation6 [shape = 'u8[512]{0}', space=smem, size = 0x200, scoped, tag = 'input window, operand 1, single buffered']
    #allocation7 [shape = 'u8[512]{0}', space=smem, size = 0x200, scoped, tag = 'input window, operand 2, single buffered']
    #allocation8 [shape = 's32[1]{0}', space=sflag, size = 0x4, scoped, tag = 'scoped memory for tpu_custom_call.1']
    #allocation9 [shape = 'u8[1024]{0}', space=smem, size = 0x400, scoped, tag = 'input window, operand 3, single buffered']
    #allocation10 [shape = 'u8[512]{0}', space=smem, size = 0x200, scoped, tag = 'input window, operand 4, single buffered']
    #allocation11 [shape = 's32[1]{0}', space=sflag, size = 0x4, scoped, tag = 'scoped memory for tpu_custom_call.1']
    %10 = vsyncpa [#allocation3], 0
    %11 = vsyncpa [#allocation4], 0
    %12 = vsyncpa [#allocation8], 0
    %13 = vsyncpa [#allocation5], 0
    %14 = vsyncpa [#allocation11], 0
    // Predicated region
    $region2: #{tpu_custom_call.1} parent=1 // pred_check
      _
    $region3: #{tpu_custom_call.1} parent=1 // pred_check_branch
      %16 = sbr.rel (0) target = $region5
    $region4: #{tpu_custom_call.1} parent=1 // pred_region
      %18 = vsyncadd [#allocation3], 0
      %s19 = sshll.u32 %s0, 4
      %s20 = int_to_ptr.hbm [resolvable:$true] %s19
      %s21 = sshll.u32 [#allocation2], 4
      %s22 = int_to_ptr.vmem [resolvable:$true] %s21
      %27 = dma.hbm_to_vmem [thread:$0]  %s20, 512, %s22, [#allocation3], 256, 256, 16
    $region5: #{tpu_custom_call.1} parent=1 // pred_fallthru
      _
    // Predicated region
    $region6: #{tpu_custom_call.1} parent=1 // pred_check
      _
    $region7: #{tpu_custom_call.1} parent=1 // pred_check_branch
      %29 = sbr.rel (0) target = $region9
    $region8: #{tpu_custom_call.1} parent=1 // pred_region
      %31 = vsyncadd [#allocation4], 0
      %s33 = sshll.u32 %s1, 4
      %s34 = int_to_ptr.hbm [resolvable:$true] %s33
      %36 = dma.hbm_to_smem %s34, 16, [#allocation6], [#allocation4]
    $region9: #{tpu_custom_call.1} parent=1 // pred_fallthru
      _
    // Predicated region
    $region10: #{tpu_custom_call.1} parent=1 // pred_check
      _
    $region11: #{tpu_custom_call.1} parent=1 // pred_check_branch
      %38 = sbr.rel (0) target = $region13
    $region12: #{tpu_custom_call.1} parent=1 // pred_region
      %40 = vsyncadd [#allocation8], 0
      %s42 = sshll.u32 %s2, 4
      %s43 = int_to_ptr.hbm [resolvable:$true] %s42
      %45 = dma.hbm_to_smem %s43, 16, [#allocation7], [#allocation8]
    $region13: #{tpu_custom_call.1} parent=1 // pred_fallthru
      _
    // Predicated region
    $region14: #{tpu_custom_call.1} parent=1 // pred_check
      _
    $region15: #{tpu_custom_call.1} parent=1 // pred_check_branch
      %47 = sbr.rel (0) target = $region17
    $region16: #{tpu_custom_call.1} parent=1 // pred_region
      %49 = vsyncadd [#allocation5], 0
      %s51 = sshll.u32 %s3, 4
      %s52 = int_to_ptr.vmem [resolvable:$true] %s51
      %54 = dma.vmem_to_smem %s52, 32, [#allocation9], [#allocation5]
    $region17: #{tpu_custom_call.1} parent=1 // pred_fallthru
      _
    // Predicated region
    $region18: #{tpu_custom_call.1} parent=1 // pred_check
      _
    $region19: #{tpu_custom_call.1} parent=1 // pred_check_branch
      %56 = sbr.rel (0) target = $region21
    $region20: #{tpu_custom_call.1} parent=1 // pred_region
      %58 = vsyncadd [#allocation11], 0
      %s60 = sshll.u32 %s4, 4
      %s61 = int_to_ptr.vmem [resolvable:$true] %s60
      %63 = dma.vmem_to_smem %s61, 16, [#allocation10], [#allocation11]
    $region21: #{tpu_custom_call.1} parent=1 // pred_fallthru
      _
    // Predicated region
    $region22: #{tpu_custom_call.1} parent=1 // pred_check
      _
    $region23: #{tpu_custom_call.1} parent=1 // pred_check_branch
      %65 = sbr.rel (0) target = $region25
    $region24: #{tpu_custom_call.1} parent=1 // pred_region
      %67 = dma.done [#allocation3], 512
    $region25: #{tpu_custom_call.1} parent=1 // pred_fallthru
      _
    // Predicated region
    $region26: #{tpu_custom_call.1} parent=1 // pred_check
      _
    $region27: #{tpu_custom_call.1} parent=1 // pred_check_branch
      %69 = sbr.rel (0) target = $region29
    $region28: #{tpu_custom_call.1} parent=1 // pred_region
      %71 = dma.done [#allocation4], 16
    $region29: #{tpu_custom_call.1} parent=1 // pred_fallthru
      _
    // Predicated region
    $region30: #{tpu_custom_call.1} parent=1 // pred_check
      _
    $region31: #{tpu_custom_call.1} parent=1 // pred_check_branch
      %73 = sbr.rel (0) target = $region33
    $region32: #{tpu_custom_call.1} parent=1 // pred_region
      %75 = dma.done [#allocation8], 16
    $region33: #{tpu_custom_call.1} parent=1 // pred_fallthru
      _
    // Predicated region
    $region34: #{tpu_custom_call.1} parent=1 // pred_check
      _
    $region35: #{tpu_custom_call.1} parent=1 // pred_check_branch
      %77 = sbr.rel (0) target = $region37
    $region36: #{tpu_custom_call.1} parent=1 // pred_region
      %79 = dma.done [#allocation5], 32
    $region37: #{tpu_custom_call.1} parent=1 // pred_fallthru
      _
    // Predicated region
    $region38: #{tpu_custom_call.1} parent=1 // pred_check
      _
    $region39: #{tpu_custom_call.1} parent=1 // pred_check_branch
      %81 = sbr.rel (0) target = $region41
    $region40: #{tpu_custom_call.1} parent=1 // pred_region
      %83 = dma.done [#allocation11], 16
    $region41: #{tpu_custom_call.1} parent=1 // pred_fallthru
      _
    %84 = sfence
    %v85 = vld [vmem:[#allocation2] sm:$0xff]
    %v86 = vld [vmem:[#allocation2 + $0x8] sm:$0xff]
    %v87 = vld [vmem:[#allocation2 + $0x10] sm:$0xff]
    %v88 = vld [vmem:[#allocation2 + $0x18] sm:$0xff]
    %s89 = sld [smem:[#allocation6]]
    %v90 = vstv %s89
    %v91 = vmul.f32 %v90, %v85
    %v92 = vmul.f32 %v90, %v86
    %v93 = vmul.f32 %v90, %v87
    %v94 = vmul.f32 %v90, %v88
    %v95 = vadd.f32 %v91, 0.0
    %v96 = vadd.f32 %v92, 0.0
    %v97 = vadd.f32 %v93, 0.0
    %v98 = vadd.f32 %v94, 0.0
    %s99 = sld [smem:[#allocation6 + $0x1]]
    %v100 = vstv %s99
    %v101 = vmul.f32 %v100, %v85
    %v102 = vmul.f32 %v100, %v86
    %v103 = vmul.f32 %v100, %v87
    %v104 = vmul.f32 %v100, %v88
    %v105 = vadd.f32 %v101, 0.0
    %v106 = vadd.f32 %v102, 0.0
    %v107 = vadd.f32 %v103, 0.0
    %v108 = vadd.f32 %v104, 0.0
    %s109 = sld [smem:[#allocation6 + $0x2]]
    %v110 = vstv %s109
    %v111 = vmul.f32 %v110, %v85
    %v112 = vmul.f32 %v110, %v86
    %v113 = vmul.f32 %v110, %v87
    %v114 = vmul.f32 %v110, %v88
    %v115 = vadd.f32 %v111, 0.0
    %v116 = vadd.f32 %v112, 0.0
    %v117 = vadd.f32 %v113, 0.0
    %v118 = vadd.f32 %v114, 0.0
    %s119 = sld [smem:[#allocation6 + $0x3]]
    %v120 = vstv %s119
    %v121 = vmul.f32 %v120, %v85
    %v122 = vmul.f32 %v120, %v86
    %v123 = vmul.f32 %v120, %v87
    %v124 = vmul.f32 %v120, %v88
    %v125 = vadd.f32 %v121, 0.0
    %v126 = vadd.f32 %v122, 0.0
    %v127 = vadd.f32 %v123, 0.0
    %v128 = vadd.f32 %v124, 0.0
    %s129 = sld [smem:[#allocation6 + $0x4]]
    %v130 = vstv %s129
    %v131 = vmul.f32 %v130, %v85
    %v132 = vmul.f32 %v130, %v86
    %v133 = vmul.f32 %v130, %v87
    %v134 = vmul.f32 %v130, %v88
    %139 = vrot.lane.b32.xlu0 %v131, 127
    %v140 = vpop.permute.xlu0 %139
    %141 = vrot.lane.b32.xlu0 %v132, 127
    %v142 = vpop.permute.xlu0 %141
    %143 = vrot.lane.b32.xlu0 %v133, 127
    %v144 = vpop.permute.xlu0 %143
    %145 = vrot.lane.b32.xlu0 %v134, 127
    %v146 = vpop.permute.xlu0 %145
    %vm147 = vcmask 1039360
    %v148 = vsel %vm147, %v140, %v142
    %v149 = vsel %vm147, %v144, %v146
    %v154 = vadd.f32 %v95, %v148
    %v155 = vadd.f32 %v96, %v142
    %v156 = vadd.f32 %v97, %v149
    %v157 = vadd.f32 %v98, %v146
    %s158 = sld [smem:[#allocation6 + $0x5]]
    %v159 = vstv %s158
    %v160 = vmul.f32 %v159, %v85
    %v161 = vmul.f32 %v159, %v86
    %v162 = vmul.f32 %v159, %v87
    %v163 = vmul.f32 %v159, %v88
    %168 = vrot.lane.b32.xlu0 %v160, 127
    %v169 = vpop.permute.xlu0 %168
    %170 = vrot.lane.b32.xlu0 %v161, 127
    %v171 = vpop.permute.xlu0 %170
    %172 = vrot.lane.b32.xlu0 %v162, 127
    %v173 = vpop.permute.xlu0 %172
    %174 = vrot.lane.b32.xlu0 %v163, 127
    %v175 = vpop.permute.xlu0 %174
    %v176 = vsel %vm147, %v169, %v171
    %v177 = vsel %vm147, %v173, %v175
    %v182 = vadd.f32 %v105, %v176
    %v183 = vadd.f32 %v106, %v171
    %v184 = vadd.f32 %v107, %v177
    %v185 = vadd.f32 %v108, %v175
    %s186 = sld [smem:[#allocation6 + $0x6]]
    %v187 = vstv %s186
    %v188 = vmul.f32 %v187, %v85
    %v189 = vmul.f32 %v187, %v86
    %v190 = vmul.f32 %v187, %v87
    %v191 = vmul.f32 %v187, %v88
    %196 = vrot.lane.b32.xlu0 %v188, 127
    %v197 = vpop.permute.xlu0 %196
    %198 = vrot.lane.b32.xlu0 %v189, 127
    %v199 = vpop.permute.xlu0 %198
    %200 = vrot.lane.b32.xlu0 %v190, 127
    %v201 = vpop.permute.xlu0 %200
    %202 = vrot.lane.b32.xlu0 %v191, 127
    %v203 = vpop.permute.xlu0 %202
    %v204 = vsel %vm147, %v197, %v199
    %v205 = vsel %vm147, %v201, %v203
    %v210 = vadd.f32 %v115, %v204
    %v211 = vadd.f32 %v116, %v199
    %v212 = vadd.f32 %v117, %v205
    %v213 = vadd.f32 %v118, %v203
    %s214 = sld [smem:[#allocation6 + $0x7]]
    %v215 = vstv %s214
    %v216 = vmul.f32 %v215, %v85
    %v217 = vmul.f32 %v215, %v86
    %v218 = vmul.f32 %v215, %v87
    %v219 = vmul.f32 %v215, %v88
    %224 = vrot.lane.b32.xlu0 %v216, 127
    %v225 = vpop.permute.xlu0 %224
    %226 = vrot.lane.b32.xlu0 %v217, 127
    %v227 = vpop.permute.xlu0 %226
    %228 = vrot.lane.b32.xlu0 %v218, 127
    %v229 = vpop.permute.xlu0 %228
    %230 = vrot.lane.b32.xlu0 %v219, 127
    %v231 = vpop.permute.xlu0 %230
    %v232 = vsel %vm147, %v225, %v227
    %v233 = vsel %vm147, %v229, %v231
    %v238 = vadd.f32 %v125, %v232
    %v239 = vadd.f32 %v126, %v227
    %v240 = vadd.f32 %v127, %v233
    %v241 = vadd.f32 %v128, %v231
    %s242 = sld [smem:[#allocation6 + $0x8]]
    %v243 = vstv %s242
    %v244 = vmul.f32 %v243, %v85
    %v245 = vmul.f32 %v243, %v86
    %v246 = vmul.f32 %v243, %v87
    %v247 = vmul.f32 %v243, %v88
    %252 = vrot.lane.b32.xlu0 %v244, 126
    %v253 = vpop.permute.xlu0 %252
    %254 = vrot.lane.b32.xlu0 %v245, 126
    %v255 = vpop.permute.xlu0 %254
    %256 = vrot.lane.b32.xlu0 %v246, 126
    %v257 = vpop.permute.xlu0 %256
    %258 = vrot.lane.b32.xlu0 %v247, 126
    %v259 = vpop.permute.xlu0 %258
    %vm260 = vcmask 1031168
    %v261 = vsel %vm260, %v253, %v255
    %v262 = vsel %vm260, %v257, %v259
    %v267 = vadd.f32 %v154, %v261
    %v268 = vadd.f32 %v155, %v255
    %v269 = vadd.f32 %v156, %v262
    %v270 = vadd.f32 %v157, %v259
    %s271 = sld [smem:[#allocation6 + $0x9]]
    %v272 = vstv %s271
    %v273 = vmul.f32 %v272, %v85
    %v274 = vmul.f32 %v272, %v86
    %v275 = vmul.f32 %v272, %v87
    %v276 = vmul.f32 %v272, %v88
    %281 = vrot.lane.b32.xlu0 %v273, 126
    %v282 = vpop.permute.xlu0 %281
    %283 = vrot.lane.b32.xlu0 %v274, 126
    %v284 = vpop.permute.xlu0 %283
    %285 = vrot.lane.b32.xlu0 %v275, 126
    %v286 = vpop.permute.xlu0 %285
    %287 = vrot.lane.b32.xlu0 %v276, 126
    %v288 = vpop.permute.xlu0 %287
    %v289 = vsel %vm260, %v282, %v284
    %v290 = vsel %vm260, %v286, %v288
    %v295 = vadd.f32 %v182, %v289
    %v296 = vadd.f32 %v183, %v284
    %v297 = vadd.f32 %v184, %v290
    %v298 = vadd.f32 %v185, %v288
    %s299 = sld [smem:[#allocation6 + $0xa]]
    %v300 = vstv %s299
    %v301 = vmul.f32 %v300, %v85
    %v302 = vmul.f32 %v300, %v86
    %v303 = vmul.f32 %v300, %v87
    %v304 = vmul.f32 %v300, %v88
    %309 = vrot.lane.b32.xlu0 %v301, 126
    %v310 = vpop.permute.xlu0 %309
    %311 = vrot.lane.b32.xlu0 %v302, 126
    %v312 = vpop.permute.xlu0 %311
    %313 = vrot.lane.b32.xlu0 %v303, 126
    %v314 = vpop.permute.xlu0 %313
    %315 = vrot.lane.b32.xlu0 %v304, 126
    %v316 = vpop.permute.xlu0 %315
    %v317 = vsel %vm260, %v310, %v312
    %v318 = vsel %vm260, %v314, %v316
    %v323 = vadd.f32 %v210, %v317
    %v324 = vadd.f32 %v211, %v312
    %v325 = vadd.f32 %v212, %v318
    %v326 = vadd.f32 %v213, %v316
    %s327 = sld [smem:[#allocation6 + $0xb]]
    %v328 = vstv %s327
    %v329 = vmul.f32 %v328, %v85
    %v330 = vmul.f32 %v328, %v86
    %v331 = vmul.f32 %v328, %v87
    %v332 = vmul.f32 %v328, %v88
    %337 = vrot.lane.b32.xlu0 %v329, 126
    %v338 = vpop.permute.xlu0 %337
    %339 = vrot.lane.b32.xlu0 %v330, 126
    %v340 = vpop.permute.xlu0 %339
    %341 = vrot.lane.b32.xlu0 %v331, 126
    %v342 = vpop.permute.xlu0 %341
    %343 = vrot.lane.b32.xlu0 %v332, 126
    %v344 = vpop.permute.xlu0 %343
    %v345 = vsel %vm260, %v338, %v340
    %v346 = vsel %vm260, %v342, %v344
    %v351 = vadd.f32 %v238, %v345
    %v352 = vadd.f32 %v239, %v340
    %v353 = vadd.f32 %v240, %v346
    %v354 = vadd.f32 %v241, %v344
    %s355 = sld [smem:[#allocation6 + $0xc]]
    %v356 = vstv %s355
    %v357 = vmul.f32 %v356, %v85
    %v358 = vmul.f32 %v356, %v86
    %v359 = vmul.f32 %v356, %v87
    %v360 = vmul.f32 %v356, %v88
    %vm365 = vcmask 1046528
    %v366 = vrot.slane %v357, 1
    %v367 = vrot.slane %v359, 1
    %v368 = vsel %vm365, %v366, %v367
    %v369 = vrot.slane %v358, 1
    %v370 = vrot.slane %v360, 1
    %v371 = vsel %vm365, %v369, %v370
    %v376 = vadd.f32 %v267, %v368
    %v377 = vadd.f32 %v268, %v371
    %v378 = vadd.f32 %v269, %v367
    %v379 = vadd.f32 %v270, %v370
    %s380 = sld [smem:[#allocation6 + $0xd]]
    %v381 = vstv %s380
    %v382 = vmul.f32 %v381, %v85
    %v383 = vmul.f32 %v381, %v86
    %v384 = vmul.f32 %v381, %v87
    %v385 = vmul.f32 %v381, %v88
    %v390 = vrot.slane %v382, 1
    %v391 = vrot.slane %v384, 1
    %v392 = vsel %vm365, %v390, %v391
    %v393 = vrot.slane %v383, 1
    %v394 = vrot.slane %v385, 1
    %v395 = vsel %vm365, %v393, %v394
    %v400 = vadd.f32 %v295, %v392
    %v401 = vadd.f32 %v296, %v395
    %v402 = vadd.f32 %v297, %v391
    %v403 = vadd.f32 %v298, %v394
    %s404 = sld [smem:[#allocation6 + $0xe]]
    %v405 = vstv %s404
    %v406 = vmul.f32 %v405, %v85
    %v407 = vmul.f32 %v405, %v86
    %v408 = vmul.f32 %v405, %v87
    %v409 = vmul.f32 %v405, %v88
    %v414 = vrot.slane %v406, 1
    %v415 = vrot.slane %v408, 1
    %v416 = vsel %vm365, %v414, %v415
    %v417 = vrot.slane %v407, 1
    %v418 = vrot.slane %v409, 1
    %v419 = vsel %vm365, %v417, %v418
    %v424 = vadd.f32 %v323, %v416
    %v425 = vadd.f32 %v324, %v419
    %v426 = vadd.f32 %v325, %v415
    %v427 = vadd.f32 %v326, %v418
    %s428 = sld [smem:[#allocation6 + $0xf]]
    %v429 = vstv %s428
    %v430 = vmul.f32 %v429, %v85
    %v431 = vmul.f32 %v429, %v86
    %v432 = vmul.f32 %v429, %v87
    %v433 = vmul.f32 %v429, %v88
    %v438 = vrot.slane %v430, 1
    %v439 = vrot.slane %v432, 1
    %v440 = vsel %vm365, %v438, %v439
    %v441 = vrot.slane %v431, 1
    %v442 = vrot.slane %v433, 1
    %v443 = vsel %vm365, %v441, %v442
    %v448 = vadd.f32 %v351, %v440
    %v449 = vadd.f32 %v352, %v443
    %v450 = vadd.f32 %v353, %v439
    %v451 = vadd.f32 %v354, %v442
    %s452 = sld [smem:[#allocation6 + $0x10]]
    %v453 = vstv %s452
    %v454 = vmul.f32 %v453, %v85
    %v455 = vmul.f32 %v453, %v86
    %v456 = vmul.f32 %v453, %v87
    %v457 = vmul.f32 %v453, %v88
    %v462 = vrot.slane %v454, 1
    %v463 = vrot.slane %v456, 1
    %v464 = vsel %vm365, %v462, %v463
    %v465 = vrot.slane %v455, 1
    %v466 = vrot.slane %v457, 1
    %v467 = vsel %vm365, %v465, %v466
    %468 = vrot.lane.b32.xlu0 %v464, 127
    %v469 = vpop.permute.xlu0 %468
    %470 = vrot.lane.b32.xlu0 %v467, 127
    %v471 = vpop.permute.xlu0 %470
    %472 = vrot.lane.b32.xlu0 %v463, 127
    %v473 = vpop.permute.xlu0 %472
    %474 = vrot.lane.b32.xlu0 %v466, 127
    %v475 = vpop.permute.xlu0 %474
    %v476 = vsel %vm147, %v469, %v471
    %v477 = vsel %vm147, %v473, %v475
    %v482 = vadd.f32 %v376, %v476
    %v483 = vadd.f32 %v377, %v471
    %v484 = vadd.f32 %v378, %v477
    %v485 = vadd.f32 %v379, %v475
    %s486 = sld [smem:[#allocation6 + $0x11]]
    %v487 = vstv %s486
    %v488 = vmul.f32 %v487, %v85
    %v489 = vmul.f32 %v487, %v86
    %v490 = vmul.f32 %v487, %v87
    %v491 = vmul.f32 %v487, %v88
    %v496 = vrot.slane %v488, 1
    %v497 = vrot.slane %v490, 1
    %v498 = vsel %vm365, %v496, %v497
    %v499 = vrot.slane %v489, 1
    %v500 = vrot.slane %v491, 1
    %v501 = vsel %vm365, %v499, %v500
    %502 = vrot.lane.b32.xlu0 %v498, 127
    %v503 = vpop.permute.xlu0 %502
    %504 = vrot.lane.b32.xlu0 %v501, 127
    %v505 = vpop.permute.xlu0 %504
    %506 = vrot.lane.b32.xlu0 %v497, 127
    %v507 = vpop.permute.xlu0 %506
    %508 = vrot.lane.b32.xlu0 %v500, 127
    %v509 = vpop.permute.xlu0 %508
    %v510 = vsel %vm147, %v503, %v505
    %v511 = vsel %vm147, %v507, %v509
    %v516 = vadd.f32 %v400, %v510
    %v517 = vadd.f32 %v401, %v505
    %v518 = vadd.f32 %v402, %v511
    %v519 = vadd.f32 %v403, %v509
    %s520 = sld [smem:[#allocation6 + $0x12]]
    %v521 = vstv %s520
    %v522 = vmul.f32 %v521, %v85
    %v523 = vmul.f32 %v521, %v86
    %v524 = vmul.f32 %v521, %v87
    %v525 = vmul.f32 %v521, %v88
    %v530 = vrot.slane %v522, 1
    %v531 = vrot.slane %v524, 1
    %v532 = vsel %vm365, %v530, %v531
    %v533 = vrot.slane %v523, 1
    %v534 = vrot.slane %v525, 1
    %v535 = vsel %vm365, %v533, %v534
    %536 = vrot.lane.b32.xlu0 %v532, 127
    %v537 = vpop.permute.xlu0 %536
    %538 = vrot.lane.b32.xlu0 %v535, 127
    %v539 = vpop.permute.xlu0 %538
    %540 = vrot.lane.b32.xlu0 %v531, 127
    %v541 = vpop.permute.xlu0 %540
    %542 = vrot.lane.b32.xlu0 %v534, 127
    %v543 = vpop.permute.xlu0 %542
    %v544 = vsel %vm147, %v537, %v539
    %v545 = vsel %vm147, %v541, %v543
    %v550 = vadd.f32 %v424, %v544
    %v551 = vadd.f32 %v425, %v539
    %v552 = vadd.f32 %v426, %v545
    %v553 = vadd.f32 %v427, %v543
    %s554 = sld [smem:[#allocation6 + $0x13]]
    %v555 = vstv %s554
    %v556 = vmul.f32 %v555, %v85
    %v557 = vmul.f32 %v555, %v86
    %v558 = vmul.f32 %v555, %v87
    %v559 = vmul.f32 %v555, %v88
    %v564 = vrot.slane %v556, 1
    %v565 = vrot.slane %v558, 1
    %v566 = vsel %vm365, %v564, %v565
    %v567 = vrot.slane %v557, 1
    %v568 = vrot.slane %v559, 1
    %v569 = vsel %vm365, %v567, %v568
    %570 = vrot.lane.b32.xlu0 %v566, 127
    %v571 = vpop.permute.xlu0 %570
    %572 = vrot.lane.b32.xlu0 %v569, 127
    %v573 = vpop.permute.xlu0 %572
    %574 = vrot.lane.b32.xlu0 %v565, 127
    %v575 = vpop.permute.xlu0 %574
    %576 = vrot.lane.b32.xlu0 %v568, 127
    %v577 = vpop.permute.xlu0 %576
    %v578 = vsel %vm147, %v571, %v573
    %v579 = vsel %vm147, %v575, %v577
    %v584 = vadd.f32 %v448, %v578
    %v585 = vadd.f32 %v449, %v573
    %v586 = vadd.f32 %v450, %v579
    %v587 = vadd.f32 %v451, %v577
    %s588 = sld [smem:[#allocation6 + $0x14]]
    %v589 = vstv %s588
    %v590 = vmul.f32 %v589, %v85
    %v591 = vmul.f32 %v589, %v86
    %v592 = vmul.f32 %v589, %v87
    %v593 = vmul.f32 %v589, %v88
    %v598 = vrot.slane %v590, 1
    %v599 = vrot.slane %v592, 1
    %v600 = vsel %vm365, %v598, %v599
    %v601 = vrot.slane %v591, 1
    %v602 = vrot.slane %v593, 1
    %v603 = vsel %vm365, %v601, %v602
    %604 = vrot.lane.b32.xlu0 %v600, 126
    %v605 = vpop.permute.xlu0 %604
    %606 = vrot.lane.b32.xlu0 %v603, 126
    %v607 = vpop.permute.xlu0 %606
    %608 = vrot.lane.b32.xlu0 %v599, 126
    %v609 = vpop.permute.xlu0 %608
    %610 = vrot.lane.b32.xlu0 %v602, 126
    %v611 = vpop.permute.xlu0 %610
    %v612 = vsel %vm260, %v605, %v607
    %v613 = vsel %vm260, %v609, %v611
    %v618 = vadd.f32 %v482, %v612
    %v619 = vadd.f32 %v483, %v607
    %v620 = vadd.f32 %v484, %v613
    %v621 = vadd.f32 %v485, %v611
    %s622 = sld [smem:[#allocation6 + $0x15]]
    %v623 = vstv %s622
    %v624 = vmul.f32 %v623, %v85
    %v625 = vmul.f32 %v623, %v86
    %v626 = vmul.f32 %v623, %v87
    %v627 = vmul.f32 %v623, %v88
    %v632 = vrot.slane %v624, 1
    %v633 = vrot.slane %v626, 1
    %v634 = vsel %vm365, %v632, %v633
    %v635 = vrot.slane %v625, 1
    %v636 = vrot.slane %v627, 1
    %v637 = vsel %vm365, %v635, %v636
    %638 = vrot.lane.b32.xlu0 %v634, 126
    %v639 = vpop.permute.xlu0 %638
    %640 = vrot.lane.b32.xlu0 %v637, 126
    %v641 = vpop.permute.xlu0 %640
    %642 = vrot.lane.b32.xlu0 %v633, 126
    %v643 = vpop.permute.xlu0 %642
    %644 = vrot.lane.b32.xlu0 %v636, 126
    %v645 = vpop.permute.xlu0 %644
    %v646 = vsel %vm260, %v639, %v641
    %v647 = vsel %vm260, %v643, %v645
    %v652 = vadd.f32 %v516, %v646
    %v653 = vadd.f32 %v517, %v641
    %v654 = vadd.f32 %v518, %v647
    %v655 = vadd.f32 %v519, %v645
    %s656 = sld [smem:[#allocation6 + $0x16]]
    %v657 = vstv %s656
    %v658 = vmul.f32 %v657, %v85
    %v659 = vmul.f32 %v657, %v86
    %v660 = vmul.f32 %v657, %v87
    %v661 = vmul.f32 %v657, %v88
    %v666 = vrot.slane %v658, 1
    %v667 = vrot.slane %v660, 1
    %v668 = vsel %vm365, %v666, %v667
    %v669 = vrot.slane %v659, 1
    %v670 = vrot.slane %v661, 1
    %v671 = vsel %vm365, %v669, %v670
    %672 = vrot.lane.b32.xlu0 %v668, 126
    %v673 = vpop.permute.xlu0 %672
    %674 = vrot.lane.b32.xlu0 %v671, 126
    %v675 = vpop.permute.xlu0 %674
    %676 = vrot.lane.b32.xlu0 %v667, 126
    %v677 = vpop.permute.xlu0 %676
    %678 = vrot.lane.b32.xlu0 %v670, 126
    %v679 = vpop.permute.xlu0 %678
    %v680 = vsel %vm260, %v673, %v675
    %v681 = vsel %vm260, %v677, %v679
    %v686 = vadd.f32 %v550, %v680
    %v687 = vadd.f32 %v551, %v675
    %v688 = vadd.f32 %v552, %v681
    %v689 = vadd.f32 %v553, %v679
    %s690 = sld [smem:[#allocation6 + $0x17]]
    %v691 = vstv %s690
    %v692 = vmul.f32 %v691, %v85
    %v693 = vmul.f32 %v691, %v86
    %v694 = vmul.f32 %v691, %v87
    %v695 = vmul.f32 %v691, %v88
    %v700 = vrot.slane %v692, 1
    %v701 = vrot.slane %v694, 1
    %v702 = vsel %vm365, %v700, %v701
    %v703 = vrot.slane %v693, 1
    %v704 = vrot.slane %v695, 1
    %v705 = vsel %vm365, %v703, %v704
    %706 = vrot.lane.b32.xlu0 %v702, 126
    %v707 = vpop.permute.xlu0 %706
    %708 = vrot.lane.b32.xlu0 %v705, 126
    %v709 = vpop.permute.xlu0 %708
    %710 = vrot.lane.b32.xlu0 %v701, 126
    %v711 = vpop.permute.xlu0 %710
    %712 = vrot.lane.b32.xlu0 %v704, 126
    %v713 = vpop.permute.xlu0 %712
    %v714 = vsel %vm260, %v707, %v709
    %v715 = vsel %vm260, %v711, %v713
    %v720 = vadd.f32 %v584, %v714
    %v721 = vadd.f32 %v585, %v709
    %v722 = vadd.f32 %v586, %v715
    %v723 = vadd.f32 %v587, %v713
    %s724 = sld [smem:[#allocation6 + $0x18]]
    %v725 = vstv %s724
    %v726 = vmul.f32 %v725, %v85
    %v727 = vmul.f32 %v725, %v86
    %v728 = vmul.f32 %v725, %v87
    %v729 = vmul.f32 %v725, %v88
    %vm734 = vcmask 1045504
    %v735 = vrot.slane %v726, 2
    %v736 = vrot.slane %v728, 2
    %v737 = vsel %vm734, %v735, %v736
    %v738 = vrot.slane %v727, 2
    %v739 = vrot.slane %v729, 2
    %v740 = vsel %vm734, %v738, %v739
    %v745 = vadd.f32 %v618, %v737
    %v746 = vadd.f32 %v619, %v740
    %v747 = vadd.f32 %v620, %v736
    %v748 = vadd.f32 %v621, %v739
    %s749 = sld [smem:[#allocation6 + $0x19]]
    %v750 = vstv %s749
    %v751 = vmul.f32 %v750, %v85
    %v752 = vmul.f32 %v750, %v86
    %v753 = vmul.f32 %v750, %v87
    %v754 = vmul.f32 %v750, %v88
    %v759 = vrot.slane %v751, 2
    %v760 = vrot.slane %v753, 2
    %v761 = vsel %vm734, %v759, %v760
    %v762 = vrot.slane %v752, 2
    %v763 = vrot.slane %v754, 2
    %v764 = vsel %vm734, %v762, %v763
    %v769 = vadd.f32 %v652, %v761
    %v770 = vadd.f32 %v653, %v764
    %v771 = vadd.f32 %v654, %v760
    %v772 = vadd.f32 %v655, %v763
    %s773 = sld [smem:[#allocation6 + $0x1a]]
    %v774 = vstv %s773
    %v775 = vmul.f32 %v774, %v85
    %v776 = vmul.f32 %v774, %v86
    %v777 = vmul.f32 %v774, %v87
    %v778 = vmul.f32 %v774, %v88
    %v783 = vrot.slane %v775, 2
    %v784 = vrot.slane %v777, 2
    %v785 = vsel %vm734, %v783, %v784
    %v786 = vrot.slane %v776, 2
    %v787 = vrot.slane %v778, 2
    %v788 = vsel %vm734, %v786, %v787
    %v793 = vadd.f32 %v686, %v785
    %v794 = vadd.f32 %v687, %v788
    %v795 = vadd.f32 %v688, %v784
    %v796 = vadd.f32 %v689, %v787
    %s797 = sld [smem:[#allocation6 + $0x1b]]
    %v798 = vstv %s797
    %v799 = vmul.f32 %v798, %v85
    %v800 = vmul.f32 %v798, %v86
    %v801 = vmul.f32 %v798, %v87
    %v802 = vmul.f32 %v798, %v88
    %v807 = vrot.slane %v799, 2
    %v808 = vrot.slane %v801, 2
    %v809 = vsel %vm734, %v807, %v808
    %v810 = vrot.slane %v800, 2
    %v811 = vrot.slane %v802, 2
    %v812 = vsel %vm734, %v810, %v811
    %v817 = vadd.f32 %v720, %v809
    %v818 = vadd.f32 %v721, %v812
    %v819 = vadd.f32 %v722, %v808
    %v820 = vadd.f32 %v723, %v811
    %s821 = sld [smem:[#allocation6 + $0x1c]]
    %v822 = vstv %s821
    %v823 = vmul.f32 %v822, %v85
    %v824 = vmul.f32 %v822, %v86
    %v825 = vmul.f32 %v822, %v87
    %v826 = vmul.f32 %v822, %v88
    %v831 = vrot.slane %v823, 2
    %v832 = vrot.slane %v825, 2
    %v833 = vsel %vm734, %v831, %v832
    %v834 = vrot.slane %v824, 2
    %v835 = vrot.slane %v826, 2
    %v836 = vsel %vm734, %v834, %v835
    %837 = vrot.lane.b32.xlu0 %v833, 127
    %v838 = vpop.permute.xlu0 %837
    %839 = vrot.lane.b32.xlu0 %v836, 127
    %v840 = vpop.permute.xlu0 %839
    %841 = vrot.lane.b32.xlu0 %v832, 127
    %v842 = vpop.permute.xlu0 %841
    %843 = vrot.lane.b32.xlu0 %v835, 127
    %v844 = vpop.permute.xlu0 %843
    %v845 = vsel %vm147, %v838, %v840
    %v846 = vsel %vm147, %v842, %v844
    %v851 = vadd.f32 %v745, %v845
    %v852 = vadd.f32 %v746, %v840
    %v853 = vadd.f32 %v747, %v846
    %v854 = vadd.f32 %v748, %v844
    %s855 = sld [smem:[#allocation6 + $0x1d]]
    %v856 = vstv %s855
    %v857 = vmul.f32 %v856, %v85
    %v858 = vmul.f32 %v856, %v86
    %v859 = vmul.f32 %v856, %v87
    %v860 = vmul.f32 %v856, %v88
    %v865 = vrot.slane %v857, 2
    %v866 = vrot.slane %v859, 2
    %v867 = vsel %vm734, %v865, %v866
    %v868 = vrot.slane %v858, 2
    %v869 = vrot.slane %v860, 2
    %v870 = vsel %vm734, %v868, %v869
    %871 = vrot.lane.b32.xlu0 %v867, 127
    %v872 = vpop.permute.xlu0 %871
    %873 = vrot.lane.b32.xlu0 %v870, 127
    %v874 = vpop.permute.xlu0 %873
    %875 = vrot.lane.b32.xlu0 %v866, 127
    %v876 = vpop.permute.xlu0 %875
    %877 = vrot.lane.b32.xlu0 %v869, 127
    %v878 = vpop.permute.xlu0 %877
    %v879 = vsel %vm147, %v872, %v874
    %v880 = vsel %vm147, %v876, %v878
    %v885 = vadd.f32 %v769, %v879
    %v886 = vadd.f32 %v770, %v874
    %v887 = vadd.f32 %v771, %v880
    %v888 = vadd.f32 %v772, %v878
    %s889 = sld [smem:[#allocation6 + $0x1e]]
    %v890 = vstv %s889
    %v891 = vmul.f32 %v890, %v85
    %v892 = vmul.f32 %v890, %v86
    %v893 = vmul.f32 %v890, %v87
    %v894 = vmul.f32 %v890, %v88
    %v899 = vrot.slane %v891, 2
    %v900 = vrot.slane %v893, 2
    %v901 = vsel %vm734, %v899, %v900
    %v902 = vrot.slane %v892, 2
    %v903 = vrot.slane %v894, 2
    %v904 = vsel %vm734, %v902, %v903
    %905 = vrot.lane.b32.xlu0 %v901, 127
    %v906 = vpop.permute.xlu0 %905
    %907 = vrot.lane.b32.xlu0 %v904, 127
    %v908 = vpop.permute.xlu0 %907
    %909 = vrot.lane.b32.xlu0 %v900, 127
    %v910 = vpop.permute.xlu0 %909
    %911 = vrot.lane.b32.xlu0 %v903, 127
    %v912 = vpop.permute.xlu0 %911
    %v913 = vsel %vm147, %v906, %v908
    %v914 = vsel %vm147, %v910, %v912
    %v919 = vadd.f32 %v793, %v913
    %v920 = vadd.f32 %v794, %v908
    %v921 = vadd.f32 %v795, %v914
    %v922 = vadd.f32 %v796, %v912
    %s923 = sld [smem:[#allocation6 + $0x1f]]
    %v924 = vstv %s923
    %v925 = vmul.f32 %v924, %v85
    %v926 = vmul.f32 %v924, %v86
    %v927 = vmul.f32 %v924, %v87
    %v928 = vmul.f32 %v924, %v88
    %v933 = vrot.slane %v925, 2
    %v934 = vrot.slane %v927, 2
    %v935 = vsel %vm734, %v933, %v934
    %v936 = vrot.slane %v926, 2
    %v937 = vrot.slane %v928, 2
    %v938 = vsel %vm734, %v936, %v937
    %939 = vrot.lane.b32.xlu0 %v935, 127
    %v940 = vpop.permute.xlu0 %939
    %941 = vrot.lane.b32.xlu0 %v938, 127
    %v942 = vpop.permute.xlu0 %941
    %943 = vrot.lane.b32.xlu0 %v934, 127
    %v944 = vpop.permute.xlu0 %943
    %945 = vrot.lane.b32.xlu0 %v937, 127
    %v946 = vpop.permute.xlu0 %945
    %v947 = vsel %vm147, %v940, %v942
    %v948 = vsel %vm147, %v944, %v946
    %v953 = vadd.f32 %v817, %v947
    %v954 = vadd.f32 %v818, %v942
    %v955 = vadd.f32 %v819, %v948
    %v956 = vadd.f32 %v820, %v946
    %s957 = sld [smem:[#allocation6 + $0x20]]
    %v958 = vstv %s957
    %v959 = vmul.f32 %v958, %v85
    %v960 = vmul.f32 %v958, %v86
    %v961 = vmul.f32 %v958, %v87
    %v962 = vmul.f32 %v958, %v88
    %v967 = vrot.slane %v959, 2
    %v968 = vrot.slane %v961, 2
    %v969 = vsel %vm734, %v967, %v968
    %v970 = vrot.slane %v960, 2
    %v971 = vrot.slane %v962, 2
    %v972 = vsel %vm734, %v970, %v971
    %973 = vrot.lane.b32.xlu0 %v969, 126
    %v974 = vpop.permute.xlu0 %973
    %975 = vrot.lane.b32.xlu0 %v972, 126
    %v976 = vpop.permute.xlu0 %975
    %977 = vrot.lane.b32.xlu0 %v968, 126
    %v978 = vpop.permute.xlu0 %977
    %979 = vrot.lane.b32.xlu0 %v971, 126
    %v980 = vpop.permute.xlu0 %979
    %v981 = vsel %vm260, %v974, %v976
    %v982 = vsel %vm260, %v978, %v980
    %v987 = vadd.f32 %v851, %v981
    %v988 = vadd.f32 %v852, %v976
    %v989 = vadd.f32 %v853, %v982
    %v990 = vadd.f32 %v854, %v980
    %s991 = sld [smem:[#allocation6 + $0x21]]
    %v992 = vstv %s991
    %v993 = vmul.f32 %v992, %v85
    %v994 = vmul.f32 %v992, %v86
    %v995 = vmul.f32 %v992, %v87
    %v996 = vmul.f32 %v992, %v88
    %v1001 = vrot.slane %v993, 2
    %v1002 = vrot.slane %v995, 2
    %v1003 = vsel %vm734, %v1001, %v1002
    %v1004 = vrot.slane %v994, 2
    %v1005 = vrot.slane %v996, 2
    %v1006 = vsel %vm734, %v1004, %v1005
    %1007 = vrot.lane.b32.xlu0 %v1003, 126
    %v1008 = vpop.permute.xlu0 %1007
    %1009 = vrot.lane.b32.xlu0 %v1006, 126
    %v1010 = vpop.permute.xlu0 %1009
    %1011 = vrot.lane.b32.xlu0 %v1002, 126
    %v1012 = vpop.permute.xlu0 %1011
    %1013 = vrot.lane.b32.xlu0 %v1005, 126
    %v1014 = vpop.permute.xlu0 %1013
    %v1015 = vsel %vm260, %v1008, %v1010
    %v1016 = vsel %vm260, %v1012, %v1014
    %v1021 = vadd.f32 %v885, %v1015
    %v1022 = vadd.f32 %v886, %v1010
    %v1023 = vadd.f32 %v887, %v1016
    %v1024 = vadd.f32 %v888, %v1014
    %s1025 = sld [smem:[#allocation6 + $0x22]]
    %v1026 = vstv %s1025
    %v1027 = vmul.f32 %v1026, %v85
    %v1028 = vmul.f32 %v1026, %v86
    %v1029 = vmul.f32 %v1026, %v87
    %v1030 = vmul.f32 %v1026, %v88
    %v1035 = vrot.slane %v1027, 2
    %v1036 = vrot.slane %v1029, 2
    %v1037 = vsel %vm734, %v1035, %v1036
    %v1038 = vrot.slane %v1028, 2
    %v1039 = vrot.slane %v1030, 2
    %v1040 = vsel %vm734, %v1038, %v1039
    %1041 = vrot.lane.b32.xlu0 %v1037, 126
    %v1042 = vpop.permute.xlu0 %1041
    %1043 = vrot.lane.b32.xlu0 %v1040, 126
    %v1044 = vpop.permute.xlu0 %1043
    %1045 = vrot.lane.b32.xlu0 %v1036, 126
    %v1046 = vpop.permute.xlu0 %1045
    %1047 = vrot.lane.b32.xlu0 %v1039, 126
    %v1048 = vpop.permute.xlu0 %1047
    %v1049 = vsel %vm260, %v1042, %v1044
    %v1050 = vsel %vm260, %v1046, %v1048
    %v1055 = vadd.f32 %v919, %v1049
    %v1056 = vadd.f32 %v920, %v1044
    %v1057 = vadd.f32 %v921, %v1050
    %v1058 = vadd.f32 %v922, %v1048
    %s1059 = sld [smem:[#allocation6 + $0x23]]
    %v1060 = vstv %s1059
    %v1061 = vmul.f32 %v1060, %v85
    %v1062 = vmul.f32 %v1060, %v86
    %v1063 = vmul.f32 %v1060, %v87
    %v1064 = vmul.f32 %v1060, %v88
    %v1069 = vrot.slane %v1061, 2
    %v1070 = vrot.slane %v1063, 2
    %v1071 = vsel %vm734, %v1069, %v1070
    %v1072 = vrot.slane %v1062, 2
    %v1073 = vrot.slane %v1064, 2
    %v1074 = vsel %vm734, %v1072, %v1073
    %1075 = vrot.lane.b32.xlu0 %v1071, 126
    %v1076 = vpop.permute.xlu0 %1075
    %1077 = vrot.lane.b32.xlu0 %v1074, 126
    %v1078 = vpop.permute.xlu0 %1077
    %1079 = vrot.lane.b32.xlu0 %v1070, 126
    %v1080 = vpop.permute.xlu0 %1079
    %1081 = vrot.lane.b32.xlu0 %v1073, 126
    %v1082 = vpop.permute.xlu0 %1081
    %v1083 = vsel %vm260, %v1076, %v1078
    %v1084 = vsel %vm260, %v1080, %v1082
    %v1089 = vadd.f32 %v953, %v1083
    %v1090 = vadd.f32 %v954, %v1078
    %v1091 = vadd.f32 %v955, %v1084
    %v1092 = vadd.f32 %v956, %v1082
    %s1093 = sld [smem:[#allocation7]]
    %v1094 = vstv %s1093
    %v1095 = vadd.f32 %v987, %v1094
    %v1096 = vadd.f32 %v988, %v1094
    %v1097 = vadd.f32 %v989, %v1094
    %v1098 = vadd.f32 %v990, %v1094
    %v1099 = vmax.f32 %v1095, 0.0
    %v1100 = vmax.f32 %v1096, 0.0
    %v1101 = vmax.f32 %v1097, 0.0
    %v1102 = vmax.f32 %v1098, 0.0
    %s1103 = sld [smem:[#allocation7 + $0x1]]
    %v1104 = vstv %s1103
    %v1105 = vadd.f32 %v1021, %v1104
    %v1106 = vadd.f32 %v1022, %v1104
    %v1107 = vadd.f32 %v1023, %v1104
    %v1108 = vadd.f32 %v1024, %v1104
    %v1109 = vmax.f32 %v1105, 0.0
    %v1110 = vmax.f32 %v1106, 0.0
    %v1111 = vmax.f32 %v1107, 0.0
    %v1112 = vmax.f32 %v1108, 0.0
    %s1113 = sld [smem:[#allocation7 + $0x2]]
    %v1114 = vstv %s1113
    %v1115 = vadd.f32 %v1055, %v1114
    %v1116 = vadd.f32 %v1056, %v1114
    %v1117 = vadd.f32 %v1057, %v1114
    %v1118 = vadd.f32 %v1058, %v1114
    %v1119 = vmax.f32 %v1115, 0.0
    %v1120 = vmax.f32 %v1116, 0.0
    %v1121 = vmax.f32 %v1117, 0.0
    %v1122 = vmax.f32 %v1118, 0.0
    %s1123 = sld [smem:[#allocation7 + $0x3]]
    %v1124 = vstv %s1123
    %v1125 = vadd.f32 %v1089, %v1124
    %v1126 = vadd.f32 %v1090, %v1124
    %v1127 = vadd.f32 %v1091, %v1124
    %v1128 = vadd.f32 %v1092, %v1124
    %v1129 = vmax.f32 %v1125, 0.0
    %v1130 = vmax.f32 %v1126, 0.0
    %v1131 = vmax.f32 %v1127, 0.0
    %v1132 = vmax.f32 %v1128, 0.0
    %s1133 = sld [smem:[#allocation9]]
    %v1134 = vstv %s1133
    %v1135 = vmul.f32 %v1134, %v1099
    %v1136 = vmul.f32 %v1134, %v1101
    %v1137 = vadd.f32 %v1135, 0.0
    %v1138 = vadd.f32 %v1136, 0.0
    %s1139 = sld [smem:[#allocation9 + $0x1]]
    %v1140 = vstv %s1139
    %v1141 = vmul.f32 %v1140, %v1099
    %v1142 = vmul.f32 %v1140, %v1101
    %v1143 = vadd.f32 %v1141, 0.0
    %v1144 = vadd.f32 %v1142, 0.0
    %s1145 = sld [smem:[#allocation9 + $0x2]]
    %v1146 = vstv %s1145
    %v1147 = vmul.f32 %v1146, %v1099
    %v1148 = vmul.f32 %v1146, %v1101
    %v1149 = vadd.f32 %v1147, 0.0
    %v1150 = vadd.f32 %v1148, 0.0
    %s1151 = sld [smem:[#allocation9 + $0x3]]
    %v1152 = vstv %s1151
    %v1153 = vmul.f32 %v1152, %v1099
    %v1154 = vmul.f32 %v1152, %v1101
    %v1155 = vadd.f32 %v1153, 0.0
    %v1156 = vadd.f32 %v1154, 0.0
    %s1157 = sld [smem:[#allocation9 + $0x10]]
    %v1158 = vstv %s1157
    %v1159 = vmul.f32 %v1158, %v1099
    %v1160 = vmul.f32 %v1158, %v1100
    %v1161 = vmul.f32 %v1158, %v1101
    %v1162 = vmul.f32 %v1158, %v1102
    %1167 = vrot.lane.b32.xlu0 %v1159, 127
    %v1168 = vpop.permute.xlu0 %1167
    %1169 = vrot.lane.b32.xlu0 %v1160, 127
    %v1170 = vpop.permute.xlu0 %1169
    %1171 = vrot.lane.b32.xlu0 %v1161, 127
    %v1172 = vpop.permute.xlu0 %1171
    %1173 = vrot.lane.b32.xlu0 %v1162, 127
    %v1174 = vpop.permute.xlu0 %1173
    %v1175 = vsel %vm147, %v1168, %v1170
    %v1176 = vsel %vm147, %v1172, %v1174
    %v1179 = vadd.f32 %v1137, %v1175
    %v1180 = vadd.f32 %v1138, %v1176
    %s1181 = sld [smem:[#allocation9 + $0x11]]
    %v1182 = vstv %s1181
    %v1183 = vmul.f32 %v1182, %v1099
    %v1184 = vmul.f32 %v1182, %v1100
    %v1185 = vmul.f32 %v1182, %v1101
    %v1186 = vmul.f32 %v1182, %v1102
    %1191 = vrot.lane.b32.xlu0 %v1183, 127
    %v1192 = vpop.permute.xlu0 %1191
    %1193 = vrot.lane.b32.xlu0 %v1184, 127
    %v1194 = vpop.permute.xlu0 %1193
    %1195 = vrot.lane.b32.xlu0 %v1185, 127
    %v1196 = vpop.permute.xlu0 %1195
    %1197 = vrot.lane.b32.xlu0 %v1186, 127
    %v1198 = vpop.permute.xlu0 %1197
    %v1199 = vsel %vm147, %v1192, %v1194
    %v1200 = vsel %vm147, %v1196, %v1198
    %v1203 = vadd.f32 %v1143, %v1199
    %v1204 = vadd.f32 %v1144, %v1200
    %s1205 = sld [smem:[#allocation9 + $0x12]]
    %v1206 = vstv %s1205
    %v1207 = vmul.f32 %v1206, %v1099
    %v1208 = vmul.f32 %v1206, %v1100
    %v1209 = vmul.f32 %v1206, %v1101
    %v1210 = vmul.f32 %v1206, %v1102
    %1215 = vrot.lane.b32.xlu0 %v1207, 127
    %v1216 = vpop.permute.xlu0 %1215
    %1217 = vrot.lane.b32.xlu0 %v1208, 127
    %v1218 = vpop.permute.xlu0 %1217
    %1219 = vrot.lane.b32.xlu0 %v1209, 127
    %v1220 = vpop.permute.xlu0 %1219
    %1221 = vrot.lane.b32.xlu0 %v1210, 127
    %v1222 = vpop.permute.xlu0 %1221
    %v1223 = vsel %vm147, %v1216, %v1218
    %v1224 = vsel %vm147, %v1220, %v1222
    %v1227 = vadd.f32 %v1149, %v1223
    %v1228 = vadd.f32 %v1150, %v1224
    %s1229 = sld [smem:[#allocation9 + $0x13]]
    %v1230 = vstv %s1229
    %v1231 = vmul.f32 %v1230, %v1099
    %v1232 = vmul.f32 %v1230, %v1100
    %v1233 = vmul.f32 %v1230, %v1101
    %v1234 = vmul.f32 %v1230, %v1102
    %1239 = vrot.lane.b32.xlu0 %v1231, 127
    %v1240 = vpop.permute.xlu0 %1239
    %1241 = vrot.lane.b32.xlu0 %v1232, 127
    %v1242 = vpop.permute.xlu0 %1241
    %1243 = vrot.lane.b32.xlu0 %v1233, 127
    %v1244 = vpop.permute.xlu0 %1243
    %1245 = vrot.lane.b32.xlu0 %v1234, 127
    %v1246 = vpop.permute.xlu0 %1245
    %v1247 = vsel %vm147, %v1240, %v1242
    %v1248 = vsel %vm147, %v1244, %v1246
    %v1251 = vadd.f32 %v1155, %v1247
    %v1252 = vadd.f32 %v1156, %v1248
    %s1253 = sld [smem:[#allocation9 + $0x20]]
    %v1254 = vstv %s1253
    %v1255 = vmul.f32 %v1254, %v1099
    %v1256 = vmul.f32 %v1254, %v1100
    %v1257 = vmul.f32 %v1254, %v1101
    %v1258 = vmul.f32 %v1254, %v1102
    %1263 = vrot.lane.b32.xlu0 %v1255, 126
    %v1264 = vpop.permute.xlu0 %1263
    %1265 = vrot.lane.b32.xlu0 %v1256, 126
    %v1266 = vpop.permute.xlu0 %1265
    %1267 = vrot.lane.b32.xlu0 %v1257, 126
    %v1268 = vpop.permute.xlu0 %1267
    %1269 = vrot.lane.b32.xlu0 %v1258, 126
    %v1270 = vpop.permute.xlu0 %1269
    %v1271 = vsel %vm260, %v1264, %v1266
    %v1272 = vsel %vm260, %v1268, %v1270
    %v1275 = vadd.f32 %v1179, %v1271
    %v1276 = vadd.f32 %v1180, %v1272
    %s1277 = sld [smem:[#allocation9 + $0x21]]
    %v1278 = vstv %s1277
    %v1279 = vmul.f32 %v1278, %v1099
    %v1280 = vmul.f32 %v1278, %v1100
    %v1281 = vmul.f32 %v1278, %v1101
    %v1282 = vmul.f32 %v1278, %v1102
    %1287 = vrot.lane.b32.xlu0 %v1279, 126
    %v1288 = vpop.permute.xlu0 %1287
    %1289 = vrot.lane.b32.xlu0 %v1280, 126
    %v1290 = vpop.permute.xlu0 %1289
    %1291 = vrot.lane.b32.xlu0 %v1281, 126
    %v1292 = vpop.permute.xlu0 %1291
    %1293 = vrot.lane.b32.xlu0 %v1282, 126
    %v1294 = vpop.permute.xlu0 %1293
    %v1295 = vsel %vm260, %v1288, %v1290
    %v1296 = vsel %vm260, %v1292, %v1294
    %v1299 = vadd.f32 %v1203, %v1295
    %v1300 = vadd.f32 %v1204, %v1296
    %s1301 = sld [smem:[#allocation9 + $0x22]]
    %v1302 = vstv %s1301
    %v1303 = vmul.f32 %v1302, %v1099
    %v1304 = vmul.f32 %v1302, %v1100
    %v1305 = vmul.f32 %v1302, %v1101
    %v1306 = vmul.f32 %v1302, %v1102
    %1311 = vrot.lane.b32.xlu0 %v1303, 126
    %v1312 = vpop.permute.xlu0 %1311
    %1313 = vrot.lane.b32.xlu0 %v1304, 126
    %v1314 = vpop.permute.xlu0 %1313
    %1315 = vrot.lane.b32.xlu0 %v1305, 126
    %v1316 = vpop.permute.xlu0 %1315
    %1317 = vrot.lane.b32.xlu0 %v1306, 126
    %v1318 = vpop.permute.xlu0 %1317
    %v1319 = vsel %vm260, %v1312, %v1314
    %v1320 = vsel %vm260, %v1316, %v1318
    %v1323 = vadd.f32 %v1227, %v1319
    %v1324 = vadd.f32 %v1228, %v1320
    %s1325 = sld [smem:[#allocation9 + $0x23]]
    %v1326 = vstv %s1325
    %v1327 = vmul.f32 %v1326, %v1099
    %v1328 = vmul.f32 %v1326, %v1100
    %v1329 = vmul.f32 %v1326, %v1101
    %v1330 = vmul.f32 %v1326, %v1102
    %1335 = vrot.lane.b32.xlu0 %v1327, 126
    %v1336 = vpop.permute.xlu0 %1335
    %1337 = vrot.lane.b32.xlu0 %v1328, 126
    %v1338 = vpop.permute.xlu0 %1337
    %1339 = vrot.lane.b32.xlu0 %v1329, 126
    %v1340 = vpop.permute.xlu0 %1339
    %1341 = vrot.lane.b32.xlu0 %v1330, 126
    %v1342 = vpop.permute.xlu0 %1341
    %v1343 = vsel %vm260, %v1336, %v1338
    %v1344 = vsel %vm260, %v1340, %v1342
    %v1347 = vadd.f32 %v1251, %v1343
    %v1348 = vadd.f32 %v1252, %v1344
    %s1349 = sld [smem:[#allocation9 + $0x30]]
    %v1350 = vstv %s1349
    %v1351 = vmul.f32 %v1350, %v1099
    %v1352 = vmul.f32 %v1350, %v1101
    %v1355 = vrot.slane %v1351, 1
    %v1356 = vrot.slane %v1352, 1
    %v1357 = vsel %vm365, %v1355, %v1356
    %v1360 = vadd.f32 %v1275, %v1357
    %v1361 = vadd.f32 %v1276, %v1356
    %s1362 = sld [smem:[#allocation9 + $0x31]]
    %v1363 = vstv %s1362
    %v1364 = vmul.f32 %v1363, %v1099
    %v1365 = vmul.f32 %v1363, %v1101
    %v1368 = vrot.slane %v1364, 1
    %v1369 = vrot.slane %v1365, 1
    %v1370 = vsel %vm365, %v1368, %v1369
    %v1373 = vadd.f32 %v1299, %v1370
    %v1374 = vadd.f32 %v1300, %v1369
    %s1375 = sld [smem:[#allocation9 + $0x32]]
    %v1376 = vstv %s1375
    %v1377 = vmul.f32 %v1376, %v1099
    %v1378 = vmul.f32 %v1376, %v1101
    %v1381 = vrot.slane %v1377, 1
    %v1382 = vrot.slane %v1378, 1
    %v1383 = vsel %vm365, %v1381, %v1382
    %v1386 = vadd.f32 %v1323, %v1383
    %v1387 = vadd.f32 %v1324, %v1382
    %s1388 = sld [smem:[#allocation9 + $0x33]]
    %v1389 = vstv %s1388
    %v1390 = vmul.f32 %v1389, %v1099
    %v1391 = vmul.f32 %v1389, %v1101
    %v1394 = vrot.slane %v1390, 1
    %v1395 = vrot.slane %v1391, 1
    %v1396 = vsel %vm365, %v1394, %v1395
    %v1399 = vadd.f32 %v1347, %v1396
    %v1400 = vadd.f32 %v1348, %v1395
    %s1401 = sld [smem:[#allocation9 + $0x40]]
    %v1402 = vstv %s1401
    %v1403 = vmul.f32 %v1402, %v1099
    %v1404 = vmul.f32 %v1402, %v1100
    %v1405 = vmul.f32 %v1402, %v1101
    %v1406 = vmul.f32 %v1402, %v1102
    %v1411 = vrot.slane %v1403, 1
    %v1412 = vrot.slane %v1405, 1
    %v1413 = vsel %vm365, %v1411, %v1412
    %v1414 = vrot.slane %v1404, 1
    %v1415 = vrot.slane %v1406, 1
    %v1416 = vsel %vm365, %v1414, %v1415
    %1417 = vrot.lane.b32.xlu0 %v1413, 127
    %v1418 = vpop.permute.xlu0 %1417
    %1419 = vrot.lane.b32.xlu0 %v1416, 127
    %v1420 = vpop.permute.xlu0 %1419
    %1421 = vrot.lane.b32.xlu0 %v1412, 127
    %v1422 = vpop.permute.xlu0 %1421
    %1423 = vrot.lane.b32.xlu0 %v1415, 127
    %v1424 = vpop.permute.xlu0 %1423
    %v1425 = vsel %vm147, %v1418, %v1420
    %v1426 = vsel %vm147, %v1422, %v1424
    %v1429 = vadd.f32 %v1360, %v1425
    %v1430 = vadd.f32 %v1361, %v1426
    %s1431 = sld [smem:[#allocation9 + $0x41]]
    %v1432 = vstv %s1431
    %v1433 = vmul.f32 %v1432, %v1099
    %v1434 = vmul.f32 %v1432, %v1100
    %v1435 = vmul.f32 %v1432, %v1101
    %v1436 = vmul.f32 %v1432, %v1102
    %v1441 = vrot.slane %v1433, 1
    %v1442 = vrot.slane %v1435, 1
    %v1443 = vsel %vm365, %v1441, %v1442
    %v1444 = vrot.slane %v1434, 1
    %v1445 = vrot.slane %v1436, 1
    %v1446 = vsel %vm365, %v1444, %v1445
    %1447 = vrot.lane.b32.xlu0 %v1443, 127
    %v1448 = vpop.permute.xlu0 %1447
    %1449 = vrot.lane.b32.xlu0 %v1446, 127
    %v1450 = vpop.permute.xlu0 %1449
    %1451 = vrot.lane.b32.xlu0 %v1442, 127
    %v1452 = vpop.permute.xlu0 %1451
    %1453 = vrot.lane.b32.xlu0 %v1445, 127
    %v1454 = vpop.permute.xlu0 %1453
    %v1455 = vsel %vm147, %v1448, %v1450
    %v1456 = vsel %vm147, %v1452, %v1454
    %v1459 = vadd.f32 %v1373, %v1455
    %v1460 = vadd.f32 %v1374, %v1456
    %s1461 = sld [smem:[#allocation9 + $0x42]]
    %v1462 = vstv %s1461
    %v1463 = vmul.f32 %v1462, %v1099
    %v1464 = vmul.f32 %v1462, %v1100
    %v1465 = vmul.f32 %v1462, %v1101
    %v1466 = vmul.f32 %v1462, %v1102
    %v1471 = vrot.slane %v1463, 1
    %v1472 = vrot.slane %v1465, 1
    %v1473 = vsel %vm365, %v1471, %v1472
    %v1474 = vrot.slane %v1464, 1
    %v1475 = vrot.slane %v1466, 1
    %v1476 = vsel %vm365, %v1474, %v1475
    %1477 = vrot.lane.b32.xlu0 %v1473, 127
    %v1478 = vpop.permute.xlu0 %1477
    %1479 = vrot.lane.b32.xlu0 %v1476, 127
    %v1480 = vpop.permute.xlu0 %1479
    %1481 = vrot.lane.b32.xlu0 %v1472, 127
    %v1482 = vpop.permute.xlu0 %1481
    %1483 = vrot.lane.b32.xlu0 %v1475, 127
    %v1484 = vpop.permute.xlu0 %1483
    %v1485 = vsel %vm147, %v1478, %v1480
    %v1486 = vsel %vm147, %v1482, %v1484
    %v1489 = vadd.f32 %v1386, %v1485
    %v1490 = vadd.f32 %v1387, %v1486
    %s1491 = sld [smem:[#allocation9 + $0x43]]
    %v1492 = vstv %s1491
    %v1493 = vmul.f32 %v1492, %v1099
    %v1494 = vmul.f32 %v1492, %v1100
    %v1495 = vmul.f32 %v1492, %v1101
    %v1496 = vmul.f32 %v1492, %v1102
    %v1501 = vrot.slane %v1493, 1
    %v1502 = vrot.slane %v1495, 1
    %v1503 = vsel %vm365, %v1501, %v1502
    %v1504 = vrot.slane %v1494, 1
    %v1505 = vrot.slane %v1496, 1
    %v1506 = vsel %vm365, %v1504, %v1505
    %1507 = vrot.lane.b32.xlu0 %v1503, 127
    %v1508 = vpop.permute.xlu0 %1507
    %1509 = vrot.lane.b32.xlu0 %v1506, 127
    %v1510 = vpop.permute.xlu0 %1509
    %1511 = vrot.lane.b32.xlu0 %v1502, 127
    %v1512 = vpop.permute.xlu0 %1511
    %1513 = vrot.lane.b32.xlu0 %v1505, 127
    %v1514 = vpop.permute.xlu0 %1513
    %v1515 = vsel %vm147, %v1508, %v1510
    %v1516 = vsel %vm147, %v1512, %v1514
    %v1519 = vadd.f32 %v1399, %v1515
    %v1520 = vadd.f32 %v1400, %v1516
    %s1521 = sld [smem:[#allocation9 + $0x50]]
    %v1522 = vstv %s1521
    %v1523 = vmul.f32 %v1522, %v1099
    %v1524 = vmul.f32 %v1522, %v1100
    %v1525 = vmul.f32 %v1522, %v1101
    %v1526 = vmul.f32 %v1522, %v1102
    %v1531 = vrot.slane %v1523, 1
    %v1532 = vrot.slane %v1525, 1
    %v1533 = vsel %vm365, %v1531, %v1532
    %v1534 = vrot.slane %v1524, 1
    %v1535 = vrot.slane %v1526, 1
    %v1536 = vsel %vm365, %v1534, %v1535
    %1537 = vrot.lane.b32.xlu0 %v1533, 126
    %v1538 = vpop.permute.xlu0 %1537
    %1539 = vrot.lane.b32.xlu0 %v1536, 126
    %v1540 = vpop.permute.xlu0 %1539
    %1541 = vrot.lane.b32.xlu0 %v1532, 126
    %v1542 = vpop.permute.xlu0 %1541
    %1543 = vrot.lane.b32.xlu0 %v1535, 126
    %v1544 = vpop.permute.xlu0 %1543
    %v1545 = vsel %vm260, %v1538, %v1540
    %v1546 = vsel %vm260, %v1542, %v1544
    %v1549 = vadd.f32 %v1429, %v1545
    %v1550 = vadd.f32 %v1430, %v1546
    %s1551 = sld [smem:[#allocation9 + $0x51]]
    %v1552 = vstv %s1551
    %v1553 = vmul.f32 %v1552, %v1099
    %v1554 = vmul.f32 %v1552, %v1100
    %v1555 = vmul.f32 %v1552, %v1101
    %v1556 = vmul.f32 %v1552, %v1102
    %v1561 = vrot.slane %v1553, 1
    %v1562 = vrot.slane %v1555, 1
    %v1563 = vsel %vm365, %v1561, %v1562
    %v1564 = vrot.slane %v1554, 1
    %v1565 = vrot.slane %v1556, 1
    %v1566 = vsel %vm365, %v1564, %v1565
    %1567 = vrot.lane.b32.xlu0 %v1563, 126
    %v1568 = vpop.permute.xlu0 %1567
    %1569 = vrot.lane.b32.xlu0 %v1566, 126
    %v1570 = vpop.permute.xlu0 %1569
    %1571 = vrot.lane.b32.xlu0 %v1562, 126
    %v1572 = vpop.permute.xlu0 %1571
    %1573 = vrot.lane.b32.xlu0 %v1565, 126
    %v1574 = vpop.permute.xlu0 %1573
    %v1575 = vsel %vm260, %v1568, %v1570
    %v1576 = vsel %vm260, %v1572, %v1574
    %v1579 = vadd.f32 %v1459, %v1575
    %v1580 = vadd.f32 %v1460, %v1576
    %s1581 = sld [smem:[#allocation9 + $0x52]]
    %v1582 = vstv %s1581
    %v1583 = vmul.f32 %v1582, %v1099
    %v1584 = vmul.f32 %v1582, %v1100
    %v1585 = vmul.f32 %v1582, %v1101
    %v1586 = vmul.f32 %v1582, %v1102
    %v1591 = vrot.slane %v1583, 1
    %v1592 = vrot.slane %v1585, 1
    %v1593 = vsel %vm365, %v1591, %v1592
    %v1594 = vrot.slane %v1584, 1
    %v1595 = vrot.slane %v1586, 1
    %v1596 = vsel %vm365, %v1594, %v1595
    %1597 = vrot.lane.b32.xlu0 %v1593, 126
    %v1598 = vpop.permute.xlu0 %1597
    %1599 = vrot.lane.b32.xlu0 %v1596, 126
    %v1600 = vpop.permute.xlu0 %1599
    %1601 = vrot.lane.b32.xlu0 %v1592, 126
    %v1602 = vpop.permute.xlu0 %1601
    %1603 = vrot.lane.b32.xlu0 %v1595, 126
    %v1604 = vpop.permute.xlu0 %1603
    %v1605 = vsel %vm260, %v1598, %v1600
    %v1606 = vsel %vm260, %v1602, %v1604
    %v1609 = vadd.f32 %v1489, %v1605
    %v1610 = vadd.f32 %v1490, %v1606
    %s1611 = sld [smem:[#allocation9 + $0x53]]
    %v1612 = vstv %s1611
    %v1613 = vmul.f32 %v1612, %v1099
    %v1614 = vmul.f32 %v1612, %v1100
    %v1615 = vmul.f32 %v1612, %v1101
    %v1616 = vmul.f32 %v1612, %v1102
    %v1621 = vrot.slane %v1613, 1
    %v1622 = vrot.slane %v1615, 1
    %v1623 = vsel %vm365, %v1621, %v1622
    %v1624 = vrot.slane %v1614, 1
    %v1625 = vrot.slane %v1616, 1
    %v1626 = vsel %vm365, %v1624, %v1625
    %1627 = vrot.lane.b32.xlu0 %v1623, 126
    %v1628 = vpop.permute.xlu0 %1627
    %1629 = vrot.lane.b32.xlu0 %v1626, 126
    %v1630 = vpop.permute.xlu0 %1629
    %1631 = vrot.lane.b32.xlu0 %v1622, 126
    %v1632 = vpop.permute.xlu0 %1631
    %1633 = vrot.lane.b32.xlu0 %v1625, 126
    %v1634 = vpop.permute.xlu0 %1633
    %v1635 = vsel %vm260, %v1628, %v1630
    %v1636 = vsel %vm260, %v1632, %v1634
    %v1639 = vadd.f32 %v1519, %v1635
    %v1640 = vadd.f32 %v1520, %v1636
    %s1641 = sld [smem:[#allocation9 + $0x60]]
    %v1642 = vstv %s1641
    %v1643 = vmul.f32 %v1642, %v1099
    %v1644 = vmul.f32 %v1642, %v1101
    %v1647 = vrot.slane %v1643, 2
    %v1648 = vrot.slane %v1644, 2
    %v1649 = vsel %vm734, %v1647, %v1648
    %v1652 = vadd.f32 %v1549, %v1649
    %v1653 = vadd.f32 %v1550, %v1648
    %s1654 = sld [smem:[#allocation9 + $0x61]]
    %v1655 = vstv %s1654
    %v1656 = vmul.f32 %v1655, %v1099
    %v1657 = vmul.f32 %v1655, %v1101
    %v1660 = vrot.slane %v1656, 2
    %v1661 = vrot.slane %v1657, 2
    %v1662 = vsel %vm734, %v1660, %v1661
    %v1665 = vadd.f32 %v1579, %v1662
    %v1666 = vadd.f32 %v1580, %v1661
    %s1667 = sld [smem:[#allocation9 + $0x62]]
    %v1668 = vstv %s1667
    %v1669 = vmul.f32 %v1668, %v1099
    %v1670 = vmul.f32 %v1668, %v1101
    %v1673 = vrot.slane %v1669, 2
    %v1674 = vrot.slane %v1670, 2
    %v1675 = vsel %vm734, %v1673, %v1674
    %v1678 = vadd.f32 %v1609, %v1675
    %v1679 = vadd.f32 %v1610, %v1674
    %s1680 = sld [smem:[#allocation9 + $0x63]]
    %v1681 = vstv %s1680
    %v1682 = vmul.f32 %v1681, %v1099
    %v1683 = vmul.f32 %v1681, %v1101
    %v1686 = vrot.slane %v1682, 2
    %v1687 = vrot.slane %v1683, 2
    %v1688 = vsel %vm734, %v1686, %v1687
    %v1691 = vadd.f32 %v1639, %v1688
    %v1692 = vadd.f32 %v1640, %v1687
    %s1693 = sld [smem:[#allocation9 + $0x70]]
    %v1694 = vstv %s1693
    %v1695 = vmul.f32 %v1694, %v1099
    %v1696 = vmul.f32 %v1694, %v1100
    %v1697 = vmul.f32 %v1694, %v1101
    %v1698 = vmul.f32 %v1694, %v1102
    %v1703 = vrot.slane %v1695, 2
    %v1704 = vrot.slane %v1697, 2
    %v1705 = vsel %vm734, %v1703, %v1704
    %v1706 = vrot.slane %v1696, 2
    %v1707 = vrot.slane %v1698, 2
    %v1708 = vsel %vm734, %v1706, %v1707
    %1709 = vrot.lane.b32.xlu0 %v1705, 127
    %v1710 = vpop.permute.xlu0 %1709
    %1711 = vrot.lane.b32.xlu0 %v1708, 127
    %v1712 = vpop.permute.xlu0 %1711
    %1713 = vrot.lane.b32.xlu0 %v1704, 127
    %v1714 = vpop.permute.xlu0 %1713
    %1715 = vrot.lane.b32.xlu0 %v1707, 127
    %v1716 = vpop.permute.xlu0 %1715
    %v1717 = vsel %vm147, %v1710, %v1712
    %v1718 = vsel %vm147, %v1714, %v1716
    %v1721 = vadd.f32 %v1652, %v1717
    %v1722 = vadd.f32 %v1653, %v1718
    %s1723 = sld [smem:[#allocation9 + $0x71]]
    %v1724 = vstv %s1723
    %v1725 = vmul.f32 %v1724, %v1099
    %v1726 = vmul.f32 %v1724, %v1100
    %v1727 = vmul.f32 %v1724, %v1101
    %v1728 = vmul.f32 %v1724, %v1102
    %v1733 = vrot.slane %v1725, 2
    %v1734 = vrot.slane %v1727, 2
    %v1735 = vsel %vm734, %v1733, %v1734
    %v1736 = vrot.slane %v1726, 2
    %v1737 = vrot.slane %v1728, 2
    %v1738 = vsel %vm734, %v1736, %v1737
    %1739 = vrot.lane.b32.xlu0 %v1735, 127
    %v1740 = vpop.permute.xlu0 %1739
    %1741 = vrot.lane.b32.xlu0 %v1738, 127
    %v1742 = vpop.permute.xlu0 %1741
    %1743 = vrot.lane.b32.xlu0 %v1734, 127
    %v1744 = vpop.permute.xlu0 %1743
    %1745 = vrot.lane.b32.xlu0 %v1737, 127
    %v1746 = vpop.permute.xlu0 %1745
    %v1747 = vsel %vm147, %v1740, %v1742
    %v1748 = vsel %vm147, %v1744, %v1746
    %v1751 = vadd.f32 %v1665, %v1747
    %v1752 = vadd.f32 %v1666, %v1748
    %s1753 = sld [smem:[#allocation9 + $0x72]]
    %v1754 = vstv %s1753
    %v1755 = vmul.f32 %v1754, %v1099
    %v1756 = vmul.f32 %v1754, %v1100
    %v1757 = vmul.f32 %v1754, %v1101
    %v1758 = vmul.f32 %v1754, %v1102
    %v1763 = vrot.slane %v1755, 2
    %v1764 = vrot.slane %v1757, 2
    %v1765 = vsel %vm734, %v1763, %v1764
    %v1766 = vrot.slane %v1756, 2
    %v1767 = vrot.slane %v1758, 2
    %v1768 = vsel %vm734, %v1766, %v1767
    %1769 = vrot.lane.b32.xlu0 %v1765, 127
    %v1770 = vpop.permute.xlu0 %1769
    %1771 = vrot.lane.b32.xlu0 %v1768, 127
    %v1772 = vpop.permute.xlu0 %1771
    %1773 = vrot.lane.b32.xlu0 %v1764, 127
    %v1774 = vpop.permute.xlu0 %1773
    %1775 = vrot.lane.b32.xlu0 %v1767, 127
    %v1776 = vpop.permute.xlu0 %1775
    %v1777 = vsel %vm147, %v1770, %v1772
    %v1778 = vsel %vm147, %v1774, %v1776
    %v1781 = vadd.f32 %v1678, %v1777
    %v1782 = vadd.f32 %v1679, %v1778
    %s1783 = sld [smem:[#allocation9 + $0x73]]
    %v1784 = vstv %s1783
    %v1785 = vmul.f32 %v1784, %v1099
    %v1786 = vmul.f32 %v1784, %v1100
    %v1787 = vmul.f32 %v1784, %v1101
    %v1788 = vmul.f32 %v1784, %v1102
    %v1793 = vrot.slane %v1785, 2
    %v1794 = vrot.slane %v1787, 2
    %v1795 = vsel %vm734, %v1793, %v1794
    %v1796 = vrot.slane %v1786, 2
    %v1797 = vrot.slane %v1788, 2
    %v1798 = vsel %vm734, %v1796, %v1797
    %1799 = vrot.lane.b32.xlu0 %v1795, 127
    %v1800 = vpop.permute.xlu0 %1799
    %1801 = vrot.lane.b32.xlu0 %v1798, 127
    %v1802 = vpop.permute.xlu0 %1801
    %1803 = vrot.lane.b32.xlu0 %v1794, 127
    %v1804 = vpop.permute.xlu0 %1803
    %1805 = vrot.lane.b32.xlu0 %v1797, 127
    %v1806 = vpop.permute.xlu0 %1805
    %v1807 = vsel %vm147, %v1800, %v1802
    %v1808 = vsel %vm147, %v1804, %v1806
    %v1811 = vadd.f32 %v1691, %v1807
    %v1812 = vadd.f32 %v1692, %v1808
    %s1813 = sld [smem:[#allocation9 + $0x80]]
    %v1814 = vstv %s1813
    %v1815 = vmul.f32 %v1814, %v1099
    %v1816 = vmul.f32 %v1814, %v1100
    %v1817 = vmul.f32 %v1814, %v1101
    %v1818 = vmul.f32 %v1814, %v1102
    %v1823 = vrot.slane %v1815, 2
    %v1824 = vrot.slane %v1817, 2
    %v1825 = vsel %vm734, %v1823, %v1824
    %v1826 = vrot.slane %v1816, 2
    %v1827 = vrot.slane %v1818, 2
    %v1828 = vsel %vm734, %v1826, %v1827
    %1829 = vrot.lane.b32.xlu0 %v1825, 126
    %v1830 = vpop.permute.xlu0 %1829
    %1831 = vrot.lane.b32.xlu0 %v1828, 126
    %v1832 = vpop.permute.xlu0 %1831
    %1833 = vrot.lane.b32.xlu0 %v1824, 126
    %v1834 = vpop.permute.xlu0 %1833
    %1835 = vrot.lane.b32.xlu0 %v1827, 126
    %v1836 = vpop.permute.xlu0 %1835
    %v1837 = vsel %vm260, %v1830, %v1832
    %v1838 = vsel %vm260, %v1834, %v1836
    %v1841 = vadd.f32 %v1721, %v1837
    %v1842 = vadd.f32 %v1722, %v1838
    %s1843 = sld [smem:[#allocation9 + $0x81]]
    %v1844 = vstv %s1843
    %v1845 = vmul.f32 %v1844, %v1099
    %v1846 = vmul.f32 %v1844, %v1100
    %v1847 = vmul.f32 %v1844, %v1101
    %v1848 = vmul.f32 %v1844, %v1102
    %v1853 = vrot.slane %v1845, 2
    %v1854 = vrot.slane %v1847, 2
    %v1855 = vsel %vm734, %v1853, %v1854
    %v1856 = vrot.slane %v1846, 2
    %v1857 = vrot.slane %v1848, 2
    %v1858 = vsel %vm734, %v1856, %v1857
    %1859 = vrot.lane.b32.xlu0 %v1855, 126
    %v1860 = vpop.permute.xlu0 %1859
    %1861 = vrot.lane.b32.xlu0 %v1858, 126
    %v1862 = vpop.permute.xlu0 %1861
    %1863 = vrot.lane.b32.xlu0 %v1854, 126
    %v1864 = vpop.permute.xlu0 %1863
    %1865 = vrot.lane.b32.xlu0 %v1857, 126
    %v1866 = vpop.permute.xlu0 %1865
    %v1867 = vsel %vm260, %v1860, %v1862
    %v1868 = vsel %vm260, %v1864, %v1866
    %v1871 = vadd.f32 %v1751, %v1867
    %v1872 = vadd.f32 %v1752, %v1868
    %s1873 = sld [smem:[#allocation9 + $0x82]]
    %v1874 = vstv %s1873
    %v1875 = vmul.f32 %v1874, %v1099
    %v1876 = vmul.f32 %v1874, %v1100
    %v1877 = vmul.f32 %v1874, %v1101
    %v1878 = vmul.f32 %v1874, %v1102
    %v1883 = vrot.slane %v1875, 2
    %v1884 = vrot.slane %v1877, 2
    %v1885 = vsel %vm734, %v1883, %v1884
    %v1886 = vrot.slane %v1876, 2
    %v1887 = vrot.slane %v1878, 2
    %v1888 = vsel %vm734, %v1886, %v1887
    %1889 = vrot.lane.b32.xlu0 %v1885, 126
    %v1890 = vpop.permute.xlu0 %1889
    %1891 = vrot.lane.b32.xlu0 %v1888, 126
    %v1892 = vpop.permute.xlu0 %1891
    %1893 = vrot.lane.b32.xlu0 %v1884, 126
    %v1894 = vpop.permute.xlu0 %1893
    %1895 = vrot.lane.b32.xlu0 %v1887, 126
    %v1896 = vpop.permute.xlu0 %1895
    %v1897 = vsel %vm260, %v1890, %v1892
    %v1898 = vsel %vm260, %v1894, %v1896
    %v1901 = vadd.f32 %v1781, %v1897
    %v1902 = vadd.f32 %v1782, %v1898
    %s1903 = sld [smem:[#allocation9 + $0x83]]
    %v1904 = vstv %s1903
    %v1905 = vmul.f32 %v1904, %v1099
    %v1906 = vmul.f32 %v1904, %v1100
    %v1907 = vmul.f32 %v1904, %v1101
    %v1908 = vmul.f32 %v1904, %v1102
    %v1913 = vrot.slane %v1905, 2
    %v1914 = vrot.slane %v1907, 2
    %v1915 = vsel %vm734, %v1913, %v1914
    %v1916 = vrot.slane %v1906, 2
    %v1917 = vrot.slane %v1908, 2
    %v1918 = vsel %vm734, %v1916, %v1917
    %1919 = vrot.lane.b32.xlu0 %v1915, 126
    %v1920 = vpop.permute.xlu0 %1919
    %1921 = vrot.lane.b32.xlu0 %v1918, 126
    %v1922 = vpop.permute.xlu0 %1921
    %1923 = vrot.lane.b32.xlu0 %v1914, 126
    %v1924 = vpop.permute.xlu0 %1923
    %1925 = vrot.lane.b32.xlu0 %v1917, 126
    %v1926 = vpop.permute.xlu0 %1925
    %v1927 = vsel %vm260, %v1920, %v1922
    %v1928 = vsel %vm260, %v1924, %v1926
    %v1931 = vadd.f32 %v1811, %v1927
    %v1932 = vadd.f32 %v1812, %v1928
    %s1933 = sld [smem:[#allocation9 + $0x4]]
    %v1934 = vstv %s1933
    %v1935 = vmul.f32 %v1934, %v1109
    %v1936 = vmul.f32 %v1934, %v1111
    %v1937 = vadd.f32 %v1841, %v1935
    %v1938 = vadd.f32 %v1842, %v1936
    %s1939 = sld [smem:[#allocation9 + $0x5]]
    %v1940 = vstv %s1939
    %v1941 = vmul.f32 %v1940, %v1109
    %v1942 = vmul.f32 %v1940, %v1111
    %v1943 = vadd.f32 %v1871, %v1941
    %v1944 = vadd.f32 %v1872, %v1942
    %s1945 = sld [smem:[#allocation9 + $0x6]]
    %v1946 = vstv %s1945
    %v1947 = vmul.f32 %v1946, %v1109
    %v1948 = vmul.f32 %v1946, %v1111
    %v1949 = vadd.f32 %v1901, %v1947
    %v1950 = vadd.f32 %v1902, %v1948
    %s1951 = sld [smem:[#allocation9 + $0x7]]
    %v1952 = vstv %s1951
    %v1953 = vmul.f32 %v1952, %v1109
    %v1954 = vmul.f32 %v1952, %v1111
    %v1955 = vadd.f32 %v1931, %v1953
    %v1956 = vadd.f32 %v1932, %v1954
    %s1957 = sld [smem:[#allocation9 + $0x14]]
    %v1958 = vstv %s1957
    %v1959 = vmul.f32 %v1958, %v1109
    %v1960 = vmul.f32 %v1958, %v1110
    %v1961 = vmul.f32 %v1958, %v1111
    %v1962 = vmul.f32 %v1958, %v1112
    %1967 = vrot.lane.b32.xlu0 %v1959, 127
    %v1968 = vpop.permute.xlu0 %1967
    %1969 = vrot.lane.b32.xlu0 %v1960, 127
    %v1970 = vpop.permute.xlu0 %1969
    %1971 = vrot.lane.b32.xlu0 %v1961, 127
    %v1972 = vpop.permute.xlu0 %1971
    %1973 = vrot.lane.b32.xlu0 %v1962, 127
    %v1974 = vpop.permute.xlu0 %1973
    %v1975 = vsel %vm147, %v1968, %v1970
    %v1976 = vsel %vm147, %v1972, %v1974
    %v1979 = vadd.f32 %v1937, %v1975
    %v1980 = vadd.f32 %v1938, %v1976
    %s1981 = sld [smem:[#allocation9 + $0x15]]
    %v1982 = vstv %s1981
    %v1983 = vmul.f32 %v1982, %v1109
    %v1984 = vmul.f32 %v1982, %v1110
    %v1985 = vmul.f32 %v1982, %v1111
    %v1986 = vmul.f32 %v1982, %v1112
    %1991 = vrot.lane.b32.xlu0 %v1983, 127
    %v1992 = vpop.permute.xlu0 %1991
    %1993 = vrot.lane.b32.xlu0 %v1984, 127
    %v1994 = vpop.permute.xlu0 %1993
    %1995 = vrot.lane.b32.xlu0 %v1985, 127
    %v1996 = vpop.permute.xlu0 %1995
    %1997 = vrot.lane.b32.xlu0 %v1986, 127
    %v1998 = vpop.permute.xlu0 %1997
    %v1999 = vsel %vm147, %v1992, %v1994
    %v2000 = vsel %vm147, %v1996, %v1998
    %v2003 = vadd.f32 %v1943, %v1999
    %v2004 = vadd.f32 %v1944, %v2000
    %s2005 = sld [smem:[#allocation9 + $0x16]]
    %v2006 = vstv %s2005
    %v2007 = vmul.f32 %v2006, %v1109
    %v2008 = vmul.f32 %v2006, %v1110
    %v2009 = vmul.f32 %v2006, %v1111
    %v2010 = vmul.f32 %v2006, %v1112
    %2015 = vrot.lane.b32.xlu0 %v2007, 127
    %v2016 = vpop.permute.xlu0 %2015
    %2017 = vrot.lane.b32.xlu0 %v2008, 127
    %v2018 = vpop.permute.xlu0 %2017
    %2019 = vrot.lane.b32.xlu0 %v2009, 127
    %v2020 = vpop.permute.xlu0 %2019
    %2021 = vrot.lane.b32.xlu0 %v2010, 127
    %v2022 = vpop.permute.xlu0 %2021
    %v2023 = vsel %vm147, %v2016, %v2018
    %v2024 = vsel %vm147, %v2020, %v2022
    %v2027 = vadd.f32 %v1949, %v2023
    %v2028 = vadd.f32 %v1950, %v2024
    %s2029 = sld [smem:[#allocation9 + $0x17]]
    %v2030 = vstv %s2029
    %v2031 = vmul.f32 %v2030, %v1109
    %v2032 = vmul.f32 %v2030, %v1110
    %v2033 = vmul.f32 %v2030, %v1111
    %v2034 = vmul.f32 %v2030, %v1112
    %2039 = vrot.lane.b32.xlu0 %v2031, 127
    %v2040 = vpop.permute.xlu0 %2039
    %2041 = vrot.lane.b32.xlu0 %v2032, 127
    %v2042 = vpop.permute.xlu0 %2041
    %2043 = vrot.lane.b32.xlu0 %v2033, 127
    %v2044 = vpop.permute.xlu0 %2043
    %2045 = vrot.lane.b32.xlu0 %v2034, 127
    %v2046 = vpop.permute.xlu0 %2045
    %v2047 = vsel %vm147, %v2040, %v2042
    %v2048 = vsel %vm147, %v2044, %v2046
    %v2051 = vadd.f32 %v1955, %v2047
    %v2052 = vadd.f32 %v1956, %v2048
    %s2053 = sld [smem:[#allocation9 + $0x24]]
    %v2054 = vstv %s2053
    %v2055 = vmul.f32 %v2054, %v1109
    %v2056 = vmul.f32 %v2054, %v1110
    %v2057 = vmul.f32 %v2054, %v1111
    %v2058 = vmul.f32 %v2054, %v1112
    %2063 = vrot.lane.b32.xlu0 %v2055, 126
    %v2064 = vpop.permute.xlu0 %2063
    %2065 = vrot.lane.b32.xlu0 %v2056, 126
    %v2066 = vpop.permute.xlu0 %2065
    %2067 = vrot.lane.b32.xlu0 %v2057, 126
    %v2068 = vpop.permute.xlu0 %2067
    %2069 = vrot.lane.b32.xlu0 %v2058, 126
    %v2070 = vpop.permute.xlu0 %2069
    %v2071 = vsel %vm260, %v2064, %v2066
    %v2072 = vsel %vm260, %v2068, %v2070
    %v2075 = vadd.f32 %v1979, %v2071
    %v2076 = vadd.f32 %v1980, %v2072
    %s2077 = sld [smem:[#allocation9 + $0x25]]
    %v2078 = vstv %s2077
    %v2079 = vmul.f32 %v2078, %v1109
    %v2080 = vmul.f32 %v2078, %v1110
    %v2081 = vmul.f32 %v2078, %v1111
    %v2082 = vmul.f32 %v2078, %v1112
    %2087 = vrot.lane.b32.xlu0 %v2079, 126
    %v2088 = vpop.permute.xlu0 %2087
    %2089 = vrot.lane.b32.xlu0 %v2080, 126
    %v2090 = vpop.permute.xlu0 %2089
    %2091 = vrot.lane.b32.xlu0 %v2081, 126
    %v2092 = vpop.permute.xlu0 %2091
    %2093 = vrot.lane.b32.xlu0 %v2082, 126
    %v2094 = vpop.permute.xlu0 %2093
    %v2095 = vsel %vm260, %v2088, %v2090
    %v2096 = vsel %vm260, %v2092, %v2094
    %v2099 = vadd.f32 %v2003, %v2095
    %v2100 = vadd.f32 %v2004, %v2096
    %s2101 = sld [smem:[#allocation9 + $0x26]]
    %v2102 = vstv %s2101
    %v2103 = vmul.f32 %v2102, %v1109
    %v2104 = vmul.f32 %v2102, %v1110
    %v2105 = vmul.f32 %v2102, %v1111
    %v2106 = vmul.f32 %v2102, %v1112
    %2111 = vrot.lane.b32.xlu0 %v2103, 126
    %v2112 = vpop.permute.xlu0 %2111
    %2113 = vrot.lane.b32.xlu0 %v2104, 126
    %v2114 = vpop.permute.xlu0 %2113
    %2115 = vrot.lane.b32.xlu0 %v2105, 126
    %v2116 = vpop.permute.xlu0 %2115
    %2117 = vrot.lane.b32.xlu0 %v2106, 126
    %v2118 = vpop.permute.xlu0 %2117
    %v2119 = vsel %vm260, %v2112, %v2114
    %v2120 = vsel %vm260, %v2116, %v2118
    %v2123 = vadd.f32 %v2027, %v2119
    %v2124 = vadd.f32 %v2028, %v2120
    %s2125 = sld [smem:[#allocation9 + $0x27]]
    %v2126 = vstv %s2125
    %v2127 = vmul.f32 %v2126, %v1109
    %v2128 = vmul.f32 %v2126, %v1110
    %v2129 = vmul.f32 %v2126, %v1111
    %v2130 = vmul.f32 %v2126, %v1112
    %2135 = vrot.lane.b32.xlu0 %v2127, 126
    %v2136 = vpop.permute.xlu0 %2135
    %2137 = vrot.lane.b32.xlu0 %v2128, 126
    %v2138 = vpop.permute.xlu0 %2137
    %2139 = vrot.lane.b32.xlu0 %v2129, 126
    %v2140 = vpop.permute.xlu0 %2139
    %2141 = vrot.lane.b32.xlu0 %v2130, 126
    %v2142 = vpop.permute.xlu0 %2141
    %v2143 = vsel %vm260, %v2136, %v2138
    %v2144 = vsel %vm260, %v2140, %v2142
    %v2147 = vadd.f32 %v2051, %v2143
    %v2148 = vadd.f32 %v2052, %v2144
    %s2149 = sld [smem:[#allocation9 + $0x34]]
    %v2150 = vstv %s2149
    %v2151 = vmul.f32 %v2150, %v1109
    %v2152 = vmul.f32 %v2150, %v1111
    %v2155 = vrot.slane %v2151, 1
    %v2156 = vrot.slane %v2152, 1
    %v2157 = vsel %vm365, %v2155, %v2156
    %v2160 = vadd.f32 %v2075, %v2157
    %v2161 = vadd.f32 %v2076, %v2156
    %s2162 = sld [smem:[#allocation9 + $0x35]]
    %v2163 = vstv %s2162
    %v2164 = vmul.f32 %v2163, %v1109
    %v2165 = vmul.f32 %v2163, %v1111
    %v2168 = vrot.slane %v2164, 1
    %v2169 = vrot.slane %v2165, 1
    %v2170 = vsel %vm365, %v2168, %v2169
    %v2173 = vadd.f32 %v2099, %v2170
    %v2174 = vadd.f32 %v2100, %v2169
    %s2175 = sld [smem:[#allocation9 + $0x36]]
    %v2176 = vstv %s2175
    %v2177 = vmul.f32 %v2176, %v1109
    %v2178 = vmul.f32 %v2176, %v1111
    %v2181 = vrot.slane %v2177, 1
    %v2182 = vrot.slane %v2178, 1
    %v2183 = vsel %vm365, %v2181, %v2182
    %v2186 = vadd.f32 %v2123, %v2183
    %v2187 = vadd.f32 %v2124, %v2182
    %s2188 = sld [smem:[#allocation9 + $0x37]]
    %v2189 = vstv %s2188
    %v2190 = vmul.f32 %v2189, %v1109
    %v2191 = vmul.f32 %v2189, %v1111
    %v2194 = vrot.slane %v2190, 1
    %v2195 = vrot.slane %v2191, 1
    %v2196 = vsel %vm365, %v2194, %v2195
    %v2199 = vadd.f32 %v2147, %v2196
    %v2200 = vadd.f32 %v2148, %v2195
    %s2201 = sld [smem:[#allocation9 + $0x44]]
    %v2202 = vstv %s2201
    %v2203 = vmul.f32 %v2202, %v1109
    %v2204 = vmul.f32 %v2202, %v1110
    %v2205 = vmul.f32 %v2202, %v1111
    %v2206 = vmul.f32 %v2202, %v1112
    %v2211 = vrot.slane %v2203, 1
    %v2212 = vrot.slane %v2205, 1
    %v2213 = vsel %vm365, %v2211, %v2212
    %v2214 = vrot.slane %v2204, 1
    %v2215 = vrot.slane %v2206, 1
    %v2216 = vsel %vm365, %v2214, %v2215
    %2217 = vrot.lane.b32.xlu0 %v2213, 127
    %v2218 = vpop.permute.xlu0 %2217
    %2219 = vrot.lane.b32.xlu0 %v2216, 127
    %v2220 = vpop.permute.xlu0 %2219
    %2221 = vrot.lane.b32.xlu0 %v2212, 127
    %v2222 = vpop.permute.xlu0 %2221
    %2223 = vrot.lane.b32.xlu0 %v2215, 127
    %v2224 = vpop.permute.xlu0 %2223
    %v2225 = vsel %vm147, %v2218, %v2220
    %v2226 = vsel %vm147, %v2222, %v2224
    %v2229 = vadd.f32 %v2160, %v2225
    %v2230 = vadd.f32 %v2161, %v2226
    %s2231 = sld [smem:[#allocation9 + $0x45]]
    %v2232 = vstv %s2231
    %v2233 = vmul.f32 %v2232, %v1109
    %v2234 = vmul.f32 %v2232, %v1110
    %v2235 = vmul.f32 %v2232, %v1111
    %v2236 = vmul.f32 %v2232, %v1112
    %v2241 = vrot.slane %v2233, 1
    %v2242 = vrot.slane %v2235, 1
    %v2243 = vsel %vm365, %v2241, %v2242
    %v2244 = vrot.slane %v2234, 1
    %v2245 = vrot.slane %v2236, 1
    %v2246 = vsel %vm365, %v2244, %v2245
    %2247 = vrot.lane.b32.xlu0 %v2243, 127
    %v2248 = vpop.permute.xlu0 %2247
    %2249 = vrot.lane.b32.xlu0 %v2246, 127
    %v2250 = vpop.permute.xlu0 %2249
    %2251 = vrot.lane.b32.xlu0 %v2242, 127
    %v2252 = vpop.permute.xlu0 %2251
    %2253 = vrot.lane.b32.xlu0 %v2245, 127
    %v2254 = vpop.permute.xlu0 %2253
    %v2255 = vsel %vm147, %v2248, %v2250
    %v2256 = vsel %vm147, %v2252, %v2254
    %v2259 = vadd.f32 %v2173, %v2255
    %v2260 = vadd.f32 %v2174, %v2256
    %s2261 = sld [smem:[#allocation9 + $0x46]]
    %v2262 = vstv %s2261
    %v2263 = vmul.f32 %v2262, %v1109
    %v2264 = vmul.f32 %v2262, %v1110
    %v2265 = vmul.f32 %v2262, %v1111
    %v2266 = vmul.f32 %v2262, %v1112
    %v2271 = vrot.slane %v2263, 1
    %v2272 = vrot.slane %v2265, 1
    %v2273 = vsel %vm365, %v2271, %v2272
    %v2274 = vrot.slane %v2264, 1
    %v2275 = vrot.slane %v2266, 1
    %v2276 = vsel %vm365, %v2274, %v2275
    %2277 = vrot.lane.b32.xlu0 %v2273, 127
    %v2278 = vpop.permute.xlu0 %2277
    %2279 = vrot.lane.b32.xlu0 %v2276, 127
    %v2280 = vpop.permute.xlu0 %2279
    %2281 = vrot.lane.b32.xlu0 %v2272, 127
    %v2282 = vpop.permute.xlu0 %2281
    %2283 = vrot.lane.b32.xlu0 %v2275, 127
    %v2284 = vpop.permute.xlu0 %2283
    %v2285 = vsel %vm147, %v2278, %v2280
    %v2286 = vsel %vm147, %v2282, %v2284
    %v2289 = vadd.f32 %v2186, %v2285
    %v2290 = vadd.f32 %v2187, %v2286
    %s2291 = sld [smem:[#allocation9 + $0x47]]
    %v2292 = vstv %s2291
    %v2293 = vmul.f32 %v2292, %v1109
    %v2294 = vmul.f32 %v2292, %v1110
    %v2295 = vmul.f32 %v2292, %v1111
    %v2296 = vmul.f32 %v2292, %v1112
    %v2301 = vrot.slane %v2293, 1
    %v2302 = vrot.slane %v2295, 1
    %v2303 = vsel %vm365, %v2301, %v2302
    %v2304 = vrot.slane %v2294, 1
    %v2305 = vrot.slane %v2296, 1
    %v2306 = vsel %vm365, %v2304, %v2305
    %2307 = vrot.lane.b32.xlu0 %v2303, 127
    %v2308 = vpop.permute.xlu0 %2307
    %2309 = vrot.lane.b32.xlu0 %v2306, 127
    %v2310 = vpop.permute.xlu0 %2309
    %2311 = vrot.lane.b32.xlu0 %v2302, 127
    %v2312 = vpop.permute.xlu0 %2311
    %2313 = vrot.lane.b32.xlu0 %v2305, 127
    %v2314 = vpop.permute.xlu0 %2313
    %v2315 = vsel %vm147, %v2308, %v2310
    %v2316 = vsel %vm147, %v2312, %v2314
    %v2319 = vadd.f32 %v2199, %v2315
    %v2320 = vadd.f32 %v2200, %v2316
    %s2321 = sld [smem:[#allocation9 + $0x54]]
    %v2322 = vstv %s2321
    %v2323 = vmul.f32 %v2322, %v1109
    %v2324 = vmul.f32 %v2322, %v1110
    %v2325 = vmul.f32 %v2322, %v1111
    %v2326 = vmul.f32 %v2322, %v1112
    %v2331 = vrot.slane %v2323, 1
    %v2332 = vrot.slane %v2325, 1
    %v2333 = vsel %vm365, %v2331, %v2332
    %v2334 = vrot.slane %v2324, 1
    %v2335 = vrot.slane %v2326, 1
    %v2336 = vsel %vm365, %v2334, %v2335
    %2337 = vrot.lane.b32.xlu0 %v2333, 126
    %v2338 = vpop.permute.xlu0 %2337
    %2339 = vrot.lane.b32.xlu0 %v2336, 126
    %v2340 = vpop.permute.xlu0 %2339
    %2341 = vrot.lane.b32.xlu0 %v2332, 126
    %v2342 = vpop.permute.xlu0 %2341
    %2343 = vrot.lane.b32.xlu0 %v2335, 126
    %v2344 = vpop.permute.xlu0 %2343
    %v2345 = vsel %vm260, %v2338, %v2340
    %v2346 = vsel %vm260, %v2342, %v2344
    %v2349 = vadd.f32 %v2229, %v2345
    %v2350 = vadd.f32 %v2230, %v2346
    %s2351 = sld [smem:[#allocation9 + $0x55]]
    %v2352 = vstv %s2351
    %v2353 = vmul.f32 %v2352, %v1109
    %v2354 = vmul.f32 %v2352, %v1110
    %v2355 = vmul.f32 %v2352, %v1111
    %v2356 = vmul.f32 %v2352, %v1112
    %v2361 = vrot.slane %v2353, 1
    %v2362 = vrot.slane %v2355, 1
    %v2363 = vsel %vm365, %v2361, %v2362
    %v2364 = vrot.slane %v2354, 1
    %v2365 = vrot.slane %v2356, 1
    %v2366 = vsel %vm365, %v2364, %v2365
    %2367 = vrot.lane.b32.xlu0 %v2363, 126
    %v2368 = vpop.permute.xlu0 %2367
    %2369 = vrot.lane.b32.xlu0 %v2366, 126
    %v2370 = vpop.permute.xlu0 %2369
    %2371 = vrot.lane.b32.xlu0 %v2362, 126
    %v2372 = vpop.permute.xlu0 %2371
    %2373 = vrot.lane.b32.xlu0 %v2365, 126
    %v2374 = vpop.permute.xlu0 %2373
    %v2375 = vsel %vm260, %v2368, %v2370
    %v2376 = vsel %vm260, %v2372, %v2374
    %v2379 = vadd.f32 %v2259, %v2375
    %v2380 = vadd.f32 %v2260, %v2376
    %s2381 = sld [smem:[#allocation9 + $0x56]]
    %v2382 = vstv %s2381
    %v2383 = vmul.f32 %v2382, %v1109
    %v2384 = vmul.f32 %v2382, %v1110
    %v2385 = vmul.f32 %v2382, %v1111
    %v2386 = vmul.f32 %v2382, %v1112
    %v2391 = vrot.slane %v2383, 1
    %v2392 = vrot.slane %v2385, 1
    %v2393 = vsel %vm365, %v2391, %v2392
    %v2394 = vrot.slane %v2384, 1
    %v2395 = vrot.slane %v2386, 1
    %v2396 = vsel %vm365, %v2394, %v2395
    %2397 = vrot.lane.b32.xlu0 %v2393, 126
    %v2398 = vpop.permute.xlu0 %2397
    %2399 = vrot.lane.b32.xlu0 %v2396, 126
    %v2400 = vpop.permute.xlu0 %2399
    %2401 = vrot.lane.b32.xlu0 %v2392, 126
    %v2402 = vpop.permute.xlu0 %2401
    %2403 = vrot.lane.b32.xlu0 %v2395, 126
    %v2404 = vpop.permute.xlu0 %2403
    %v2405 = vsel %vm260, %v2398, %v2400
    %v2406 = vsel %vm260, %v2402, %v2404
    %v2409 = vadd.f32 %v2289, %v2405
    %v2410 = vadd.f32 %v2290, %v2406
    %s2411 = sld [smem:[#allocation9 + $0x57]]
    %v2412 = vstv %s2411
    %v2413 = vmul.f32 %v2412, %v1109
    %v2414 = vmul.f32 %v2412, %v1110
    %v2415 = vmul.f32 %v2412, %v1111
    %v2416 = vmul.f32 %v2412, %v1112
    %v2421 = vrot.slane %v2413, 1
    %v2422 = vrot.slane %v2415, 1
    %v2423 = vsel %vm365, %v2421, %v2422
    %v2424 = vrot.slane %v2414, 1
    %v2425 = vrot.slane %v2416, 1
    %v2426 = vsel %vm365, %v2424, %v2425
    %2427 = vrot.lane.b32.xlu0 %v2423, 126
    %v2428 = vpop.permute.xlu0 %2427
    %2429 = vrot.lane.b32.xlu0 %v2426, 126
    %v2430 = vpop.permute.xlu0 %2429
    %2431 = vrot.lane.b32.xlu0 %v2422, 126
    %v2432 = vpop.permute.xlu0 %2431
    %2433 = vrot.lane.b32.xlu0 %v2425, 126
    %v2434 = vpop.permute.xlu0 %2433
    %v2435 = vsel %vm260, %v2428, %v2430
    %v2436 = vsel %vm260, %v2432, %v2434
    %v2439 = vadd.f32 %v2319, %v2435
    %v2440 = vadd.f32 %v2320, %v2436
    %s2441 = sld [smem:[#allocation9 + $0x64]]
    %v2442 = vstv %s2441
    %v2443 = vmul.f32 %v2442, %v1109
    %v2444 = vmul.f32 %v2442, %v1111
    %v2447 = vrot.slane %v2443, 2
    %v2448 = vrot.slane %v2444, 2
    %v2449 = vsel %vm734, %v2447, %v2448
    %v2452 = vadd.f32 %v2349, %v2449
    %v2453 = vadd.f32 %v2350, %v2448
    %s2454 = sld [smem:[#allocation9 + $0x65]]
    %v2455 = vstv %s2454
    %v2456 = vmul.f32 %v2455, %v1109
    %v2457 = vmul.f32 %v2455, %v1111
    %v2460 = vrot.slane %v2456, 2
    %v2461 = vrot.slane %v2457, 2
    %v2462 = vsel %vm734, %v2460, %v2461
    %v2465 = vadd.f32 %v2379, %v2462
    %v2466 = vadd.f32 %v2380, %v2461
    %s2467 = sld [smem:[#allocation9 + $0x66]]
    %v2468 = vstv %s2467
    %v2469 = vmul.f32 %v2468, %v1109
    %v2470 = vmul.f32 %v2468, %v1111
    %v2473 = vrot.slane %v2469, 2
    %v2474 = vrot.slane %v2470, 2
    %v2475 = vsel %vm734, %v2473, %v2474
    %v2478 = vadd.f32 %v2409, %v2475
    %v2479 = vadd.f32 %v2410, %v2474
    %s2480 = sld [smem:[#allocation9 + $0x67]]
    %v2481 = vstv %s2480
    %v2482 = vmul.f32 %v2481, %v1109
    %v2483 = vmul.f32 %v2481, %v1111
    %v2486 = vrot.slane %v2482, 2
    %v2487 = vrot.slane %v2483, 2
    %v2488 = vsel %vm734, %v2486, %v2487
    %v2491 = vadd.f32 %v2439, %v2488
    %v2492 = vadd.f32 %v2440, %v2487
    %s2493 = sld [smem:[#allocation9 + $0x74]]
    %v2494 = vstv %s2493
    %v2495 = vmul.f32 %v2494, %v1109
    %v2496 = vmul.f32 %v2494, %v1110
    %v2497 = vmul.f32 %v2494, %v1111
    %v2498 = vmul.f32 %v2494, %v1112
    %v2503 = vrot.slane %v2495, 2
    %v2504 = vrot.slane %v2497, 2
    %v2505 = vsel %vm734, %v2503, %v2504
    %v2506 = vrot.slane %v2496, 2
    %v2507 = vrot.slane %v2498, 2
    %v2508 = vsel %vm734, %v2506, %v2507
    %2509 = vrot.lane.b32.xlu0 %v2505, 127
    %v2510 = vpop.permute.xlu0 %2509
    %2511 = vrot.lane.b32.xlu0 %v2508, 127
    %v2512 = vpop.permute.xlu0 %2511
    %2513 = vrot.lane.b32.xlu0 %v2504, 127
    %v2514 = vpop.permute.xlu0 %2513
    %2515 = vrot.lane.b32.xlu0 %v2507, 127
    %v2516 = vpop.permute.xlu0 %2515
    %v2517 = vsel %vm147, %v2510, %v2512
    %v2518 = vsel %vm147, %v2514, %v2516
    %v2521 = vadd.f32 %v2452, %v2517
    %v2522 = vadd.f32 %v2453, %v2518
    %s2523 = sld [smem:[#allocation9 + $0x75]]
    %v2524 = vstv %s2523
    %v2525 = vmul.f32 %v2524, %v1109
    %v2526 = vmul.f32 %v2524, %v1110
    %v2527 = vmul.f32 %v2524, %v1111
    %v2528 = vmul.f32 %v2524, %v1112
    %v2533 = vrot.slane %v2525, 2
    %v2534 = vrot.slane %v2527, 2
    %v2535 = vsel %vm734, %v2533, %v2534
    %v2536 = vrot.slane %v2526, 2
    %v2537 = vrot.slane %v2528, 2
    %v2538 = vsel %vm734, %v2536, %v2537
    %2539 = vrot.lane.b32.xlu0 %v2535, 127
    %v2540 = vpop.permute.xlu0 %2539
    %2541 = vrot.lane.b32.xlu0 %v2538, 127
    %v2542 = vpop.permute.xlu0 %2541
    %2543 = vrot.lane.b32.xlu0 %v2534, 127
    %v2544 = vpop.permute.xlu0 %2543
    %2545 = vrot.lane.b32.xlu0 %v2537, 127
    %v2546 = vpop.permute.xlu0 %2545
    %v2547 = vsel %vm147, %v2540, %v2542
    %v2548 = vsel %vm147, %v2544, %v2546
    %v2551 = vadd.f32 %v2465, %v2547
    %v2552 = vadd.f32 %v2466, %v2548
    %s2553 = sld [smem:[#allocation9 + $0x76]]
    %v2554 = vstv %s2553
    %v2555 = vmul.f32 %v2554, %v1109
    %v2556 = vmul.f32 %v2554, %v1110
    %v2557 = vmul.f32 %v2554, %v1111
    %v2558 = vmul.f32 %v2554, %v1112
    %v2563 = vrot.slane %v2555, 2
    %v2564 = vrot.slane %v2557, 2
    %v2565 = vsel %vm734, %v2563, %v2564
    %v2566 = vrot.slane %v2556, 2
    %v2567 = vrot.slane %v2558, 2
    %v2568 = vsel %vm734, %v2566, %v2567
    %2569 = vrot.lane.b32.xlu0 %v2565, 127
    %v2570 = vpop.permute.xlu0 %2569
    %2571 = vrot.lane.b32.xlu0 %v2568, 127
    %v2572 = vpop.permute.xlu0 %2571
    %2573 = vrot.lane.b32.xlu0 %v2564, 127
    %v2574 = vpop.permute.xlu0 %2573
    %2575 = vrot.lane.b32.xlu0 %v2567, 127
    %v2576 = vpop.permute.xlu0 %2575
    %v2577 = vsel %vm147, %v2570, %v2572
    %v2578 = vsel %vm147, %v2574, %v2576
    %v2581 = vadd.f32 %v2478, %v2577
    %v2582 = vadd.f32 %v2479, %v2578
    %s2583 = sld [smem:[#allocation9 + $0x77]]
    %v2584 = vstv %s2583
    %v2585 = vmul.f32 %v2584, %v1109
    %v2586 = vmul.f32 %v2584, %v1110
    %v2587 = vmul.f32 %v2584, %v1111
    %v2588 = vmul.f32 %v2584, %v1112
    %v2593 = vrot.slane %v2585, 2
    %v2594 = vrot.slane %v2587, 2
    %v2595 = vsel %vm734, %v2593, %v2594
    %v2596 = vrot.slane %v2586, 2
    %v2597 = vrot.slane %v2588, 2
    %v2598 = vsel %vm734, %v2596, %v2597
    %2599 = vrot.lane.b32.xlu0 %v2595, 127
    %v2600 = vpop.permute.xlu0 %2599
    %2601 = vrot.lane.b32.xlu0 %v2598, 127
    %v2602 = vpop.permute.xlu0 %2601
    %2603 = vrot.lane.b32.xlu0 %v2594, 127
    %v2604 = vpop.permute.xlu0 %2603
    %2605 = vrot.lane.b32.xlu0 %v2597, 127
    %v2606 = vpop.permute.xlu0 %2605
    %v2607 = vsel %vm147, %v2600, %v2602
    %v2608 = vsel %vm147, %v2604, %v2606
    %v2611 = vadd.f32 %v2491, %v2607
    %v2612 = vadd.f32 %v2492, %v2608
    %s2613 = sld [smem:[#allocation9 + $0x84]]
    %v2614 = vstv %s2613
    %v2615 = vmul.f32 %v2614, %v1109
    %v2616 = vmul.f32 %v2614, %v1110
    %v2617 = vmul.f32 %v2614, %v1111
    %v2618 = vmul.f32 %v2614, %v1112
    %v2623 = vrot.slane %v2615, 2
    %v2624 = vrot.slane %v2617, 2
    %v2625 = vsel %vm734, %v2623, %v2624
    %v2626 = vrot.slane %v2616, 2
    %v2627 = vrot.slane %v2618, 2
    %v2628 = vsel %vm734, %v2626, %v2627
    %2629 = vrot.lane.b32.xlu0 %v2625, 126
    %v2630 = vpop.permute.xlu0 %2629
    %2631 = vrot.lane.b32.xlu0 %v2628, 126
    %v2632 = vpop.permute.xlu0 %2631
    %2633 = vrot.lane.b32.xlu0 %v2624, 126
    %v2634 = vpop.permute.xlu0 %2633
    %2635 = vrot.lane.b32.xlu0 %v2627, 126
    %v2636 = vpop.permute.xlu0 %2635
    %v2637 = vsel %vm260, %v2630, %v2632
    %v2638 = vsel %vm260, %v2634, %v2636
    %v2641 = vadd.f32 %v2521, %v2637
    %v2642 = vadd.f32 %v2522, %v2638
    %s2643 = sld [smem:[#allocation9 + $0x85]]
    %v2644 = vstv %s2643
    %v2645 = vmul.f32 %v2644, %v1109
    %v2646 = vmul.f32 %v2644, %v1110
    %v2647 = vmul.f32 %v2644, %v1111
    %v2648 = vmul.f32 %v2644, %v1112
    %v2653 = vrot.slane %v2645, 2
    %v2654 = vrot.slane %v2647, 2
    %v2655 = vsel %vm734, %v2653, %v2654
    %v2656 = vrot.slane %v2646, 2
    %v2657 = vrot.slane %v2648, 2
    %v2658 = vsel %vm734, %v2656, %v2657
    %2659 = vrot.lane.b32.xlu0 %v2655, 126
    %v2660 = vpop.permute.xlu0 %2659
    %2661 = vrot.lane.b32.xlu0 %v2658, 126
    %v2662 = vpop.permute.xlu0 %2661
    %2663 = vrot.lane.b32.xlu0 %v2654, 126
    %v2664 = vpop.permute.xlu0 %2663
    %2665 = vrot.lane.b32.xlu0 %v2657, 126
    %v2666 = vpop.permute.xlu0 %2665
    %v2667 = vsel %vm260, %v2660, %v2662
    %v2668 = vsel %vm260, %v2664, %v2666
    %v2671 = vadd.f32 %v2551, %v2667
    %v2672 = vadd.f32 %v2552, %v2668
    %s2673 = sld [smem:[#allocation9 + $0x86]]
    %v2674 = vstv %s2673
    %v2675 = vmul.f32 %v2674, %v1109
    %v2676 = vmul.f32 %v2674, %v1110
    %v2677 = vmul.f32 %v2674, %v1111
    %v2678 = vmul.f32 %v2674, %v1112
    %v2683 = vrot.slane %v2675, 2
    %v2684 = vrot.slane %v2677, 2
    %v2685 = vsel %vm734, %v2683, %v2684
    %v2686 = vrot.slane %v2676, 2
    %v2687 = vrot.slane %v2678, 2
    %v2688 = vsel %vm734, %v2686, %v2687
    %2689 = vrot.lane.b32.xlu0 %v2685, 126
    %v2690 = vpop.permute.xlu0 %2689
    %2691 = vrot.lane.b32.xlu0 %v2688, 126
    %v2692 = vpop.permute.xlu0 %2691
    %2693 = vrot.lane.b32.xlu0 %v2684, 126
    %v2694 = vpop.permute.xlu0 %2693
    %2695 = vrot.lane.b32.xlu0 %v2687, 126
    %v2696 = vpop.permute.xlu0 %2695
    %v2697 = vsel %vm260, %v2690, %v2692
    %v2698 = vsel %vm260, %v2694, %v2696
    %v2701 = vadd.f32 %v2581, %v2697
    %v2702 = vadd.f32 %v2582, %v2698
    %s2703 = sld [smem:[#allocation9 + $0x87]]
    %v2704 = vstv %s2703
    %v2705 = vmul.f32 %v2704, %v1109
    %v2706 = vmul.f32 %v2704, %v1110
    %v2707 = vmul.f32 %v2704, %v1111
    %v2708 = vmul.f32 %v2704, %v1112
    %v2713 = vrot.slane %v2705, 2
    %v2714 = vrot.slane %v2707, 2
    %v2715 = vsel %vm734, %v2713, %v2714
    %v2716 = vrot.slane %v2706, 2
    %v2717 = vrot.slane %v2708, 2
    %v2718 = vsel %vm734, %v2716, %v2717
    %2719 = vrot.lane.b32.xlu0 %v2715, 126
    %v2720 = vpop.permute.xlu0 %2719
    %2721 = vrot.lane.b32.xlu0 %v2718, 126
    %v2722 = vpop.permute.xlu0 %2721
    %2723 = vrot.lane.b32.xlu0 %v2714, 126
    %v2724 = vpop.permute.xlu0 %2723
    %2725 = vrot.lane.b32.xlu0 %v2717, 126
    %v2726 = vpop.permute.xlu0 %2725
    %v2727 = vsel %vm260, %v2720, %v2722
    %v2728 = vsel %vm260, %v2724, %v2726
    %v2731 = vadd.f32 %v2611, %v2727
    %v2732 = vadd.f32 %v2612, %v2728
    %s2733 = sld [smem:[#allocation9 + $0x8]]
    %v2734 = vstv %s2733
    %v2735 = vmul.f32 %v2734, %v1119
    %v2736 = vmul.f32 %v2734, %v1121
    %v2737 = vadd.f32 %v2641, %v2735
    %v2738 = vadd.f32 %v2642, %v2736
    %s2739 = sld [smem:[#allocation9 + $0x9]]
    %v2740 = vstv %s2739
    %v2741 = vmul.f32 %v2740, %v1119
    %v2742 = vmul.f32 %v2740, %v1121
    %v2743 = vadd.f32 %v2671, %v2741
    %v2744 = vadd.f32 %v2672, %v2742
    %s2745 = sld [smem:[#allocation9 + $0xa]]
    %v2746 = vstv %s2745
    %v2747 = vmul.f32 %v2746, %v1119
    %v2748 = vmul.f32 %v2746, %v1121
    %v2749 = vadd.f32 %v2701, %v2747
    %v2750 = vadd.f32 %v2702, %v2748
    %s2751 = sld [smem:[#allocation9 + $0xb]]
    %v2752 = vstv %s2751
    %v2753 = vmul.f32 %v2752, %v1119
    %v2754 = vmul.f32 %v2752, %v1121
    %v2755 = vadd.f32 %v2731, %v2753
    %v2756 = vadd.f32 %v2732, %v2754
    %s2757 = sld [smem:[#allocation9 + $0x18]]
    %v2758 = vstv %s2757
    %v2759 = vmul.f32 %v2758, %v1119
    %v2760 = vmul.f32 %v2758, %v1120
    %v2761 = vmul.f32 %v2758, %v1121
    %v2762 = vmul.f32 %v2758, %v1122
    %2767 = vrot.lane.b32.xlu0 %v2759, 127
    %v2768 = vpop.permute.xlu0 %2767
    %2769 = vrot.lane.b32.xlu0 %v2760, 127
    %v2770 = vpop.permute.xlu0 %2769
    %2771 = vrot.lane.b32.xlu0 %v2761, 127
    %v2772 = vpop.permute.xlu0 %2771
    %2773 = vrot.lane.b32.xlu0 %v2762, 127
    %v2774 = vpop.permute.xlu0 %2773
    %v2775 = vsel %vm147, %v2768, %v2770
    %v2776 = vsel %vm147, %v2772, %v2774
    %v2779 = vadd.f32 %v2737, %v2775
    %v2780 = vadd.f32 %v2738, %v2776
    %s2781 = sld [smem:[#allocation9 + $0x19]]
    %v2782 = vstv %s2781
    %v2783 = vmul.f32 %v2782, %v1119
    %v2784 = vmul.f32 %v2782, %v1120
    %v2785 = vmul.f32 %v2782, %v1121
    %v2786 = vmul.f32 %v2782, %v1122
    %2791 = vrot.lane.b32.xlu0 %v2783, 127
    %v2792 = vpop.permute.xlu0 %2791
    %2793 = vrot.lane.b32.xlu0 %v2784, 127
    %v2794 = vpop.permute.xlu0 %2793
    %2795 = vrot.lane.b32.xlu0 %v2785, 127
    %v2796 = vpop.permute.xlu0 %2795
    %2797 = vrot.lane.b32.xlu0 %v2786, 127
    %v2798 = vpop.permute.xlu0 %2797
    %v2799 = vsel %vm147, %v2792, %v2794
    %v2800 = vsel %vm147, %v2796, %v2798
    %v2803 = vadd.f32 %v2743, %v2799
    %v2804 = vadd.f32 %v2744, %v2800
    %s2805 = sld [smem:[#allocation9 + $0x1a]]
    %v2806 = vstv %s2805
    %v2807 = vmul.f32 %v2806, %v1119
    %v2808 = vmul.f32 %v2806, %v1120
    %v2809 = vmul.f32 %v2806, %v1121
    %v2810 = vmul.f32 %v2806, %v1122
    %2815 = vrot.lane.b32.xlu0 %v2807, 127
    %v2816 = vpop.permute.xlu0 %2815
    %2817 = vrot.lane.b32.xlu0 %v2808, 127
    %v2818 = vpop.permute.xlu0 %2817
    %2819 = vrot.lane.b32.xlu0 %v2809, 127
    %v2820 = vpop.permute.xlu0 %2819
    %2821 = vrot.lane.b32.xlu0 %v2810, 127
    %v2822 = vpop.permute.xlu0 %2821
    %v2823 = vsel %vm147, %v2816, %v2818
    %v2824 = vsel %vm147, %v2820, %v2822
    %v2827 = vadd.f32 %v2749, %v2823
    %v2828 = vadd.f32 %v2750, %v2824
    %s2829 = sld [smem:[#allocation9 + $0x1b]]
    %v2830 = vstv %s2829
    %v2831 = vmul.f32 %v2830, %v1119
    %v2832 = vmul.f32 %v2830, %v1120
    %v2833 = vmul.f32 %v2830, %v1121
    %v2834 = vmul.f32 %v2830, %v1122
    %2839 = vrot.lane.b32.xlu0 %v2831, 127
    %v2840 = vpop.permute.xlu0 %2839
    %2841 = vrot.lane.b32.xlu0 %v2832, 127
    %v2842 = vpop.permute.xlu0 %2841
    %2843 = vrot.lane.b32.xlu0 %v2833, 127
    %v2844 = vpop.permute.xlu0 %2843
    %2845 = vrot.lane.b32.xlu0 %v2834, 127
    %v2846 = vpop.permute.xlu0 %2845
    %v2847 = vsel %vm147, %v2840, %v2842
    %v2848 = vsel %vm147, %v2844, %v2846
    %v2851 = vadd.f32 %v2755, %v2847
    %v2852 = vadd.f32 %v2756, %v2848
    %s2853 = sld [smem:[#allocation9 + $0x28]]
    %v2854 = vstv %s2853
    %v2855 = vmul.f32 %v2854, %v1119
    %v2856 = vmul.f32 %v2854, %v1120
    %v2857 = vmul.f32 %v2854, %v1121
    %v2858 = vmul.f32 %v2854, %v1122
    %2863 = vrot.lane.b32.xlu0 %v2855, 126
    %v2864 = vpop.permute.xlu0 %2863
    %2865 = vrot.lane.b32.xlu0 %v2856, 126
    %v2866 = vpop.permute.xlu0 %2865
    %2867 = vrot.lane.b32.xlu0 %v2857, 126
    %v2868 = vpop.permute.xlu0 %2867
    %2869 = vrot.lane.b32.xlu0 %v2858, 126
    %v2870 = vpop.permute.xlu0 %2869
    %v2871 = vsel %vm260, %v2864, %v2866
    %v2872 = vsel %vm260, %v2868, %v2870
    %v2875 = vadd.f32 %v2779, %v2871
    %v2876 = vadd.f32 %v2780, %v2872
    %s2877 = sld [smem:[#allocation9 + $0x29]]
    %v2878 = vstv %s2877
    %v2879 = vmul.f32 %v2878, %v1119
    %v2880 = vmul.f32 %v2878, %v1120
    %v2881 = vmul.f32 %v2878, %v1121
    %v2882 = vmul.f32 %v2878, %v1122
    %2887 = vrot.lane.b32.xlu0 %v2879, 126
    %v2888 = vpop.permute.xlu0 %2887
    %2889 = vrot.lane.b32.xlu0 %v2880, 126
    %v2890 = vpop.permute.xlu0 %2889
    %2891 = vrot.lane.b32.xlu0 %v2881, 126
    %v2892 = vpop.permute.xlu0 %2891
    %2893 = vrot.lane.b32.xlu0 %v2882, 126
    %v2894 = vpop.permute.xlu0 %2893
    %v2895 = vsel %vm260, %v2888, %v2890
    %v2896 = vsel %vm260, %v2892, %v2894
    %v2899 = vadd.f32 %v2803, %v2895
    %v2900 = vadd.f32 %v2804, %v2896
    %s2901 = sld [smem:[#allocation9 + $0x2a]]
    %v2902 = vstv %s2901
    %v2903 = vmul.f32 %v2902, %v1119
    %v2904 = vmul.f32 %v2902, %v1120
    %v2905 = vmul.f32 %v2902, %v1121
    %v2906 = vmul.f32 %v2902, %v1122
    %2911 = vrot.lane.b32.xlu0 %v2903, 126
    %v2912 = vpop.permute.xlu0 %2911
    %2913 = vrot.lane.b32.xlu0 %v2904, 126
    %v2914 = vpop.permute.xlu0 %2913
    %2915 = vrot.lane.b32.xlu0 %v2905, 126
    %v2916 = vpop.permute.xlu0 %2915
    %2917 = vrot.lane.b32.xlu0 %v2906, 126
    %v2918 = vpop.permute.xlu0 %2917
    %v2919 = vsel %vm260, %v2912, %v2914
    %v2920 = vsel %vm260, %v2916, %v2918
    %v2923 = vadd.f32 %v2827, %v2919
    %v2924 = vadd.f32 %v2828, %v2920
    %s2925 = sld [smem:[#allocation9 + $0x2b]]
    %v2926 = vstv %s2925
    %v2927 = vmul.f32 %v2926, %v1119
    %v2928 = vmul.f32 %v2926, %v1120
    %v2929 = vmul.f32 %v2926, %v1121
    %v2930 = vmul.f32 %v2926, %v1122
    %2935 = vrot.lane.b32.xlu0 %v2927, 126
    %v2936 = vpop.permute.xlu0 %2935
    %2937 = vrot.lane.b32.xlu0 %v2928, 126
    %v2938 = vpop.permute.xlu0 %2937
    %2939 = vrot.lane.b32.xlu0 %v2929, 126
    %v2940 = vpop.permute.xlu0 %2939
    %2941 = vrot.lane.b32.xlu0 %v2930, 126
    %v2942 = vpop.permute.xlu0 %2941
    %v2943 = vsel %vm260, %v2936, %v2938
    %v2944 = vsel %vm260, %v2940, %v2942
    %v2947 = vadd.f32 %v2851, %v2943
    %v2948 = vadd.f32 %v2852, %v2944
    %s2949 = sld [smem:[#allocation9 + $0x38]]
    %v2950 = vstv %s2949
    %v2951 = vmul.f32 %v2950, %v1119
    %v2952 = vmul.f32 %v2950, %v1121
    %v2955 = vrot.slane %v2951, 1
    %v2956 = vrot.slane %v2952, 1
    %v2957 = vsel %vm365, %v2955, %v2956
    %v2960 = vadd.f32 %v2875, %v2957
    %v2961 = vadd.f32 %v2876, %v2956
    %s2962 = sld [smem:[#allocation9 + $0x39]]
    %v2963 = vstv %s2962
    %v2964 = vmul.f32 %v2963, %v1119
    %v2965 = vmul.f32 %v2963, %v1121
    %v2968 = vrot.slane %v2964, 1
    %v2969 = vrot.slane %v2965, 1
    %v2970 = vsel %vm365, %v2968, %v2969
    %v2973 = vadd.f32 %v2899, %v2970
    %v2974 = vadd.f32 %v2900, %v2969
    %s2975 = sld [smem:[#allocation9 + $0x3a]]
    %v2976 = vstv %s2975
    %v2977 = vmul.f32 %v2976, %v1119
    %v2978 = vmul.f32 %v2976, %v1121
    %v2981 = vrot.slane %v2977, 1
    %v2982 = vrot.slane %v2978, 1
    %v2983 = vsel %vm365, %v2981, %v2982
    %v2986 = vadd.f32 %v2923, %v2983
    %v2987 = vadd.f32 %v2924, %v2982
    %s2988 = sld [smem:[#allocation9 + $0x3b]]
    %v2989 = vstv %s2988
    %v2990 = vmul.f32 %v2989, %v1119
    %v2991 = vmul.f32 %v2989, %v1121
    %v2994 = vrot.slane %v2990, 1
    %v2995 = vrot.slane %v2991, 1
    %v2996 = vsel %vm365, %v2994, %v2995
    %v2999 = vadd.f32 %v2947, %v2996
    %v3000 = vadd.f32 %v2948, %v2995
    %s3001 = sld [smem:[#allocation9 + $0x48]]
    %v3002 = vstv %s3001
    %v3003 = vmul.f32 %v3002, %v1119
    %v3004 = vmul.f32 %v3002, %v1120
    %v3005 = vmul.f32 %v3002, %v1121
    %v3006 = vmul.f32 %v3002, %v1122
    %v3011 = vrot.slane %v3003, 1
    %v3012 = vrot.slane %v3005, 1
    %v3013 = vsel %vm365, %v3011, %v3012
    %v3014 = vrot.slane %v3004, 1
    %v3015 = vrot.slane %v3006, 1
    %v3016 = vsel %vm365, %v3014, %v3015
    %3017 = vrot.lane.b32.xlu0 %v3013, 127
    %v3018 = vpop.permute.xlu0 %3017
    %3019 = vrot.lane.b32.xlu0 %v3016, 127
    %v3020 = vpop.permute.xlu0 %3019
    %3021 = vrot.lane.b32.xlu0 %v3012, 127
    %v3022 = vpop.permute.xlu0 %3021
    %3023 = vrot.lane.b32.xlu0 %v3015, 127
    %v3024 = vpop.permute.xlu0 %3023
    %v3025 = vsel %vm147, %v3018, %v3020
    %v3026 = vsel %vm147, %v3022, %v3024
    %v3029 = vadd.f32 %v2960, %v3025
    %v3030 = vadd.f32 %v2961, %v3026
    %s3031 = sld [smem:[#allocation9 + $0x49]]
    %v3032 = vstv %s3031
    %v3033 = vmul.f32 %v3032, %v1119
    %v3034 = vmul.f32 %v3032, %v1120
    %v3035 = vmul.f32 %v3032, %v1121
    %v3036 = vmul.f32 %v3032, %v1122
    %v3041 = vrot.slane %v3033, 1
    %v3042 = vrot.slane %v3035, 1
    %v3043 = vsel %vm365, %v3041, %v3042
    %v3044 = vrot.slane %v3034, 1
    %v3045 = vrot.slane %v3036, 1
    %v3046 = vsel %vm365, %v3044, %v3045
    %3047 = vrot.lane.b32.xlu0 %v3043, 127
    %v3048 = vpop.permute.xlu0 %3047
    %3049 = vrot.lane.b32.xlu0 %v3046, 127
    %v3050 = vpop.permute.xlu0 %3049
    %3051 = vrot.lane.b32.xlu0 %v3042, 127
    %v3052 = vpop.permute.xlu0 %3051
    %3053 = vrot.lane.b32.xlu0 %v3045, 127
    %v3054 = vpop.permute.xlu0 %3053
    %v3055 = vsel %vm147, %v3048, %v3050
    %v3056 = vsel %vm147, %v3052, %v3054
    %v3059 = vadd.f32 %v2973, %v3055
    %v3060 = vadd.f32 %v2974, %v3056
    %s3061 = sld [smem:[#allocation9 + $0x4a]]
    %v3062 = vstv %s3061
    %v3063 = vmul.f32 %v3062, %v1119
    %v3064 = vmul.f32 %v3062, %v1120
    %v3065 = vmul.f32 %v3062, %v1121
    %v3066 = vmul.f32 %v3062, %v1122
    %v3071 = vrot.slane %v3063, 1
    %v3072 = vrot.slane %v3065, 1
    %v3073 = vsel %vm365, %v3071, %v3072
    %v3074 = vrot.slane %v3064, 1
    %v3075 = vrot.slane %v3066, 1
    %v3076 = vsel %vm365, %v3074, %v3075
    %3077 = vrot.lane.b32.xlu0 %v3073, 127
    %v3078 = vpop.permute.xlu0 %3077
    %3079 = vrot.lane.b32.xlu0 %v3076, 127
    %v3080 = vpop.permute.xlu0 %3079
    %3081 = vrot.lane.b32.xlu0 %v3072, 127
    %v3082 = vpop.permute.xlu0 %3081
    %3083 = vrot.lane.b32.xlu0 %v3075, 127
    %v3084 = vpop.permute.xlu0 %3083
    %v3085 = vsel %vm147, %v3078, %v3080
    %v3086 = vsel %vm147, %v3082, %v3084
    %v3089 = vadd.f32 %v2986, %v3085
    %v3090 = vadd.f32 %v2987, %v3086
    %s3091 = sld [smem:[#allocation9 + $0x4b]]
    %v3092 = vstv %s3091
    %v3093 = vmul.f32 %v3092, %v1119
    %v3094 = vmul.f32 %v3092, %v1120
    %v3095 = vmul.f32 %v3092, %v1121
    %v3096 = vmul.f32 %v3092, %v1122
    %v3101 = vrot.slane %v3093, 1
    %v3102 = vrot.slane %v3095, 1
    %v3103 = vsel %vm365, %v3101, %v3102
    %v3104 = vrot.slane %v3094, 1
    %v3105 = vrot.slane %v3096, 1
    %v3106 = vsel %vm365, %v3104, %v3105
    %3107 = vrot.lane.b32.xlu0 %v3103, 127
    %v3108 = vpop.permute.xlu0 %3107
    %3109 = vrot.lane.b32.xlu0 %v3106, 127
    %v3110 = vpop.permute.xlu0 %3109
    %3111 = vrot.lane.b32.xlu0 %v3102, 127
    %v3112 = vpop.permute.xlu0 %3111
    %3113 = vrot.lane.b32.xlu0 %v3105, 127
    %v3114 = vpop.permute.xlu0 %3113
    %v3115 = vsel %vm147, %v3108, %v3110
    %v3116 = vsel %vm147, %v3112, %v3114
    %v3119 = vadd.f32 %v2999, %v3115
    %v3120 = vadd.f32 %v3000, %v3116
    %s3121 = sld [smem:[#allocation9 + $0x58]]
    %v3122 = vstv %s3121
    %v3123 = vmul.f32 %v3122, %v1119
    %v3124 = vmul.f32 %v3122, %v1120
    %v3125 = vmul.f32 %v3122, %v1121
    %v3126 = vmul.f32 %v3122, %v1122
    %v3131 = vrot.slane %v3123, 1
    %v3132 = vrot.slane %v3125, 1
    %v3133 = vsel %vm365, %v3131, %v3132
    %v3134 = vrot.slane %v3124, 1
    %v3135 = vrot.slane %v3126, 1
    %v3136 = vsel %vm365, %v3134, %v3135
    %3137 = vrot.lane.b32.xlu0 %v3133, 126
    %v3138 = vpop.permute.xlu0 %3137
    %3139 = vrot.lane.b32.xlu0 %v3136, 126
    %v3140 = vpop.permute.xlu0 %3139
    %3141 = vrot.lane.b32.xlu0 %v3132, 126
    %v3142 = vpop.permute.xlu0 %3141
    %3143 = vrot.lane.b32.xlu0 %v3135, 126
    %v3144 = vpop.permute.xlu0 %3143
    %v3145 = vsel %vm260, %v3138, %v3140
    %v3146 = vsel %vm260, %v3142, %v3144
    %v3149 = vadd.f32 %v3029, %v3145
    %v3150 = vadd.f32 %v3030, %v3146
    %s3151 = sld [smem:[#allocation9 + $0x59]]
    %v3152 = vstv %s3151
    %v3153 = vmul.f32 %v3152, %v1119
    %v3154 = vmul.f32 %v3152, %v1120
    %v3155 = vmul.f32 %v3152, %v1121
    %v3156 = vmul.f32 %v3152, %v1122
    %v3161 = vrot.slane %v3153, 1
    %v3162 = vrot.slane %v3155, 1
    %v3163 = vsel %vm365, %v3161, %v3162
    %v3164 = vrot.slane %v3154, 1
    %v3165 = vrot.slane %v3156, 1
    %v3166 = vsel %vm365, %v3164, %v3165
    %3167 = vrot.lane.b32.xlu0 %v3163, 126
    %v3168 = vpop.permute.xlu0 %3167
    %3169 = vrot.lane.b32.xlu0 %v3166, 126
    %v3170 = vpop.permute.xlu0 %3169
    %3171 = vrot.lane.b32.xlu0 %v3162, 126
    %v3172 = vpop.permute.xlu0 %3171
    %3173 = vrot.lane.b32.xlu0 %v3165, 126
    %v3174 = vpop.permute.xlu0 %3173
    %v3175 = vsel %vm260, %v3168, %v3170
    %v3176 = vsel %vm260, %v3172, %v3174
    %v3179 = vadd.f32 %v3059, %v3175
    %v3180 = vadd.f32 %v3060, %v3176
    %s3181 = sld [smem:[#allocation9 + $0x5a]]
    %v3182 = vstv %s3181
    %v3183 = vmul.f32 %v3182, %v1119
    %v3184 = vmul.f32 %v3182, %v1120
    %v3185 = vmul.f32 %v3182, %v1121
    %v3186 = vmul.f32 %v3182, %v1122
    %v3191 = vrot.slane %v3183, 1
    %v3192 = vrot.slane %v3185, 1
    %v3193 = vsel %vm365, %v3191, %v3192
    %v3194 = vrot.slane %v3184, 1
    %v3195 = vrot.slane %v3186, 1
    %v3196 = vsel %vm365, %v3194, %v3195
    %3197 = vrot.lane.b32.xlu0 %v3193, 126
    %v3198 = vpop.permute.xlu0 %3197
    %3199 = vrot.lane.b32.xlu0 %v3196, 126
    %v3200 = vpop.permute.xlu0 %3199
    %3201 = vrot.lane.b32.xlu0 %v3192, 126
    %v3202 = vpop.permute.xlu0 %3201
    %3203 = vrot.lane.b32.xlu0 %v3195, 126
    %v3204 = vpop.permute.xlu0 %3203
    %v3205 = vsel %vm260, %v3198, %v3200
    %v3206 = vsel %vm260, %v3202, %v3204
    %v3209 = vadd.f32 %v3089, %v3205
    %v3210 = vadd.f32 %v3090, %v3206
    %s3211 = sld [smem:[#allocation9 + $0x5b]]
    %v3212 = vstv %s3211
    %v3213 = vmul.f32 %v3212, %v1119
    %v3214 = vmul.f32 %v3212, %v1120
    %v3215 = vmul.f32 %v3212, %v1121
    %v3216 = vmul.f32 %v3212, %v1122
    %v3221 = vrot.slane %v3213, 1
    %v3222 = vrot.slane %v3215, 1
    %v3223 = vsel %vm365, %v3221, %v3222
    %v3224 = vrot.slane %v3214, 1
    %v3225 = vrot.slane %v3216, 1
    %v3226 = vsel %vm365, %v3224, %v3225
    %3227 = vrot.lane.b32.xlu0 %v3223, 126
    %v3228 = vpop.permute.xlu0 %3227
    %3229 = vrot.lane.b32.xlu0 %v3226, 126
    %v3230 = vpop.permute.xlu0 %3229
    %3231 = vrot.lane.b32.xlu0 %v3222, 126
    %v3232 = vpop.permute.xlu0 %3231
    %3233 = vrot.lane.b32.xlu0 %v3225, 126
    %v3234 = vpop.permute.xlu0 %3233
    %v3235 = vsel %vm260, %v3228, %v3230
    %v3236 = vsel %vm260, %v3232, %v3234
    %v3239 = vadd.f32 %v3119, %v3235
    %v3240 = vadd.f32 %v3120, %v3236
    %s3241 = sld [smem:[#allocation9 + $0x68]]
    %v3242 = vstv %s3241
    %v3243 = vmul.f32 %v3242, %v1119
    %v3244 = vmul.f32 %v3242, %v1121
    %v3247 = vrot.slane %v3243, 2
    %v3248 = vrot.slane %v3244, 2
    %v3249 = vsel %vm734, %v3247, %v3248
    %v3252 = vadd.f32 %v3149, %v3249
    %v3253 = vadd.f32 %v3150, %v3248
    %s3254 = sld [smem:[#allocation9 + $0x69]]
    %v3255 = vstv %s3254
    %v3256 = vmul.f32 %v3255, %v1119
    %v3257 = vmul.f32 %v3255, %v1121
    %v3260 = vrot.slane %v3256, 2
    %v3261 = vrot.slane %v3257, 2
    %v3262 = vsel %vm734, %v3260, %v3261
    %v3265 = vadd.f32 %v3179, %v3262
    %v3266 = vadd.f32 %v3180, %v3261
    %s3267 = sld [smem:[#allocation9 + $0x6a]]
    %v3268 = vstv %s3267
    %v3269 = vmul.f32 %v3268, %v1119
    %v3270 = vmul.f32 %v3268, %v1121
    %v3273 = vrot.slane %v3269, 2
    %v3274 = vrot.slane %v3270, 2
    %v3275 = vsel %vm734, %v3273, %v3274
    %v3278 = vadd.f32 %v3209, %v3275
    %v3279 = vadd.f32 %v3210, %v3274
    %s3280 = sld [smem:[#allocation9 + $0x6b]]
    %v3281 = vstv %s3280
    %v3282 = vmul.f32 %v3281, %v1119
    %v3283 = vmul.f32 %v3281, %v1121
    %v3286 = vrot.slane %v3282, 2
    %v3287 = vrot.slane %v3283, 2
    %v3288 = vsel %vm734, %v3286, %v3287
    %v3291 = vadd.f32 %v3239, %v3288
    %v3292 = vadd.f32 %v3240, %v3287
    %s3293 = sld [smem:[#allocation9 + $0x78]]
    %v3294 = vstv %s3293
    %v3295 = vmul.f32 %v3294, %v1119
    %v3296 = vmul.f32 %v3294, %v1120
    %v3297 = vmul.f32 %v3294, %v1121
    %v3298 = vmul.f32 %v3294, %v1122
    %v3303 = vrot.slane %v3295, 2
    %v3304 = vrot.slane %v3297, 2
    %v3305 = vsel %vm734, %v3303, %v3304
    %v3306 = vrot.slane %v3296, 2
    %v3307 = vrot.slane %v3298, 2
    %v3308 = vsel %vm734, %v3306, %v3307
    %3309 = vrot.lane.b32.xlu0 %v3305, 127
    %v3310 = vpop.permute.xlu0 %3309
    %3311 = vrot.lane.b32.xlu0 %v3308, 127
    %v3312 = vpop.permute.xlu0 %3311
    %3313 = vrot.lane.b32.xlu0 %v3304, 127
    %v3314 = vpop.permute.xlu0 %3313
    %3315 = vrot.lane.b32.xlu0 %v3307, 127
    %v3316 = vpop.permute.xlu0 %3315
    %v3317 = vsel %vm147, %v3310, %v3312
    %v3318 = vsel %vm147, %v3314, %v3316
    %v3321 = vadd.f32 %v3252, %v3317
    %v3322 = vadd.f32 %v3253, %v3318
    %s3323 = sld [smem:[#allocation9 + $0x79]]
    %v3324 = vstv %s3323
    %v3325 = vmul.f32 %v3324, %v1119
    %v3326 = vmul.f32 %v3324, %v1120
    %v3327 = vmul.f32 %v3324, %v1121
    %v3328 = vmul.f32 %v3324, %v1122
    %v3333 = vrot.slane %v3325, 2
    %v3334 = vrot.slane %v3327, 2
    %v3335 = vsel %vm734, %v3333, %v3334
    %v3336 = vrot.slane %v3326, 2
    %v3337 = vrot.slane %v3328, 2
    %v3338 = vsel %vm734, %v3336, %v3337
    %3339 = vrot.lane.b32.xlu0 %v3335, 127
    %v3340 = vpop.permute.xlu0 %3339
    %3341 = vrot.lane.b32.xlu0 %v3338, 127
    %v3342 = vpop.permute.xlu0 %3341
    %3343 = vrot.lane.b32.xlu0 %v3334, 127
    %v3344 = vpop.permute.xlu0 %3343
    %3345 = vrot.lane.b32.xlu0 %v3337, 127
    %v3346 = vpop.permute.xlu0 %3345
    %v3347 = vsel %vm147, %v3340, %v3342
    %v3348 = vsel %vm147, %v3344, %v3346
    %v3351 = vadd.f32 %v3265, %v3347
    %v3352 = vadd.f32 %v3266, %v3348
    %s3353 = sld [smem:[#allocation9 + $0x7a]]
    %v3354 = vstv %s3353
    %v3355 = vmul.f32 %v3354, %v1119
    %v3356 = vmul.f32 %v3354, %v1120
    %v3357 = vmul.f32 %v3354, %v1121
    %v3358 = vmul.f32 %v3354, %v1122
    %v3363 = vrot.slane %v3355, 2
    %v3364 = vrot.slane %v3357, 2
    %v3365 = vsel %vm734, %v3363, %v3364
    %v3366 = vrot.slane %v3356, 2
    %v3367 = vrot.slane %v3358, 2
    %v3368 = vsel %vm734, %v3366, %v3367
    %3369 = vrot.lane.b32.xlu0 %v3365, 127
    %v3370 = vpop.permute.xlu0 %3369
    %3371 = vrot.lane.b32.xlu0 %v3368, 127
    %v3372 = vpop.permute.xlu0 %3371
    %3373 = vrot.lane.b32.xlu0 %v3364, 127
    %v3374 = vpop.permute.xlu0 %3373
    %3375 = vrot.lane.b32.xlu0 %v3367, 127
    %v3376 = vpop.permute.xlu0 %3375
    %v3377 = vsel %vm147, %v3370, %v3372
    %v3378 = vsel %vm147, %v3374, %v3376
    %v3381 = vadd.f32 %v3278, %v3377
    %v3382 = vadd.f32 %v3279, %v3378
    %s3383 = sld [smem:[#allocation9 + $0x7b]]
    %v3384 = vstv %s3383
    %v3385 = vmul.f32 %v3384, %v1119
    %v3386 = vmul.f32 %v3384, %v1120
    %v3387 = vmul.f32 %v3384, %v1121
    %v3388 = vmul.f32 %v3384, %v1122
    %v3393 = vrot.slane %v3385, 2
    %v3394 = vrot.slane %v3387, 2
    %v3395 = vsel %vm734, %v3393, %v3394
    %v3396 = vrot.slane %v3386, 2
    %v3397 = vrot.slane %v3388, 2
    %v3398 = vsel %vm734, %v3396, %v3397
    %3399 = vrot.lane.b32.xlu0 %v3395, 127
    %v3400 = vpop.permute.xlu0 %3399
    %3401 = vrot.lane.b32.xlu0 %v3398, 127
    %v3402 = vpop.permute.xlu0 %3401
    %3403 = vrot.lane.b32.xlu0 %v3394, 127
    %v3404 = vpop.permute.xlu0 %3403
    %3405 = vrot.lane.b32.xlu0 %v3397, 127
    %v3406 = vpop.permute.xlu0 %3405
    %v3407 = vsel %vm147, %v3400, %v3402
    %v3408 = vsel %vm147, %v3404, %v3406
    %v3411 = vadd.f32 %v3291, %v3407
    %v3412 = vadd.f32 %v3292, %v3408
    %s3413 = sld [smem:[#allocation9 + $0x88]]
    %v3414 = vstv %s3413
    %v3415 = vmul.f32 %v3414, %v1119
    %v3416 = vmul.f32 %v3414, %v1120
    %v3417 = vmul.f32 %v3414, %v1121
    %v3418 = vmul.f32 %v3414, %v1122
    %v3423 = vrot.slane %v3415, 2
    %v3424 = vrot.slane %v3417, 2
    %v3425 = vsel %vm734, %v3423, %v3424
    %v3426 = vrot.slane %v3416, 2
    %v3427 = vrot.slane %v3418, 2
    %v3428 = vsel %vm734, %v3426, %v3427
    %3429 = vrot.lane.b32.xlu0 %v3425, 126
    %v3430 = vpop.permute.xlu0 %3429
    %3431 = vrot.lane.b32.xlu0 %v3428, 126
    %v3432 = vpop.permute.xlu0 %3431
    %3433 = vrot.lane.b32.xlu0 %v3424, 126
    %v3434 = vpop.permute.xlu0 %3433
    %3435 = vrot.lane.b32.xlu0 %v3427, 126
    %v3436 = vpop.permute.xlu0 %3435
    %v3437 = vsel %vm260, %v3430, %v3432
    %v3438 = vsel %vm260, %v3434, %v3436
    %v3441 = vadd.f32 %v3321, %v3437
    %v3442 = vadd.f32 %v3322, %v3438
    %s3443 = sld [smem:[#allocation9 + $0x89]]
    %v3444 = vstv %s3443
    %v3445 = vmul.f32 %v3444, %v1119
    %v3446 = vmul.f32 %v3444, %v1120
    %v3447 = vmul.f32 %v3444, %v1121
    %v3448 = vmul.f32 %v3444, %v1122
    %v3453 = vrot.slane %v3445, 2
    %v3454 = vrot.slane %v3447, 2
    %v3455 = vsel %vm734, %v3453, %v3454
    %v3456 = vrot.slane %v3446, 2
    %v3457 = vrot.slane %v3448, 2
    %v3458 = vsel %vm734, %v3456, %v3457
    %3459 = vrot.lane.b32.xlu0 %v3455, 126
    %v3460 = vpop.permute.xlu0 %3459
    %3461 = vrot.lane.b32.xlu0 %v3458, 126
    %v3462 = vpop.permute.xlu0 %3461
    %3463 = vrot.lane.b32.xlu0 %v3454, 126
    %v3464 = vpop.permute.xlu0 %3463
    %3465 = vrot.lane.b32.xlu0 %v3457, 126
    %v3466 = vpop.permute.xlu0 %3465
    %v3467 = vsel %vm260, %v3460, %v3462
    %v3468 = vsel %vm260, %v3464, %v3466
    %v3471 = vadd.f32 %v3351, %v3467
    %v3472 = vadd.f32 %v3352, %v3468
    %s3473 = sld [smem:[#allocation9 + $0x8a]]
    %v3474 = vstv %s3473
    %v3475 = vmul.f32 %v3474, %v1119
    %v3476 = vmul.f32 %v3474, %v1120
    %v3477 = vmul.f32 %v3474, %v1121
    %v3478 = vmul.f32 %v3474, %v1122
    %v3483 = vrot.slane %v3475, 2
    %v3484 = vrot.slane %v3477, 2
    %v3485 = vsel %vm734, %v3483, %v3484
    %v3486 = vrot.slane %v3476, 2
    %v3487 = vrot.slane %v3478, 2
    %v3488 = vsel %vm734, %v3486, %v3487
    %3489 = vrot.lane.b32.xlu0 %v3485, 126
    %v3490 = vpop.permute.xlu0 %3489
    %3491 = vrot.lane.b32.xlu0 %v3488, 126
    %v3492 = vpop.permute.xlu0 %3491
    %3493 = vrot.lane.b32.xlu0 %v3484, 126
    %v3494 = vpop.permute.xlu0 %3493
    %3495 = vrot.lane.b32.xlu0 %v3487, 126
    %v3496 = vpop.permute.xlu0 %3495
    %v3497 = vsel %vm260, %v3490, %v3492
    %v3498 = vsel %vm260, %v3494, %v3496
    %v3501 = vadd.f32 %v3381, %v3497
    %v3502 = vadd.f32 %v3382, %v3498
    %s3503 = sld [smem:[#allocation9 + $0x8b]]
    %v3504 = vstv %s3503
    %v3505 = vmul.f32 %v3504, %v1119
    %v3506 = vmul.f32 %v3504, %v1120
    %v3507 = vmul.f32 %v3504, %v1121
    %v3508 = vmul.f32 %v3504, %v1122
    %v3513 = vrot.slane %v3505, 2
    %v3514 = vrot.slane %v3507, 2
    %v3515 = vsel %vm734, %v3513, %v3514
    %v3516 = vrot.slane %v3506, 2
    %v3517 = vrot.slane %v3508, 2
    %v3518 = vsel %vm734, %v3516, %v3517
    %3519 = vrot.lane.b32.xlu0 %v3515, 126
    %v3520 = vpop.permute.xlu0 %3519
    %3521 = vrot.lane.b32.xlu0 %v3518, 126
    %v3522 = vpop.permute.xlu0 %3521
    %3523 = vrot.lane.b32.xlu0 %v3514, 126
    %v3524 = vpop.permute.xlu0 %3523
    %3525 = vrot.lane.b32.xlu0 %v3517, 126
    %v3526 = vpop.permute.xlu0 %3525
    %v3527 = vsel %vm260, %v3520, %v3522
    %v3528 = vsel %vm260, %v3524, %v3526
    %v3531 = vadd.f32 %v3411, %v3527
    %v3532 = vadd.f32 %v3412, %v3528
    %s3533 = sld [smem:[#allocation9 + $0xc]]
    %v3534 = vstv %s3533
    %v3535 = vmul.f32 %v3534, %v1129
    %v3536 = vmul.f32 %v3534, %v1131
    %v3537 = vadd.f32 %v3441, %v3535
    %v3538 = vadd.f32 %v3442, %v3536
    %s3539 = sld [smem:[#allocation9 + $0xd]]
    %v3540 = vstv %s3539
    %v3541 = vmul.f32 %v3540, %v1129
    %v3542 = vmul.f32 %v3540, %v1131
    %v3543 = vadd.f32 %v3471, %v3541
    %v3544 = vadd.f32 %v3472, %v3542
    %s3545 = sld [smem:[#allocation9 + $0xe]]
    %v3546 = vstv %s3545
    %v3547 = vmul.f32 %v3546, %v1129
    %v3548 = vmul.f32 %v3546, %v1131
    %v3549 = vadd.f32 %v3501, %v3547
    %v3550 = vadd.f32 %v3502, %v3548
    %s3551 = sld [smem:[#allocation9 + $0xf]]
    %v3552 = vstv %s3551
    %v3553 = vmul.f32 %v3552, %v1129
    %v3554 = vmul.f32 %v3552, %v1131
    %v3555 = vadd.f32 %v3531, %v3553
    %v3556 = vadd.f32 %v3532, %v3554
    %s3557 = sld [smem:[#allocation9 + $0x1c]]
    %v3558 = vstv %s3557
    %v3559 = vmul.f32 %v3558, %v1129
    %v3560 = vmul.f32 %v3558, %v1130
    %v3561 = vmul.f32 %v3558, %v1131
    %v3562 = vmul.f32 %v3558, %v1132
    %3567 = vrot.lane.b32.xlu0 %v3559, 127
    %v3568 = vpop.permute.xlu0 %3567
    %3569 = vrot.lane.b32.xlu0 %v3560, 127
    %v3570 = vpop.permute.xlu0 %3569
    %3571 = vrot.lane.b32.xlu0 %v3561, 127
    %v3572 = vpop.permute.xlu0 %3571
    %3573 = vrot.lane.b32.xlu0 %v3562, 127
    %v3574 = vpop.permute.xlu0 %3573
    %v3575 = vsel %vm147, %v3568, %v3570
    %v3576 = vsel %vm147, %v3572, %v3574
    %v3579 = vadd.f32 %v3537, %v3575
    %v3580 = vadd.f32 %v3538, %v3576
    %s3581 = sld [smem:[#allocation9 + $0x1d]]
    %v3582 = vstv %s3581
    %v3583 = vmul.f32 %v3582, %v1129
    %v3584 = vmul.f32 %v3582, %v1130
    %v3585 = vmul.f32 %v3582, %v1131
    %v3586 = vmul.f32 %v3582, %v1132
    %3591 = vrot.lane.b32.xlu0 %v3583, 127
    %v3592 = vpop.permute.xlu0 %3591
    %3593 = vrot.lane.b32.xlu0 %v3584, 127
    %v3594 = vpop.permute.xlu0 %3593
    %3595 = vrot.lane.b32.xlu0 %v3585, 127
    %v3596 = vpop.permute.xlu0 %3595
    %3597 = vrot.lane.b32.xlu0 %v3586, 127
    %v3598 = vpop.permute.xlu0 %3597
    %v3599 = vsel %vm147, %v3592, %v3594
    %v3600 = vsel %vm147, %v3596, %v3598
    %v3603 = vadd.f32 %v3543, %v3599
    %v3604 = vadd.f32 %v3544, %v3600
    %s3605 = sld [smem:[#allocation9 + $0x1e]]
    %v3606 = vstv %s3605
    %v3607 = vmul.f32 %v3606, %v1129
    %v3608 = vmul.f32 %v3606, %v1130
    %v3609 = vmul.f32 %v3606, %v1131
    %v3610 = vmul.f32 %v3606, %v1132
    %3615 = vrot.lane.b32.xlu0 %v3607, 127
    %v3616 = vpop.permute.xlu0 %3615
    %3617 = vrot.lane.b32.xlu0 %v3608, 127
    %v3618 = vpop.permute.xlu0 %3617
    %3619 = vrot.lane.b32.xlu0 %v3609, 127
    %v3620 = vpop.permute.xlu0 %3619
    %3621 = vrot.lane.b32.xlu0 %v3610, 127
    %v3622 = vpop.permute.xlu0 %3621
    %v3623 = vsel %vm147, %v3616, %v3618
    %v3624 = vsel %vm147, %v3620, %v3622
    %v3627 = vadd.f32 %v3549, %v3623
    %v3628 = vadd.f32 %v3550, %v3624
    %s3629 = sld [smem:[#allocation9 + $0x1f]]
    %v3630 = vstv %s3629
    %v3631 = vmul.f32 %v3630, %v1129
    %v3632 = vmul.f32 %v3630, %v1130
    %v3633 = vmul.f32 %v3630, %v1131
    %v3634 = vmul.f32 %v3630, %v1132
    %3639 = vrot.lane.b32.xlu0 %v3631, 127
    %v3640 = vpop.permute.xlu0 %3639
    %3641 = vrot.lane.b32.xlu0 %v3632, 127
    %v3642 = vpop.permute.xlu0 %3641
    %3643 = vrot.lane.b32.xlu0 %v3633, 127
    %v3644 = vpop.permute.xlu0 %3643
    %3645 = vrot.lane.b32.xlu0 %v3634, 127
    %v3646 = vpop.permute.xlu0 %3645
    %v3647 = vsel %vm147, %v3640, %v3642
    %v3648 = vsel %vm147, %v3644, %v3646
    %v3651 = vadd.f32 %v3555, %v3647
    %v3652 = vadd.f32 %v3556, %v3648
    %s3653 = sld [smem:[#allocation9 + $0x2c]]
    %v3654 = vstv %s3653
    %v3655 = vmul.f32 %v3654, %v1129
    %v3656 = vmul.f32 %v3654, %v1130
    %v3657 = vmul.f32 %v3654, %v1131
    %v3658 = vmul.f32 %v3654, %v1132
    %3663 = vrot.lane.b32.xlu0 %v3655, 126
    %v3664 = vpop.permute.xlu0 %3663
    %3665 = vrot.lane.b32.xlu0 %v3656, 126
    %v3666 = vpop.permute.xlu0 %3665
    %3667 = vrot.lane.b32.xlu0 %v3657, 126
    %v3668 = vpop.permute.xlu0 %3667
    %3669 = vrot.lane.b32.xlu0 %v3658, 126
    %v3670 = vpop.permute.xlu0 %3669
    %v3671 = vsel %vm260, %v3664, %v3666
    %v3672 = vsel %vm260, %v3668, %v3670
    %v3675 = vadd.f32 %v3579, %v3671
    %v3676 = vadd.f32 %v3580, %v3672
    %s3677 = sld [smem:[#allocation9 + $0x2d]]
    %v3678 = vstv %s3677
    %v3679 = vmul.f32 %v3678, %v1129
    %v3680 = vmul.f32 %v3678, %v1130
    %v3681 = vmul.f32 %v3678, %v1131
    %v3682 = vmul.f32 %v3678, %v1132
    %3687 = vrot.lane.b32.xlu0 %v3679, 126
    %v3688 = vpop.permute.xlu0 %3687
    %3689 = vrot.lane.b32.xlu0 %v3680, 126
    %v3690 = vpop.permute.xlu0 %3689
    %3691 = vrot.lane.b32.xlu0 %v3681, 126
    %v3692 = vpop.permute.xlu0 %3691
    %3693 = vrot.lane.b32.xlu0 %v3682, 126
    %v3694 = vpop.permute.xlu0 %3693
    %v3695 = vsel %vm260, %v3688, %v3690
    %v3696 = vsel %vm260, %v3692, %v3694
    %v3699 = vadd.f32 %v3603, %v3695
    %v3700 = vadd.f32 %v3604, %v3696
    %s3701 = sld [smem:[#allocation9 + $0x2e]]
    %v3702 = vstv %s3701
    %v3703 = vmul.f32 %v3702, %v1129
    %v3704 = vmul.f32 %v3702, %v1130
    %v3705 = vmul.f32 %v3702, %v1131
    %v3706 = vmul.f32 %v3702, %v1132
    %3711 = vrot.lane.b32.xlu0 %v3703, 126
    %v3712 = vpop.permute.xlu0 %3711
    %3713 = vrot.lane.b32.xlu0 %v3704, 126
    %v3714 = vpop.permute.xlu0 %3713
    %3715 = vrot.lane.b32.xlu0 %v3705, 126
    %v3716 = vpop.permute.xlu0 %3715
    %3717 = vrot.lane.b32.xlu0 %v3706, 126
    %v3718 = vpop.permute.xlu0 %3717
    %v3719 = vsel %vm260, %v3712, %v3714
    %v3720 = vsel %vm260, %v3716, %v3718
    %v3723 = vadd.f32 %v3627, %v3719
    %v3724 = vadd.f32 %v3628, %v3720
    %s3725 = sld [smem:[#allocation9 + $0x2f]]
    %v3726 = vstv %s3725
    %v3727 = vmul.f32 %v3726, %v1129
    %v3728 = vmul.f32 %v3726, %v1130
    %v3729 = vmul.f32 %v3726, %v1131
    %v3730 = vmul.f32 %v3726, %v1132
    %3735 = vrot.lane.b32.xlu0 %v3727, 126
    %v3736 = vpop.permute.xlu0 %3735
    %3737 = vrot.lane.b32.xlu0 %v3728, 126
    %v3738 = vpop.permute.xlu0 %3737
    %3739 = vrot.lane.b32.xlu0 %v3729, 126
    %v3740 = vpop.permute.xlu0 %3739
    %3741 = vrot.lane.b32.xlu0 %v3730, 126
    %v3742 = vpop.permute.xlu0 %3741
    %v3743 = vsel %vm260, %v3736, %v3738
    %v3744 = vsel %vm260, %v3740, %v3742
    %v3747 = vadd.f32 %v3651, %v3743
    %v3748 = vadd.f32 %v3652, %v3744
    %s3749 = sld [smem:[#allocation9 + $0x3c]]
    %v3750 = vstv %s3749
    %v3751 = vmul.f32 %v3750, %v1129
    %v3752 = vmul.f32 %v3750, %v1131
    %v3755 = vrot.slane %v3751, 1
    %v3756 = vrot.slane %v3752, 1
    %v3757 = vsel %vm365, %v3755, %v3756
    %v3760 = vadd.f32 %v3675, %v3757
    %v3761 = vadd.f32 %v3676, %v3756
    %s3762 = sld [smem:[#allocation9 + $0x3d]]
    %v3763 = vstv %s3762
    %v3764 = vmul.f32 %v3763, %v1129
    %v3765 = vmul.f32 %v3763, %v1131
    %v3768 = vrot.slane %v3764, 1
    %v3769 = vrot.slane %v3765, 1
    %v3770 = vsel %vm365, %v3768, %v3769
    %v3773 = vadd.f32 %v3699, %v3770
    %v3774 = vadd.f32 %v3700, %v3769
    %s3775 = sld [smem:[#allocation9 + $0x3e]]
    %v3776 = vstv %s3775
    %v3777 = vmul.f32 %v3776, %v1129
    %v3778 = vmul.f32 %v3776, %v1131
    %v3781 = vrot.slane %v3777, 1
    %v3782 = vrot.slane %v3778, 1
    %v3783 = vsel %vm365, %v3781, %v3782
    %v3786 = vadd.f32 %v3723, %v3783
    %v3787 = vadd.f32 %v3724, %v3782
    %s3788 = sld [smem:[#allocation9 + $0x3f]]
    %v3789 = vstv %s3788
    %v3790 = vmul.f32 %v3789, %v1129
    %v3791 = vmul.f32 %v3789, %v1131
    %v3794 = vrot.slane %v3790, 1
    %v3795 = vrot.slane %v3791, 1
    %v3796 = vsel %vm365, %v3794, %v3795
    %v3799 = vadd.f32 %v3747, %v3796
    %v3800 = vadd.f32 %v3748, %v3795
    %s3801 = sld [smem:[#allocation9 + $0x4c]]
    %v3802 = vstv %s3801
    %v3803 = vmul.f32 %v3802, %v1129
    %v3804 = vmul.f32 %v3802, %v1130
    %v3805 = vmul.f32 %v3802, %v1131
    %v3806 = vmul.f32 %v3802, %v1132
    %v3811 = vrot.slane %v3803, 1
    %v3812 = vrot.slane %v3805, 1
    %v3813 = vsel %vm365, %v3811, %v3812
    %v3814 = vrot.slane %v3804, 1
    %v3815 = vrot.slane %v3806, 1
    %v3816 = vsel %vm365, %v3814, %v3815
    %3817 = vrot.lane.b32.xlu0 %v3813, 127
    %v3818 = vpop.permute.xlu0 %3817
    %3819 = vrot.lane.b32.xlu0 %v3816, 127
    %v3820 = vpop.permute.xlu0 %3819
    %3821 = vrot.lane.b32.xlu0 %v3812, 127
    %v3822 = vpop.permute.xlu0 %3821
    %3823 = vrot.lane.b32.xlu0 %v3815, 127
    %v3824 = vpop.permute.xlu0 %3823
    %v3825 = vsel %vm147, %v3818, %v3820
    %v3826 = vsel %vm147, %v3822, %v3824
    %v3829 = vadd.f32 %v3760, %v3825
    %v3830 = vadd.f32 %v3761, %v3826
    %s3831 = sld [smem:[#allocation9 + $0x4d]]
    %v3832 = vstv %s3831
    %v3833 = vmul.f32 %v3832, %v1129
    %v3834 = vmul.f32 %v3832, %v1130
    %v3835 = vmul.f32 %v3832, %v1131
    %v3836 = vmul.f32 %v3832, %v1132
    %v3841 = vrot.slane %v3833, 1
    %v3842 = vrot.slane %v3835, 1
    %v3843 = vsel %vm365, %v3841, %v3842
    %v3844 = vrot.slane %v3834, 1
    %v3845 = vrot.slane %v3836, 1
    %v3846 = vsel %vm365, %v3844, %v3845
    %3847 = vrot.lane.b32.xlu0 %v3843, 127
    %v3848 = vpop.permute.xlu0 %3847
    %3849 = vrot.lane.b32.xlu0 %v3846, 127
    %v3850 = vpop.permute.xlu0 %3849
    %3851 = vrot.lane.b32.xlu0 %v3842, 127
    %v3852 = vpop.permute.xlu0 %3851
    %3853 = vrot.lane.b32.xlu0 %v3845, 127
    %v3854 = vpop.permute.xlu0 %3853
    %v3855 = vsel %vm147, %v3848, %v3850
    %v3856 = vsel %vm147, %v3852, %v3854
    %v3859 = vadd.f32 %v3773, %v3855
    %v3860 = vadd.f32 %v3774, %v3856
    %s3861 = sld [smem:[#allocation9 + $0x4e]]
    %v3862 = vstv %s3861
    %v3863 = vmul.f32 %v3862, %v1129
    %v3864 = vmul.f32 %v3862, %v1130
    %v3865 = vmul.f32 %v3862, %v1131
    %v3866 = vmul.f32 %v3862, %v1132
    %v3871 = vrot.slane %v3863, 1
    %v3872 = vrot.slane %v3865, 1
    %v3873 = vsel %vm365, %v3871, %v3872
    %v3874 = vrot.slane %v3864, 1
    %v3875 = vrot.slane %v3866, 1
    %v3876 = vsel %vm365, %v3874, %v3875
    %3877 = vrot.lane.b32.xlu0 %v3873, 127
    %v3878 = vpop.permute.xlu0 %3877
    %3879 = vrot.lane.b32.xlu0 %v3876, 127
    %v3880 = vpop.permute.xlu0 %3879
    %3881 = vrot.lane.b32.xlu0 %v3872, 127
    %v3882 = vpop.permute.xlu0 %3881
    %3883 = vrot.lane.b32.xlu0 %v3875, 127
    %v3884 = vpop.permute.xlu0 %3883
    %v3885 = vsel %vm147, %v3878, %v3880
    %v3886 = vsel %vm147, %v3882, %v3884
    %v3889 = vadd.f32 %v3786, %v3885
    %v3890 = vadd.f32 %v3787, %v3886
    %s3891 = sld [smem:[#allocation9 + $0x4f]]
    %v3892 = vstv %s3891
    %v3893 = vmul.f32 %v3892, %v1129
    %v3894 = vmul.f32 %v3892, %v1130
    %v3895 = vmul.f32 %v3892, %v1131
    %v3896 = vmul.f32 %v3892, %v1132
    %v3901 = vrot.slane %v3893, 1
    %v3902 = vrot.slane %v3895, 1
    %v3903 = vsel %vm365, %v3901, %v3902
    %v3904 = vrot.slane %v3894, 1
    %v3905 = vrot.slane %v3896, 1
    %v3906 = vsel %vm365, %v3904, %v3905
    %3907 = vrot.lane.b32.xlu0 %v3903, 127
    %v3908 = vpop.permute.xlu0 %3907
    %3909 = vrot.lane.b32.xlu0 %v3906, 127
    %v3910 = vpop.permute.xlu0 %3909
    %3911 = vrot.lane.b32.xlu0 %v3902, 127
    %v3912 = vpop.permute.xlu0 %3911
    %3913 = vrot.lane.b32.xlu0 %v3905, 127
    %v3914 = vpop.permute.xlu0 %3913
    %v3915 = vsel %vm147, %v3908, %v3910
    %v3916 = vsel %vm147, %v3912, %v3914
    %v3919 = vadd.f32 %v3799, %v3915
    %v3920 = vadd.f32 %v3800, %v3916
    %s3921 = sld [smem:[#allocation9 + $0x5c]]
    %v3922 = vstv %s3921
    %v3923 = vmul.f32 %v3922, %v1129
    %v3924 = vmul.f32 %v3922, %v1130
    %v3925 = vmul.f32 %v3922, %v1131
    %v3926 = vmul.f32 %v3922, %v1132
    %v3931 = vrot.slane %v3923, 1
    %v3932 = vrot.slane %v3925, 1
    %v3933 = vsel %vm365, %v3931, %v3932
    %v3934 = vrot.slane %v3924, 1
    %v3935 = vrot.slane %v3926, 1
    %v3936 = vsel %vm365, %v3934, %v3935
    %3937 = vrot.lane.b32.xlu0 %v3933, 126
    %v3938 = vpop.permute.xlu0 %3937
    %3939 = vrot.lane.b32.xlu0 %v3936, 126
    %v3940 = vpop.permute.xlu0 %3939
    %3941 = vrot.lane.b32.xlu0 %v3932, 126
    %v3942 = vpop.permute.xlu0 %3941
    %3943 = vrot.lane.b32.xlu0 %v3935, 126
    %v3944 = vpop.permute.xlu0 %3943
    %v3945 = vsel %vm260, %v3938, %v3940
    %v3946 = vsel %vm260, %v3942, %v3944
    %v3949 = vadd.f32 %v3829, %v3945
    %v3950 = vadd.f32 %v3830, %v3946
    %s3951 = sld [smem:[#allocation9 + $0x5d]]
    %v3952 = vstv %s3951
    %v3953 = vmul.f32 %v3952, %v1129
    %v3954 = vmul.f32 %v3952, %v1130
    %v3955 = vmul.f32 %v3952, %v1131
    %v3956 = vmul.f32 %v3952, %v1132
    %v3961 = vrot.slane %v3953, 1
    %v3962 = vrot.slane %v3955, 1
    %v3963 = vsel %vm365, %v3961, %v3962
    %v3964 = vrot.slane %v3954, 1
    %v3965 = vrot.slane %v3956, 1
    %v3966 = vsel %vm365, %v3964, %v3965
    %3967 = vrot.lane.b32.xlu0 %v3963, 126
    %v3968 = vpop.permute.xlu0 %3967
    %3969 = vrot.lane.b32.xlu0 %v3966, 126
    %v3970 = vpop.permute.xlu0 %3969
    %3971 = vrot.lane.b32.xlu0 %v3962, 126
    %v3972 = vpop.permute.xlu0 %3971
    %3973 = vrot.lane.b32.xlu0 %v3965, 126
    %v3974 = vpop.permute.xlu0 %3973
    %v3975 = vsel %vm260, %v3968, %v3970
    %v3976 = vsel %vm260, %v3972, %v3974
    %v3979 = vadd.f32 %v3859, %v3975
    %v3980 = vadd.f32 %v3860, %v3976
    %s3981 = sld [smem:[#allocation9 + $0x5e]]
    %v3982 = vstv %s3981
    %v3983 = vmul.f32 %v3982, %v1129
    %v3984 = vmul.f32 %v3982, %v1130
    %v3985 = vmul.f32 %v3982, %v1131
    %v3986 = vmul.f32 %v3982, %v1132
    %v3991 = vrot.slane %v3983, 1
    %v3992 = vrot.slane %v3985, 1
    %v3993 = vsel %vm365, %v3991, %v3992
    %v3994 = vrot.slane %v3984, 1
    %v3995 = vrot.slane %v3986, 1
    %v3996 = vsel %vm365, %v3994, %v3995
    %3997 = vrot.lane.b32.xlu0 %v3993, 126
    %v3998 = vpop.permute.xlu0 %3997
    %3999 = vrot.lane.b32.xlu0 %v3996, 126
    %v4000 = vpop.permute.xlu0 %3999
    %4001 = vrot.lane.b32.xlu0 %v3992, 126
    %v4002 = vpop.permute.xlu0 %4001
    %4003 = vrot.lane.b32.xlu0 %v3995, 126
    %v4004 = vpop.permute.xlu0 %4003
    %v4005 = vsel %vm260, %v3998, %v4000
    %v4006 = vsel %vm260, %v4002, %v4004
    %v4009 = vadd.f32 %v3889, %v4005
    %v4010 = vadd.f32 %v3890, %v4006
    %s4011 = sld [smem:[#allocation9 + $0x5f]]
    %v4012 = vstv %s4011
    %v4013 = vmul.f32 %v4012, %v1129
    %v4014 = vmul.f32 %v4012, %v1130
    %v4015 = vmul.f32 %v4012, %v1131
    %v4016 = vmul.f32 %v4012, %v1132
    %v4021 = vrot.slane %v4013, 1
    %v4022 = vrot.slane %v4015, 1
    %v4023 = vsel %vm365, %v4021, %v4022
    %v4024 = vrot.slane %v4014, 1
    %v4025 = vrot.slane %v4016, 1
    %v4026 = vsel %vm365, %v4024, %v4025
    %4027 = vrot.lane.b32.xlu0 %v4023, 126
    %v4028 = vpop.permute.xlu0 %4027
    %4029 = vrot.lane.b32.xlu0 %v4026, 126
    %v4030 = vpop.permute.xlu0 %4029
    %4031 = vrot.lane.b32.xlu0 %v4022, 126
    %v4032 = vpop.permute.xlu0 %4031
    %4033 = vrot.lane.b32.xlu0 %v4025, 126
    %v4034 = vpop.permute.xlu0 %4033
    %v4035 = vsel %vm260, %v4028, %v4030
    %v4036 = vsel %vm260, %v4032, %v4034
    %v4039 = vadd.f32 %v3919, %v4035
    %v4040 = vadd.f32 %v3920, %v4036
    %s4041 = sld [smem:[#allocation9 + $0x6c]]
    %v4042 = vstv %s4041
    %v4043 = vmul.f32 %v4042, %v1129
    %v4044 = vmul.f32 %v4042, %v1131
    %v4047 = vrot.slane %v4043, 2
    %v4048 = vrot.slane %v4044, 2
    %v4049 = vsel %vm734, %v4047, %v4048
    %v4052 = vadd.f32 %v3949, %v4049
    %v4053 = vadd.f32 %v3950, %v4048
    %s4054 = sld [smem:[#allocation9 + $0x6d]]
    %v4055 = vstv %s4054
    %v4056 = vmul.f32 %v4055, %v1129
    %v4057 = vmul.f32 %v4055, %v1131
    %v4060 = vrot.slane %v4056, 2
    %v4061 = vrot.slane %v4057, 2
    %v4062 = vsel %vm734, %v4060, %v4061
    %v4065 = vadd.f32 %v3979, %v4062
    %v4066 = vadd.f32 %v3980, %v4061
    %s4067 = sld [smem:[#allocation9 + $0x6e]]
    %v4068 = vstv %s4067
    %v4069 = vmul.f32 %v4068, %v1129
    %v4070 = vmul.f32 %v4068, %v1131
    %v4073 = vrot.slane %v4069, 2
    %v4074 = vrot.slane %v4070, 2
    %v4075 = vsel %vm734, %v4073, %v4074
    %v4078 = vadd.f32 %v4009, %v4075
    %v4079 = vadd.f32 %v4010, %v4074
    %s4080 = sld [smem:[#allocation9 + $0x6f]]
    %v4081 = vstv %s4080
    %v4082 = vmul.f32 %v4081, %v1129
    %v4083 = vmul.f32 %v4081, %v1131
    %v4086 = vrot.slane %v4082, 2
    %v4087 = vrot.slane %v4083, 2
    %v4088 = vsel %vm734, %v4086, %v4087
    %v4091 = vadd.f32 %v4039, %v4088
    %v4092 = vadd.f32 %v4040, %v4087
    %s4093 = sld [smem:[#allocation9 + $0x7c]]
    %v4094 = vstv %s4093
    %v4095 = vmul.f32 %v4094, %v1129
    %v4096 = vmul.f32 %v4094, %v1130
    %v4097 = vmul.f32 %v4094, %v1131
    %v4098 = vmul.f32 %v4094, %v1132
    %v4103 = vrot.slane %v4095, 2
    %v4104 = vrot.slane %v4097, 2
    %v4105 = vsel %vm734, %v4103, %v4104
    %v4106 = vrot.slane %v4096, 2
    %v4107 = vrot.slane %v4098, 2
    %v4108 = vsel %vm734, %v4106, %v4107
    %4109 = vrot.lane.b32.xlu0 %v4105, 127
    %v4110 = vpop.permute.xlu0 %4109
    %4111 = vrot.lane.b32.xlu0 %v4108, 127
    %v4112 = vpop.permute.xlu0 %4111
    %4113 = vrot.lane.b32.xlu0 %v4104, 127
    %v4114 = vpop.permute.xlu0 %4113
    %4115 = vrot.lane.b32.xlu0 %v4107, 127
    %v4116 = vpop.permute.xlu0 %4115
    %v4117 = vsel %vm147, %v4110, %v4112
    %v4118 = vsel %vm147, %v4114, %v4116
    %v4121 = vadd.f32 %v4052, %v4117
    %v4122 = vadd.f32 %v4053, %v4118
    %s4123 = sld [smem:[#allocation9 + $0x7d]]
    %v4124 = vstv %s4123
    %v4125 = vmul.f32 %v4124, %v1129
    %v4126 = vmul.f32 %v4124, %v1130
    %v4127 = vmul.f32 %v4124, %v1131
    %v4128 = vmul.f32 %v4124, %v1132
    %v4133 = vrot.slane %v4125, 2
    %v4134 = vrot.slane %v4127, 2
    %v4135 = vsel %vm734, %v4133, %v4134
    %v4136 = vrot.slane %v4126, 2
    %v4137 = vrot.slane %v4128, 2
    %v4138 = vsel %vm734, %v4136, %v4137
    %4139 = vrot.lane.b32.xlu0 %v4135, 127
    %v4140 = vpop.permute.xlu0 %4139
    %4141 = vrot.lane.b32.xlu0 %v4138, 127
    %v4142 = vpop.permute.xlu0 %4141
    %4143 = vrot.lane.b32.xlu0 %v4134, 127
    %v4144 = vpop.permute.xlu0 %4143
    %4145 = vrot.lane.b32.xlu0 %v4137, 127
    %v4146 = vpop.permute.xlu0 %4145
    %v4147 = vsel %vm147, %v4140, %v4142
    %v4148 = vsel %vm147, %v4144, %v4146
    %v4151 = vadd.f32 %v4065, %v4147
    %v4152 = vadd.f32 %v4066, %v4148
    %s4153 = sld [smem:[#allocation9 + $0x7e]]
    %v4154 = vstv %s4153
    %v4155 = vmul.f32 %v4154, %v1129
    %v4156 = vmul.f32 %v4154, %v1130
    %v4157 = vmul.f32 %v4154, %v1131
    %v4158 = vmul.f32 %v4154, %v1132
    %v4163 = vrot.slane %v4155, 2
    %v4164 = vrot.slane %v4157, 2
    %v4165 = vsel %vm734, %v4163, %v4164
    %v4166 = vrot.slane %v4156, 2
    %v4167 = vrot.slane %v4158, 2
    %v4168 = vsel %vm734, %v4166, %v4167
    %4169 = vrot.lane.b32.xlu0 %v4165, 127
    %v4170 = vpop.permute.xlu0 %4169
    %4171 = vrot.lane.b32.xlu0 %v4168, 127
    %v4172 = vpop.permute.xlu0 %4171
    %4173 = vrot.lane.b32.xlu0 %v4164, 127
    %v4174 = vpop.permute.xlu0 %4173
    %4175 = vrot.lane.b32.xlu0 %v4167, 127
    %v4176 = vpop.permute.xlu0 %4175
    %v4177 = vsel %vm147, %v4170, %v4172
    %v4178 = vsel %vm147, %v4174, %v4176
    %v4181 = vadd.f32 %v4078, %v4177
    %v4182 = vadd.f32 %v4079, %v4178
    %s4183 = sld [smem:[#allocation9 + $0x7f]]
    %v4184 = vstv %s4183
    %v4185 = vmul.f32 %v4184, %v1129
    %v4186 = vmul.f32 %v4184, %v1130
    %v4187 = vmul.f32 %v4184, %v1131
    %v4188 = vmul.f32 %v4184, %v1132
    %v4193 = vrot.slane %v4185, 2
    %v4194 = vrot.slane %v4187, 2
    %v4195 = vsel %vm734, %v4193, %v4194
    %v4196 = vrot.slane %v4186, 2
    %v4197 = vrot.slane %v4188, 2
    %v4198 = vsel %vm734, %v4196, %v4197
    %4199 = vrot.lane.b32.xlu0 %v4195, 127
    %v4200 = vpop.permute.xlu0 %4199
    %4201 = vrot.lane.b32.xlu0 %v4198, 127
    %v4202 = vpop.permute.xlu0 %4201
    %4203 = vrot.lane.b32.xlu0 %v4194, 127
    %v4204 = vpop.permute.xlu0 %4203
    %4205 = vrot.lane.b32.xlu0 %v4197, 127
    %v4206 = vpop.permute.xlu0 %4205
    %v4207 = vsel %vm147, %v4200, %v4202
    %v4208 = vsel %vm147, %v4204, %v4206
    %v4211 = vadd.f32 %v4091, %v4207
    %v4212 = vadd.f32 %v4092, %v4208
    %s4213 = sld [smem:[#allocation9 + $0x8c]]
    %v4214 = vstv %s4213
    %v4215 = vmul.f32 %v4214, %v1129
    %v4216 = vmul.f32 %v4214, %v1130
    %v4217 = vmul.f32 %v4214, %v1131
    %v4218 = vmul.f32 %v4214, %v1132
    %v4223 = vrot.slane %v4215, 2
    %v4224 = vrot.slane %v4217, 2
    %v4225 = vsel %vm734, %v4223, %v4224
    %v4226 = vrot.slane %v4216, 2
    %v4227 = vrot.slane %v4218, 2
    %v4228 = vsel %vm734, %v4226, %v4227
    %4229 = vrot.lane.b32.xlu0 %v4225, 126
    %v4230 = vpop.permute.xlu0 %4229
    %4231 = vrot.lane.b32.xlu0 %v4228, 126
    %v4232 = vpop.permute.xlu0 %4231
    %4233 = vrot.lane.b32.xlu0 %v4224, 126
    %v4234 = vpop.permute.xlu0 %4233
    %4235 = vrot.lane.b32.xlu0 %v4227, 126
    %v4236 = vpop.permute.xlu0 %4235
    %v4237 = vsel %vm260, %v4230, %v4232
    %v4238 = vsel %vm260, %v4234, %v4236
    %v4241 = vadd.f32 %v4121, %v4237
    %v4242 = vadd.f32 %v4122, %v4238
    %s4243 = sld [smem:[#allocation9 + $0x8d]]
    %v4244 = vstv %s4243
    %v4245 = vmul.f32 %v4244, %v1129
    %v4246 = vmul.f32 %v4244, %v1130
    %v4247 = vmul.f32 %v4244, %v1131
    %v4248 = vmul.f32 %v4244, %v1132
    %v4253 = vrot.slane %v4245, 2
    %v4254 = vrot.slane %v4247, 2
    %v4255 = vsel %vm734, %v4253, %v4254
    %v4256 = vrot.slane %v4246, 2
    %v4257 = vrot.slane %v4248, 2
    %v4258 = vsel %vm734, %v4256, %v4257
    %4259 = vrot.lane.b32.xlu0 %v4255, 126
    %v4260 = vpop.permute.xlu0 %4259
    %4261 = vrot.lane.b32.xlu0 %v4258, 126
    %v4262 = vpop.permute.xlu0 %4261
    %4263 = vrot.lane.b32.xlu0 %v4254, 126
    %v4264 = vpop.permute.xlu0 %4263
    %4265 = vrot.lane.b32.xlu0 %v4257, 126
    %v4266 = vpop.permute.xlu0 %4265
    %v4267 = vsel %vm260, %v4260, %v4262
    %v4268 = vsel %vm260, %v4264, %v4266
    %v4271 = vadd.f32 %v4151, %v4267
    %v4272 = vadd.f32 %v4152, %v4268
    %s4273 = sld [smem:[#allocation9 + $0x8e]]
    %v4274 = vstv %s4273
    %v4275 = vmul.f32 %v4274, %v1129
    %v4276 = vmul.f32 %v4274, %v1130
    %v4277 = vmul.f32 %v4274, %v1131
    %v4278 = vmul.f32 %v4274, %v1132
    %v4283 = vrot.slane %v4275, 2
    %v4284 = vrot.slane %v4277, 2
    %v4285 = vsel %vm734, %v4283, %v4284
    %v4286 = vrot.slane %v4276, 2
    %v4287 = vrot.slane %v4278, 2
    %v4288 = vsel %vm734, %v4286, %v4287
    %4289 = vrot.lane.b32.xlu0 %v4285, 126
    %v4290 = vpop.permute.xlu0 %4289
    %4291 = vrot.lane.b32.xlu0 %v4288, 126
    %v4292 = vpop.permute.xlu0 %4291
    %4293 = vrot.lane.b32.xlu0 %v4284, 126
    %v4294 = vpop.permute.xlu0 %4293
    %4295 = vrot.lane.b32.xlu0 %v4287, 126
    %v4296 = vpop.permute.xlu0 %4295
    %v4297 = vsel %vm260, %v4290, %v4292
    %v4298 = vsel %vm260, %v4294, %v4296
    %v4301 = vadd.f32 %v4181, %v4297
    %v4302 = vadd.f32 %v4182, %v4298
    %s4303 = sld [smem:[#allocation9 + $0x8f]]
    %v4304 = vstv %s4303
    %v4305 = vmul.f32 %v4304, %v1129
    %v4306 = vmul.f32 %v4304, %v1130
    %v4307 = vmul.f32 %v4304, %v1131
    %v4308 = vmul.f32 %v4304, %v1132
    %v4313 = vrot.slane %v4305, 2
    %v4314 = vrot.slane %v4307, 2
    %v4315 = vsel %vm734, %v4313, %v4314
    %v4316 = vrot.slane %v4306, 2
    %v4317 = vrot.slane %v4308, 2
    %v4318 = vsel %vm734, %v4316, %v4317
    %4319 = vrot.lane.b32.xlu0 %v4315, 126
    %v4320 = vpop.permute.xlu0 %4319
    %4321 = vrot.lane.b32.xlu0 %v4318, 126
    %v4322 = vpop.permute.xlu0 %4321
    %4323 = vrot.lane.b32.xlu0 %v4314, 126
    %v4324 = vpop.permute.xlu0 %4323
    %4325 = vrot.lane.b32.xlu0 %v4317, 126
    %v4326 = vpop.permute.xlu0 %4325
    %v4327 = vsel %vm260, %v4320, %v4322
    %v4328 = vsel %vm260, %v4324, %v4326
    %v4331 = vadd.f32 %v4211, %v4327
    %v4332 = vadd.f32 %v4212, %v4328
    %s4333 = sld [smem:[#allocation10]]
    %v4334 = vstv %s4333
    %v4335 = vadd.f32 %v4241, %v4334
    %v4336 = vadd.f32 %v4242, %v4334
    %v4337 = vmax.f32 %v4335, 0.0
    %v4338 = vmax.f32 %v4336, 0.0
    %s4339 = sld [smem:[#allocation10 + $0x1]]
    %v4340 = vstv %s4339
    %v4341 = vadd.f32 %v4271, %v4340
    %v4342 = vadd.f32 %v4272, %v4340
    %v4343 = vmax.f32 %v4341, 0.0
    %v4344 = vmax.f32 %v4342, 0.0
    %s4345 = sld [smem:[#allocation10 + $0x2]]
    %v4346 = vstv %s4345
    %v4347 = vadd.f32 %v4301, %v4346
    %v4348 = vadd.f32 %v4302, %v4346
    %v4349 = vmax.f32 %v4347, 0.0
    %v4350 = vmax.f32 %v4348, 0.0
    %s4351 = sld [smem:[#allocation10 + $0x3]]
    %v4352 = vstv %s4351
    %v4353 = vadd.f32 %v4331, %v4352
    %v4354 = vadd.f32 %v4332, %v4352
    %v4355 = vmax.f32 %v4353, 0.0
    %v4356 = vmax.f32 %v4354, 0.0
    %4357 = vst [vmem:[%s5] sm:$0xff] %v4337
    %4358 = vst [vmem:[%s5 + $0x8] sm:$0xf] %v4338
    %4359 = vst [vmem:[%s5 + $0x10] sm:$0xff] %v4343
    %4360 = vst [vmem:[%s5 + $0x18] sm:$0xf] %v4344
    %4361 = vst [vmem:[%s5 + $0x20] sm:$0xff] %v4349
    %4362 = vst [vmem:[%s5 + $0x28] sm:$0xf] %v4350
    %4363 = vst [vmem:[%s5 + $0x30] sm:$0xff] %v4355
    %4364 = vst [vmem:[%s5 + $0x38] sm:$0xf] %v4356
    // Predicated region
    $region42: #{tpu_custom_call.1} parent=1 // pred_check
      _
    $region43: #{tpu_custom_call.1} parent=1 // pred_check_branch
      %4366 = sbr.rel (0) target = $region45
    $region44: #{tpu_custom_call.1} parent=1 // pred_region
      _
    $region45: #{tpu_custom_call.1} parent=1 // pred_fallthru
      _
    // Predicated region
    $region46: #{tpu_custom_call.1} parent=1 // pred_check
      _
    $region47: #{tpu_custom_call.1} parent=1 // pred_check_branch
      %4368 = sbr.rel (0) target = $region49
    $region48: #{tpu_custom_call.1} parent=1 // pred_region
      _
    $region49: #{tpu_custom_call.1} parent=1 // pred_fallthru
      _
    %4369 = vsyncpa [#allocation3], 1
    %4370 = vsyncpa [#allocation4], 1
    %4371 = vsyncpa [#allocation8], 1
    %4372 = vsyncpa [#allocation5], 1
    %4373 = vsyncpa [#allocation11], 1

</llo_original>
